<compile_context>
chip_gen: v6e
topology: v6e:2x2x1
jax: 0.10.0
libtpu: 0.0.40
codegen_flags: <defaults>
</compile_context>

<pallas_src>
import jax
import jax.numpy as jnp
from jax.experimental import pallas as pl
from jax.experimental.pallas import tpu as pltpu

LATENT_DIM = 64          # latent_dim passed to Generator(__init__)
H1, H2, H3, H4 = 128, 256, 512, 1024
OUT_DIM = 28 * 28        # 784
OUT_PAD = 896            # 7 * 128 lanes -> unmasked output stores
LEAKY_SLOPE = 0.2
BN_EPS = 1e-5
MAX_TILE_B = 512         # VMEM-safe on v7x (64 MiB part); amortizes step overhead


def _leaky_relu(x):
    # For slope < 1, max(x, slope*x) == LeakyReLU(slope): one mul + one max.
    return jnp.maximum(x, LEAKY_SLOPE * x)


def _make_generator_kernel(ew_dtype):
    """Build the fused 5-layer MLP kernel.

    ew_dtype: dtype of the hidden-layer elementwise epilogue (bias + LeakyReLU);
    bf16 on v6e/v7x (bf16 VPU), f32 elsewhere.  Matmuls always use bf16 operands
    with f32 accumulation; the final bias-add + tanh stays f32.
    Dropout layers are identity in eval mode; BatchNorm is pre-folded into the
    weights/biases of layers 2-4 by the wrapper.
    """

    def kernel(z_ref,
               w1_ref, b1_ref,
               w2_ref, b2_ref,
               w3_ref, b3_ref,
               w4_ref, b4_ref,
               w5_ref, b5_ref,
               out_ref):
        def hidden(x_bf16, w_ref, b_ref):
            acc = jnp.dot(x_bf16, w_ref[...],
                          preferred_element_type=jnp.float32)
            y = _leaky_relu(acc.astype(ew_dtype) + b_ref[...])
            return y.astype(jnp.bfloat16)

        h = hidden(z_ref[...], w1_ref, b1_ref)
        h = hidden(h, w2_ref, b2_ref)
        h = hidden(h, w3_ref, b3_ref)
        h = hidden(h, w4_ref, b4_ref)
        acc = jnp.dot(h, w5_ref[...], preferred_element_type=jnp.float32)
        out_ref[...] = jnp.tanh(acc + b5_ref[...])

    return kernel


def init_params(key, latent_dim=LATENT_DIM):
    """Deterministic parameter init mirroring PyTorch defaults (f32 master copy).

    nn.Linear: weight/bias ~ U(-1/sqrt(fan_in), 1/sqrt(fan_in)); stored as
    (in, out) so the kernel computes x @ W.
    nn.BatchNorm1d: gamma=1, beta=0, running_mean=0, running_var=1.
    """
    dims = [latent_dim, H1, H2, H3, H4, OUT_DIM]
    params = {}
    for li, (din, dout) in enumerate(zip(dims[:-1], dims[1:]), start=1):
        key, kw, kb = jax.random.split(key, 3)
        bound = 1.0 / jnp.sqrt(jnp.float32(din))
        params[f"w{li}"] = jax.random.uniform(
            kw, (din, dout), jnp.float32, minval=-bound, maxval=bound)
        params[f"b{li}"] = jax.random.uniform(
            kb, (1, dout), jnp.float32, minval=-bound, maxval=bound)
    # BatchNorm layers follow linear layers 2, 3, 4 (eval: running stats).
    for li, dout in zip((2, 3, 4), (H2, H3, H4)):
        gamma = jnp.ones((1, dout), jnp.float32)
        beta = jnp.zeros((1, dout), jnp.float32)
        running_mean = jnp.zeros((1, dout), jnp.float32)
        running_var = jnp.ones((1, dout), jnp.float32)
        scale = gamma / jnp.sqrt(running_var + BN_EPS)
        shift = beta - running_mean * scale
        params[f"s{li}"] = scale
        params[f"t{li}"] = shift
    return params


def _prepare_kernel_params(params, ew_dtype):
    """Fold each layer's trailing BN into that layer's W/b, pad layer 5 to
    896 lanes, cast weights to bf16 and hidden biases to the epilogue dtype."""
    def fold(w, b, s, t):
        return w * s, b * s + t           # (in,out)*(1,out) broadcast over rows

    w1, b1 = params["w1"], params["b1"]
    w2, b2 = fold(params["w2"], params["b2"], params["s2"], params["t2"])
    w3, b3 = fold(params["w3"], params["b3"], params["s3"], params["t3"])
    w4, b4 = fold(params["w4"], params["b4"], params["s4"], params["t4"])
    w5 = jnp.pad(params["w5"], ((0, 0), (0, OUT_PAD - OUT_DIM)))
    b5 = jnp.pad(params["b5"], ((0, 0), (0, OUT_PAD - OUT_DIM)))

    weights = [w.astype(jnp.bfloat16) for w in (w1, w2, w3, w4, w5)]
    biases = [b1.astype(ew_dtype), b2.astype(ew_dtype),
              b3.astype(ew_dtype), b4.astype(ew_dtype),
              b5.astype(jnp.float32)]
    ordered = []
    for w, b in zip(weights, biases):
        ordered += [w, b]
    return ordered


def _round_up(x, m):
    return ((x + m - 1) // m) * m


def _pick_tile_b(batch):
    # Round tiny batches up to the 8-row sublane granule (not 128); split big
    # batches into >= 2 tiles so the "parallel" axis feeds both v7x TensorCores;
    # cap at MAX_TILE_B so the double-buffered f32 output tile stays VMEM-cheap.
    half = _round_up(max(1, (batch + 1) // 2), 8)
    return max(8, min(MAX_TILE_B, half))


def _elementwise_dtype():
    """bf16 epilogue only where the VPU is bf16-capable (v6e / v7x)."""
    try:
        kind = jax.devices()[0].device_kind.lower()
    except Exception:
        kind = ""
    bf16_vpu = any(tag in kind for tag in ("v6", "v7", "7x"))
    return jnp.bfloat16 if bf16_vpu else jnp.float32


def generator_forward(z, params, tile_b=None):
    B, latent_dim = z.shape
    if tile_b is None:
        tile_b = _pick_tile_b(B)

    # Pad the batch to a multiple of the tile (padded rows are sliced off).
    n_tiles = pl.cdiv(B, tile_b)
    B_pad = n_tiles * tile_b
    if B_pad != B:
        z = jnp.pad(z, ((0, B_pad - B), (0, 0)))
    z = z.astype(jnp.bfloat16)

    ew_dtype = _elementwise_dtype()
    ordered = _prepare_kernel_params(params, ew_dtype)

    # Weights/biases never change across grid steps: keep a single copy
    # resident in VMEM instead of double-buffered pipelined blocks.
    const_spec = pl.BlockSpec(memory_space=pltpu.MemorySpace.VMEM)
    in_specs = [pl.BlockSpec((tile_b, latent_dim), lambda i: (i, 0))]
    in_specs += [const_spec] * len(ordered)

    out = pl.pallas_call(
        _make_generator_kernel(ew_dtype),
        out_shape=jax.ShapeDtypeStruct((B_pad, OUT_PAD), jnp.float32),
        grid_spec=pltpu.PrefetchScalarGridSpec(
            num_scalar_prefetch=0,
            grid=(n_tiles,),
            in_specs=in_specs,
            out_specs=pl.BlockSpec((tile_b, OUT_PAD), lambda i: (i, 0)),
        ),
        compiler_params=pltpu.CompilerParams(
            dimension_semantics=("parallel",),
            vmem_limit_bytes=32 * 1024 * 1024,
        ),
    )(z, *ordered)

    return out[:B, :OUT_DIM]


def generator_forward_ref(z, params):
    """Pure-JAX f32 reference (eval-mode semantics) for correctness checking."""
    h = _leaky_relu(z @ params["w1"] + params["b1"])
    h = _leaky_relu((h @ params["w2"] + params["b2"]) * params["s2"] + params["t2"])
    h = _leaky_relu((h @ params["w3"] + params["b3"]) * params["s3"] + params["t3"])
    h = _leaky_relu((h @ params["w4"] + params["b4"]) * params["s4"] + params["t4"])
    return jnp.tanh(h @ params["w5"] + params["b5"])


if __name__ == "__main__":
    key = jax.random.PRNGKey(0)
    kp, kz = jax.random.split(key)

    params = init_params(kp, LATENT_DIM)

    # Small inference-style batch (rounds up to a tile of 8, single grid step).
    B = 8
    z = jax.random.normal(kz, (B, LATENT_DIM), jnp.float32)
    out = jax.block_until_ready(generator_forward(z, params))
    ref = generator_forward_ref(z, params)
    assert out.shape == (B, OUT_DIM), out.shape
    # bf16 matmul operands / epilogue (f32 accumulation) -> relaxed tolerance.
    assert jnp.allclose(out, ref, atol=5e-2, rtol=5e-2), "mismatch vs JAX reference"

    # Multi-tile path: exercises batch padding and the 2-tile parallel grid.
    z2 = jax.random.normal(jax.random.PRNGKey(1), (200, LATENT_DIM), jnp.float32)
    out2 = jax.block_until_ready(generator_forward(z2, params))
    ref2 = generator_forward_ref(z2, params)
    assert out2.shape == (200, OUT_DIM), out2.shape
    assert jnp.allclose(out2, ref2, atol=5e-2, rtol=5e-2), "mismatch (multi-tile)"

    print("KERNEL_OK")
</pallas_src>

<mosaic_0001>
module attributes {stable_mosaic.version = 11 : i64} {
  func.func @kernel(%arg0: i32, %arg1: memref<8x64xbf16, #tpu.memory_space<vmem>>, %arg2: memref<64x128xbf16, #tpu.memory_space<vmem>>, %arg3: memref<1x128xf32, #tpu.memory_space<vmem>>, %arg4: memref<128x256xbf16, #tpu.memory_space<vmem>>, %arg5: memref<1x256xf32, #tpu.memory_space<vmem>>, %arg6: memref<256x512xbf16, #tpu.memory_space<vmem>>, %arg7: memref<1x512xf32, #tpu.memory_space<vmem>>, %arg8: memref<512x1024xbf16, #tpu.memory_space<vmem>>, %arg9: memref<1x1024xf32, #tpu.memory_space<vmem>>, %arg10: memref<1024x896xbf16, #tpu.memory_space<vmem>>, %arg11: memref<1x896xf32, #tpu.memory_space<vmem>>, %arg12: memref<8x896xf32, #tpu.memory_space<vmem>>) attributes {dimension_semantics = [#tpu.dimension_semantics<parallel>], iteration_bounds = array<i64: 1>, scalar_prefetch = 0 : i64, scratch_operands = 0 : i64, tpu.core_type = #tpu.core_type<tc>, window_params = [{transform_indices = @transform_0, window_bounds = array<i64: 8, 64>}, {pipeline_mode = #tpu.pipeline_mode<synchronous>, transform_indices = @transform_1, window_bounds = array<i64: 64, 128>}, {pipeline_mode = #tpu.pipeline_mode<synchronous>, transform_indices = @transform_2, window_bounds = array<i64: 1, 128>}, {pipeline_mode = #tpu.pipeline_mode<synchronous>, transform_indices = @transform_3, window_bounds = array<i64: 128, 256>}, {pipeline_mode = #tpu.pipeline_mode<synchronous>, transform_indices = @transform_4, window_bounds = array<i64: 1, 256>}, {pipeline_mode = #tpu.pipeline_mode<synchronous>, transform_indices = @transform_5, window_bounds = array<i64: 256, 512>}, {pipeline_mode = #tpu.pipeline_mode<synchronous>, transform_indices = @transform_6, window_bounds = array<i64: 1, 512>}, {pipeline_mode = #tpu.pipeline_mode<synchronous>, transform_indices = @transform_7, window_bounds = array<i64: 512, 1024>}, {pipeline_mode = #tpu.pipeline_mode<synchronous>, transform_indices = @transform_8, window_bounds = array<i64: 1, 1024>}, {pipeline_mode = #tpu.pipeline_mode<synchronous>, transform_indices = @transform_9, window_bounds = array<i64: 1024, 896>}, {pipeline_mode = #tpu.pipeline_mode<synchronous>, transform_indices = @transform_10, window_bounds = array<i64: 1, 896>}, {transform_indices = @transform_11, window_bounds = array<i64: 8, 896>}]} {
    %c0 = arith.constant 0 : index
    %c0_0 = arith.constant 0 : index
    %0 = vector.load %arg1[%c0, %c0_0] : memref<8x64xbf16, #tpu.memory_space<vmem>>, vector<8x64xbf16>
    %c0_1 = arith.constant 0 : index
    %c0_2 = arith.constant 0 : index
    %1 = vector.load %arg2[%c0_1, %c0_2] : memref<64x128xbf16, #tpu.memory_space<vmem>>, vector<64x128xbf16>
    %cst = arith.constant dense<0.000000e+00> : vector<8x128xf32>
    %2 = tpu.matmul %0, %1, %cst {dimension_numbers = #tpu.dot_dimension_numbers<[1], [0], [0], [1], [0, 0, 1, 1], [], []>} : vector<8x64xbf16>, vector<64x128xbf16>, vector<8x128xf32> -> vector<8x128xf32>
    %c0_3 = arith.constant 0 : index
    %c0_4 = arith.constant 0 : index
    %3 = vector.load %arg3[%c0_3, %c0_4] : memref<1x128xf32, #tpu.memory_space<vmem>>, vector<1x128xf32>
    %4 = vector.broadcast %3 : vector<1x128xf32> to vector<8x128xf32>
    %5 = arith.addf %2, %4 : vector<8x128xf32>
    %cst_5 = arith.constant 2.000000e-01 : f32
    %6 = vector.broadcast %cst_5 : f32 to vector<8x128xf32>
    %7 = arith.mulf %6, %5 : vector<8x128xf32>
    %8 = arith.maximumf %5, %7 : vector<8x128xf32>
    %9 = arith.truncf %8 : vector<8x128xf32> to vector<8x128xbf16>
    %c0_6 = arith.constant 0 : index
    %c0_7 = arith.constant 0 : index
    %10 = vector.load %arg4[%c0_6, %c0_7] : memref<128x256xbf16, #tpu.memory_space<vmem>>, vector<128x256xbf16>
    %cst_8 = arith.constant dense<0.000000e+00> : vector<8x256xf32>
    %11 = tpu.matmul %9, %10, %cst_8 {dimension_numbers = #tpu.dot_dimension_numbers<[1], [0], [0], [1], [0, 0, 1, 1], [], []>} : vector<8x128xbf16>, vector<128x256xbf16>, vector<8x256xf32> -> vector<8x256xf32>
    %c0_9 = arith.constant 0 : index
    %c0_10 = arith.constant 0 : index
    %12 = vector.load %arg5[%c0_9, %c0_10] : memref<1x256xf32, #tpu.memory_space<vmem>>, vector<1x256xf32>
    %13 = vector.broadcast %12 : vector<1x256xf32> to vector<8x256xf32>
    %14 = arith.addf %11, %13 : vector<8x256xf32>
    %cst_11 = arith.constant 2.000000e-01 : f32
    %15 = vector.broadcast %cst_11 : f32 to vector<8x256xf32>
    %16 = arith.mulf %15, %14 : vector<8x256xf32>
    %17 = arith.maximumf %14, %16 : vector<8x256xf32>
    %18 = arith.truncf %17 : vector<8x256xf32> to vector<8x256xbf16>
    %c0_12 = arith.constant 0 : index
    %c0_13 = arith.constant 0 : index
    %19 = vector.load %arg6[%c0_12, %c0_13] : memref<256x512xbf16, #tpu.memory_space<vmem>>, vector<256x512xbf16>
    %cst_14 = arith.constant dense<0.000000e+00> : vector<8x512xf32>
    %20 = tpu.matmul %18, %19, %cst_14 {dimension_numbers = #tpu.dot_dimension_numbers<[1], [0], [0], [1], [0, 0, 1, 1], [], []>} : vector<8x256xbf16>, vector<256x512xbf16>, vector<8x512xf32> -> vector<8x512xf32>
    %c0_15 = arith.constant 0 : index
    %c0_16 = arith.constant 0 : index
    %21 = vector.load %arg7[%c0_15, %c0_16] : memref<1x512xf32, #tpu.memory_space<vmem>>, vector<1x512xf32>
    %22 = vector.broadcast %21 : vector<1x512xf32> to vector<8x512xf32>
    %23 = arith.addf %20, %22 : vector<8x512xf32>
    %cst_17 = arith.constant 2.000000e-01 : f32
    %24 = vector.broadcast %cst_17 : f32 to vector<8x512xf32>
    %25 = arith.mulf %24, %23 : vector<8x512xf32>
    %26 = arith.maximumf %23, %25 : vector<8x512xf32>
    %27 = arith.truncf %26 : vector<8x512xf32> to vector<8x512xbf16>
    %c0_18 = arith.constant 0 : index
    %c0_19 = arith.constant 0 : index
    %28 = vector.load %arg8[%c0_18, %c0_19] : memref<512x1024xbf16, #tpu.memory_space<vmem>>, vector<512x1024xbf16>
    %cst_20 = arith.constant dense<0.000000e+00> : vector<8x1024xf32>
    %29 = tpu.matmul %27, %28, %cst_20 {dimension_numbers = #tpu.dot_dimension_numbers<[1], [0], [0], [1], [0, 0, 1, 1], [], []>} : vector<8x512xbf16>, vector<512x1024xbf16>, vector<8x1024xf32> -> vector<8x1024xf32>
    %c0_21 = arith.constant 0 : index
    %c0_22 = arith.constant 0 : index
    %30 = vector.load %arg9[%c0_21, %c0_22] : memref<1x1024xf32, #tpu.memory_space<vmem>>, vector<1x1024xf32>
    %31 = vector.broadcast %30 : vector<1x1024xf32> to vector<8x1024xf32>
    %32 = arith.addf %29, %31 : vector<8x1024xf32>
    %cst_23 = arith.constant 2.000000e-01 : f32
    %33 = vector.broadcast %cst_23 : f32 to vector<8x1024xf32>
    %34 = arith.mulf %33, %32 : vector<8x1024xf32>
    %35 = arith.maximumf %32, %34 : vector<8x1024xf32>
    %36 = arith.truncf %35 : vector<8x1024xf32> to vector<8x1024xbf16>
    %c0_24 = arith.constant 0 : index
    %c0_25 = arith.constant 0 : index
    %37 = vector.load %arg10[%c0_24, %c0_25] : memref<1024x896xbf16, #tpu.memory_space<vmem>>, vector<1024x896xbf16>
    %cst_26 = arith.constant dense<0.000000e+00> : vector<8x896xf32>
    %38 = tpu.matmul %36, %37, %cst_26 {dimension_numbers = #tpu.dot_dimension_numbers<[1], [0], [0], [1], [0, 0, 1, 1], [], []>} : vector<8x1024xbf16>, vector<1024x896xbf16>, vector<8x896xf32> -> vector<8x896xf32>
    %c0_27 = arith.constant 0 : index
    %c0_28 = arith.constant 0 : index
    %39 = vector.load %arg11[%c0_27, %c0_28] : memref<1x896xf32, #tpu.memory_space<vmem>>, vector<1x896xf32>
    %40 = vector.broadcast %39 : vector<1x896xf32> to vector<8x896xf32>
    %41 = arith.addf %38, %40 : vector<8x896xf32>
    %42 = math.tanh %41 : vector<8x896xf32>
    %c0_29 = arith.constant 0 : index
    %c0_30 = arith.constant 0 : index
    %43 = vector.load %arg12[%c0_29, %c0_30] : memref<8x896xf32, #tpu.memory_space<vmem>>, vector<8x896xf32>
    tpu.vector_store %arg12[%c0_29, %c0_30], %42 {strides = array<i32>} : memref<8x896xf32, #tpu.memory_space<vmem>>, vector<8x896xf32>,
    return
  }
  func.func @transform_0(%arg0: i32) -> (i32, i32) {
    %c0_i32 = arith.constant 0 : i32
    %c0_i32_0 = arith.constant 0 : i32
    return %arg0, %c0_i32 : i32, i32
  }
  func.func @transform_1(%arg0: i32) -> (i32, i32) {
    %c0_i32 = arith.constant 0 : i32
    %c0_i32_0 = arith.constant 0 : i32
    %c0_i32_1 = arith.constant 0 : i32
    return %c0_i32, %c0_i32_0 : i32, i32
  }
  func.func @transform_2(%arg0: i32) -> (i32, i32) {
    %c0_i32 = arith.constant 0 : i32
    %c0_i32_0 = arith.constant 0 : i32
    %c0_i32_1 = arith.constant 0 : i32
    return %c0_i32, %c0_i32_0 : i32, i32
  }
  func.func @transform_3(%arg0: i32) -> (i32, i32) {
    %c0_i32 = arith.constant 0 : i32
    %c0_i32_0 = arith.constant 0 : i32
    %c0_i32_1 = arith.constant 0 : i32
    return %c0_i32, %c0_i32_0 : i32, i32
  }
  func.func @transform_4(%arg0: i32) -> (i32, i32) {
    %c0_i32 = arith.constant 0 : i32
    %c0_i32_0 = arith.constant 0 : i32
    %c0_i32_1 = arith.constant 0 : i32
    return %c0_i32, %c0_i32_0 : i32, i32
  }
  func.func @transform_5(%arg0: i32) -> (i32, i32) {
    %c0_i32 = arith.constant 0 : i32
    %c0_i32_0 = arith.constant 0 : i32
    %c0_i32_1 = arith.constant 0 : i32
    return %c0_i32, %c0_i32_0 : i32, i32
  }
  func.func @transform_6(%arg0: i32) -> (i32, i32) {
    %c0_i32 = arith.constant 0 : i32
    %c0_i32_0 = arith.constant 0 : i32
    %c0_i32_1 = arith.constant 0 : i32
    return %c0_i32, %c0_i32_0 : i32, i32
  }
  func.func @transform_7(%arg0: i32) -> (i32, i32) {
    %c0_i32 = arith.constant 0 : i32
    %c0_i32_0 = arith.constant 0 : i32
    %c0_i32_1 = arith.constant 0 : i32
    return %c0_i32, %c0_i32_0 : i32, i32
  }
  func.func @transform_8(%arg0: i32) -> (i32, i32) {
    %c0_i32 = arith.constant 0 : i32
    %c0_i32_0 = arith.constant 0 : i32
    %c0_i32_1 = arith.constant 0 : i32
    return %c0_i32, %c0_i32_0 : i32, i32
  }
  func.func @transform_9(%arg0: i32) -> (i32, i32) {
    %c0_i32 = arith.constant 0 : i32
    %c0_i32_0 = arith.constant 0 : i32
    %c0_i32_1 = arith.constant 0 : i32
    return %c0_i32, %c0_i32_0 : i32, i32
  }
  func.func @transform_10(%arg0: i32) -> (i32, i32) {
    %c0_i32 = arith.constant 0 : i32
    %c0_i32_0 = arith.constant 0 : i32
    %c0_i32_1 = arith.constant 0 : i32
    return %c0_i32, %c0_i32_0 : i32, i32
  }
  func.func @transform_11(%arg0: i32) -> (i32, i32) {
    %c0_i32 = arith.constant 0 : i32
    %c0_i32_0 = arith.constant 0 : i32
    return %arg0, %c0_i32 : i32, i32
  }
}

</mosaic_0001>

<llo_original>
// kernel: tpu_custom_call.1
$region0: #{tpu_custom_call.1}
  #allocation0 [shape = 'u32[]', space=smem, size = 0x4, offset = 0x4, fixed_abs, tag = 'smem constant byte address 0x4 - core index']
  #allocation1 [shape = 'u32[144,128]{1,0:T(1,128)}', space=vmem, size = 0x12000, scoped, tag = 'internal scratch']
  %s0 = inlined_call_operand.hbm [shape: bf16[8,64], index: 0, kind: input, shape index: {}]
  %s1 = inlined_call_operand.hbm [shape: bf16[64,128], index: 1, kind: input, shape index: {}]
  %s2 = inlined_call_operand.hbm [shape: f32[1,128], index: 2, kind: input, shape index: {}]
  %s3 = inlined_call_operand.hbm [shape: bf16[128,256], index: 3, kind: input, shape index: {}]
  %s4 = inlined_call_operand.hbm [shape: f32[1,256], index: 4, kind: input, shape index: {}]
  %s5 = inlined_call_operand.hbm [shape: bf16[256,512], index: 5, kind: input, shape index: {}]
  %s6 = inlined_call_operand.hbm [shape: f32[1,512], index: 6, kind: input, shape index: {}]
  %s7 = inlined_call_operand.hbm [shape: bf16[512,1024], index: 7, kind: input, shape index: {}]
  %s8 = inlined_call_operand.hbm [shape: f32[1,1024], index: 8, kind: input, shape index: {}]
  %s9 = inlined_call_operand.hbm [shape: bf16[1024,896], index: 9, kind: input, shape index: {}]
  %s10 = inlined_call_operand.hbm [shape: f32[1,896], index: 10, kind: input, shape index: {}]
  %s11 = inlined_call_operand.hbm [shape: f32[8,896], index: 11, kind: output, shape index: {}]
  %s12 = sld [smem:[#allocation0]]
  $region98: #{tpu_custom_call.1} parent=0
    _
  %s14 = ssub.s32 1, %s12
  %s15 = scalar_select 0, %s14, %s12
  $region1: #{tpu_custom_call.1} parent=0
    #allocation2 [shape = 'u8[2048]{0}', space=vmem, size = 0x800, scoped, tag = 'input window, operand 0, single buffered']
    #allocation3 [shape = 's32[1]{0}', space=sflag, size = 0x4, scoped, tag = 'scoped memory for tpu_custom_call.1']
    #allocation4 [shape = 's32[1]{0}', space=sflag, size = 0x4, scoped, tag = 'scoped memory for tpu_custom_call.1']
    #allocation5 [shape = 'u8[16384]{0}', space=vmem, size = 0x4000, scoped, tag = 'input window, operand 1, single buffered']
    #allocation6 [shape = 's32[1]{0}', space=sflag, size = 0x4, scoped, tag = 'scoped memory for tpu_custom_call.1']
    #allocation7 [shape = 'u8[512]{0}', space=vmem, size = 0x400, scoped, tag = 'input window, operand 2, single buffered']
    #allocation8 [shape = 'u8[65536]{0}', space=vmem, size = 0x10000, scoped, tag = 'input window, operand 3, single buffered']
    #allocation9 [shape = 's32[1]{0}', space=sflag, size = 0x4, scoped, tag = 'scoped memory for tpu_custom_call.1']
    #allocation10 [shape = 'u8[1024]{0}', space=vmem, size = 0x400, scoped, tag = 'input window, operand 4, single buffered']
    #allocation11 [shape = 'u8[262144]{0}', space=vmem, size = 0x40000, scoped, tag = 'input window, operand 5, single buffered']
    #allocation12 [shape = 's32[1]{0}', space=sflag, size = 0x4, scoped, tag = 'scoped memory for tpu_custom_call.1']
    #allocation13 [shape = 'u8[2048]{0}', space=vmem, size = 0x800, scoped, tag = 'input window, operand 6, single buffered']
    #allocation14 [shape = 'u8[1048576]{0}', space=vmem, size = 0x100000, scoped, tag = 'input window, operand 7, single buffered']
    #allocation15 [shape = 's32[1]{0}', space=sflag, size = 0x4, scoped, tag = 'scoped memory for tpu_custom_call.1']
    #allocation16 [shape = 'u8[4096]{0}', space=vmem, size = 0x1000, scoped, tag = 'input window, operand 8, single buffered']
    #allocation17 [shape = 'u8[1835008]{0}', space=vmem, size = 0x1c0000, scoped, tag = 'input window, operand 9, single buffered']
    #allocation18 [shape = 's32[1]{0}', space=sflag, size = 0x4, scoped, tag = 'scoped memory for tpu_custom_call.1']
    #allocation19 [shape = 'u8[3584]{0}', space=vmem, size = 0x1000, scoped, tag = 'input window, operand 10, single buffered']
    #allocation20 [shape = 'u8[28672]{0}', space=vmem, size = 0x7000, scoped, tag = 'output window, operand 0, single buffered']
    %16 = vsyncpa [#allocation3], 0
    %17 = vsyncpa [#allocation6], 0
    %18 = vsyncpa [#allocation9], 0
    %19 = vsyncpa [#allocation12], 0
    %20 = vsyncpa [#allocation15], 0
    %21 = vsyncpa [#allocation18], 0
    %22 = vsyncpa [#allocation4], 0
    // Predicated region
    $region2: #{tpu_custom_call.1} parent=1 // pred_check
      _
    $region3: #{tpu_custom_call.1} parent=1 // pred_check_branch
      %24 = sbr.rel (0) target = $region5
    $region4: #{tpu_custom_call.1} parent=1 // pred_region
      %s26 = ssub.s32 64, 64
      %27 = vsyncadd [#allocation3], %s26
      %s29 = sshll.u32 [#allocation2], 4
      %s30 = int_to_ptr.vmem [resolvable:$true] %s29
      %32 = dma.hbm_to_vmem [thread:$0]  %s0, 64, %s30, [#allocation3]
    $region5: #{tpu_custom_call.1} parent=1 // pred_fallthru
      _
    // Predicated region
    $region6: #{tpu_custom_call.1} parent=1 // pred_check
      _
    $region7: #{tpu_custom_call.1} parent=1 // pred_check_branch
      %34 = sbr.rel (0) target = $region9
    $region8: #{tpu_custom_call.1} parent=1 // pred_region
      %s36 = ssub.s32 512, 512
      %37 = vsyncadd [#allocation6], %s36
      %s38 = sshll.u32 [#allocation5], 4
      %s39 = int_to_ptr.vmem [resolvable:$true] %s38
      %44 = dma.hbm_to_vmem [thread:$0]  %s1, 512, %s39, [#allocation6], 64, 64, 4
    $region9: #{tpu_custom_call.1} parent=1 // pred_fallthru
      _
    // Predicated region
    $region10: #{tpu_custom_call.1} parent=1 // pred_check
      _
    $region11: #{tpu_custom_call.1} parent=1 // pred_check_branch
      %46 = sbr.rel (0) target = $region13
    $region12: #{tpu_custom_call.1} parent=1 // pred_region
      %s48 = ssub.s32 16, 16
      %49 = vsyncadd [#allocation6], %s48
      %s51 = sshll.u32 [#allocation7], 4
      %s52 = int_to_ptr.vmem [resolvable:$true] %s51
      %54 = dma.hbm_to_vmem [thread:$0]  %s2, 16, %s52, [#allocation6]
    $region13: #{tpu_custom_call.1} parent=1 // pred_fallthru
      _
    // Predicated region
    $region14: #{tpu_custom_call.1} parent=1 // pred_check
      _
    $region15: #{tpu_custom_call.1} parent=1 // pred_check_branch
      %56 = sbr.rel (0) target = $region17
    $region16: #{tpu_custom_call.1} parent=1 // pred_region
      %s58 = ssub.s32 2048, 2048
      %59 = vsyncadd [#allocation9], %s58
      %s60 = sshll.u32 [#allocation8], 4
      %s61 = int_to_ptr.vmem [resolvable:$true] %s60
      %66 = dma.hbm_to_vmem [thread:$0]  %s3, 2048, %s61, [#allocation9], 128, 128, 8
    $region17: #{tpu_custom_call.1} parent=1 // pred_fallthru
      _
    // Predicated region
    $region18: #{tpu_custom_call.1} parent=1 // pred_check
      _
    $region19: #{tpu_custom_call.1} parent=1 // pred_check_branch
      %68 = sbr.rel (0) target = $region21
    $region20: #{tpu_custom_call.1} parent=1 // pred_region
      %s70 = ssub.s32 32, 32
      %71 = vsyncadd [#allocation9], %s70
      %s73 = sshll.u32 [#allocation10], 4
      %s74 = int_to_ptr.vmem [resolvable:$true] %s73
      %76 = dma.hbm_to_vmem [thread:$0]  %s4, 32, %s74, [#allocation9]
    $region21: #{tpu_custom_call.1} parent=1 // pred_fallthru
      _
    // Predicated region
    $region22: #{tpu_custom_call.1} parent=1 // pred_check
      _
    $region23: #{tpu_custom_call.1} parent=1 // pred_check_branch
      %78 = sbr.rel (0) target = $region25
    $region24: #{tpu_custom_call.1} parent=1 // pred_region
      %s80 = ssub.s32 8192, 8192
      %81 = vsyncadd [#allocation12], %s80
      %s82 = sshll.u32 [#allocation11], 4
      %s83 = int_to_ptr.vmem [resolvable:$true] %s82
      %88 = dma.hbm_to_vmem [thread:$0]  %s5, 8192, %s83, [#allocation12], 256, 256, 16
    $region25: #{tpu_custom_call.1} parent=1 // pred_fallthru
      _
    // Predicated region
    $region26: #{tpu_custom_call.1} parent=1 // pred_check
      _
    $region27: #{tpu_custom_call.1} parent=1 // pred_check_branch
      %90 = sbr.rel (0) target = $region29
    $region28: #{tpu_custom_call.1} parent=1 // pred_region
      %s92 = ssub.s32 64, 64
      %93 = vsyncadd [#allocation12], %s92
      %s95 = sshll.u32 [#allocation13], 4
      %s96 = int_to_ptr.vmem [resolvable:$true] %s95
      %98 = dma.hbm_to_vmem [thread:$0]  %s6, 64, %s96, [#allocation12]
    $region29: #{tpu_custom_call.1} parent=1 // pred_fallthru
      _
    // Predicated region
    $region30: #{tpu_custom_call.1} parent=1 // pred_check
      _
    $region31: #{tpu_custom_call.1} parent=1 // pred_check_branch
      %100 = sbr.rel (0) target = $region33
    $region32: #{tpu_custom_call.1} parent=1 // pred_region
      %s102 = ssub.s32 32768, 32768
      %103 = vsyncadd [#allocation15], %s102
      %s104 = sshll.u32 [#allocation14], 4
      %s105 = int_to_ptr.vmem [resolvable:$true] %s104
      %110 = dma.hbm_to_vmem [thread:$0]  %s7, 32768, %s105, [#allocation15], 512, 512, 32
    $region33: #{tpu_custom_call.1} parent=1 // pred_fallthru
      _
    // Predicated region
    $region34: #{tpu_custom_call.1} parent=1 // pred_check
      _
    $region35: #{tpu_custom_call.1} parent=1 // pred_check_branch
      %112 = sbr.rel (0) target = $region37
    $region36: #{tpu_custom_call.1} parent=1 // pred_region
      %s114 = ssub.s32 128, 128
      %115 = vsyncadd [#allocation15], %s114
      %s117 = sshll.u32 [#allocation16], 4
      %s118 = int_to_ptr.vmem [resolvable:$true] %s117
      %120 = dma.hbm_to_vmem [thread:$0]  %s8, 128, %s118, [#allocation15]
    $region37: #{tpu_custom_call.1} parent=1 // pred_fallthru
      _
    // Predicated region
    $region38: #{tpu_custom_call.1} parent=1 // pred_check
      _
    $region39: #{tpu_custom_call.1} parent=1 // pred_check_branch
      %122 = sbr.rel (0) target = $region41
    $region40: #{tpu_custom_call.1} parent=1 // pred_region
      %s124 = ssub.s32 57344, 57344
      %125 = vsyncadd [#allocation18], %s124
      %s126 = sshll.u32 [#allocation17], 4
      %s127 = int_to_ptr.vmem [resolvable:$true] %s126
      %132 = dma.hbm_to_vmem [thread:$0]  %s9, 57344, %s127, [#allocation18], 448, 448, 28
    $region41: #{tpu_custom_call.1} parent=1 // pred_fallthru
      _
    // Predicated region
    $region42: #{tpu_custom_call.1} parent=1 // pred_check
      _
    $region43: #{tpu_custom_call.1} parent=1 // pred_check_branch
      %134 = sbr.rel (0) target = $region45
    $region44: #{tpu_custom_call.1} parent=1 // pred_region
      %s136 = ssub.s32 112, 112
      %137 = vsyncadd [#allocation18], %s136
      %s139 = sshll.u32 [#allocation19], 4
      %s140 = int_to_ptr.vmem [resolvable:$true] %s139
      %142 = dma.hbm_to_vmem [thread:$0]  %s10, 112, %s140, [#allocation18]
    $region45: #{tpu_custom_call.1} parent=1 // pred_fallthru
      _
    // Predicated region
    $region46: #{tpu_custom_call.1} parent=1 // pred_check
      _
    $region47: #{tpu_custom_call.1} parent=1 // pred_check_branch
      %144 = sbr.rel (0) target = $region49
    $region48: #{tpu_custom_call.1} parent=1 // pred_region
      %145 = dma.done [#allocation3], 64
    $region49: #{tpu_custom_call.1} parent=1 // pred_fallthru
      _
    // Predicated region
    $region50: #{tpu_custom_call.1} parent=1 // pred_check
      _
    $region51: #{tpu_custom_call.1} parent=1 // pred_check_branch
      %147 = sbr.rel (0) target = $region53
    $region52: #{tpu_custom_call.1} parent=1 // pred_region
      %148 = dma.done [#allocation6], 512
    $region53: #{tpu_custom_call.1} parent=1 // pred_fallthru
      _
    // Predicated region
    $region54: #{tpu_custom_call.1} parent=1 // pred_check
      _
    $region55: #{tpu_custom_call.1} parent=1 // pred_check_branch
      %150 = sbr.rel (0) target = $region57
    $region56: #{tpu_custom_call.1} parent=1 // pred_region
      %151 = dma.done [#allocation6], 16
    $region57: #{tpu_custom_call.1} parent=1 // pred_fallthru
      _
    // Predicated region
    $region58: #{tpu_custom_call.1} parent=1 // pred_check
      _
    $region59: #{tpu_custom_call.1} parent=1 // pred_check_branch
      %153 = sbr.rel (0) target = $region61
    $region60: #{tpu_custom_call.1} parent=1 // pred_region
      %154 = dma.done [#allocation9], 2048
    $region61: #{tpu_custom_call.1} parent=1 // pred_fallthru
      _
    // Predicated region
    $region62: #{tpu_custom_call.1} parent=1 // pred_check
      _
    $region63: #{tpu_custom_call.1} parent=1 // pred_check_branch
      %156 = sbr.rel (0) target = $region65
    $region64: #{tpu_custom_call.1} parent=1 // pred_region
      %157 = dma.done [#allocation9], 32
    $region65: #{tpu_custom_call.1} parent=1 // pred_fallthru
      _
    // Predicated region
    $region66: #{tpu_custom_call.1} parent=1 // pred_check
      _
    $region67: #{tpu_custom_call.1} parent=1 // pred_check_branch
      %159 = sbr.rel (0) target = $region69
    $region68: #{tpu_custom_call.1} parent=1 // pred_region
      %160 = dma.done [#allocation12], 8192
    $region69: #{tpu_custom_call.1} parent=1 // pred_fallthru
      _
    // Predicated region
    $region70: #{tpu_custom_call.1} parent=1 // pred_check
      _
    $region71: #{tpu_custom_call.1} parent=1 // pred_check_branch
      %162 = sbr.rel (0) target = $region73
    $region72: #{tpu_custom_call.1} parent=1 // pred_region
      %163 = dma.done [#allocation12], 64
    $region73: #{tpu_custom_call.1} parent=1 // pred_fallthru
      _
    // Predicated region
    $region74: #{tpu_custom_call.1} parent=1 // pred_check
      _
    $region75: #{tpu_custom_call.1} parent=1 // pred_check_branch
      %165 = sbr.rel (0) target = $region77
    $region76: #{tpu_custom_call.1} parent=1 // pred_region
      %166 = dma.done [#allocation15], 32768
    $region77: #{tpu_custom_call.1} parent=1 // pred_fallthru
      _
    // Predicated region
    $region78: #{tpu_custom_call.1} parent=1 // pred_check
      _
    $region79: #{tpu_custom_call.1} parent=1 // pred_check_branch
      %168 = sbr.rel (0) target = $region81
    $region80: #{tpu_custom_call.1} parent=1 // pred_region
      %169 = dma.done [#allocation15], 128
    $region81: #{tpu_custom_call.1} parent=1 // pred_fallthru
      _
    // Predicated region
    $region82: #{tpu_custom_call.1} parent=1 // pred_check
      _
    $region83: #{tpu_custom_call.1} parent=1 // pred_check_branch
      %171 = sbr.rel (0) target = $region85
    $region84: #{tpu_custom_call.1} parent=1 // pred_region
      %172 = dma.done [#allocation18], 57344
    $region85: #{tpu_custom_call.1} parent=1 // pred_fallthru
      _
    // Predicated region
    $region86: #{tpu_custom_call.1} parent=1 // pred_check
      _
    $region87: #{tpu_custom_call.1} parent=1 // pred_check_branch
      %174 = sbr.rel (0) target = $region89
    $region88: #{tpu_custom_call.1} parent=1 // pred_region
      %175 = dma.done [#allocation18], 112
    $region89: #{tpu_custom_call.1} parent=1 // pred_fallthru
      _
    %v177 = vld [vmem:[#allocation2] sm:$0xf]
    %v178 = vld [vmem:[#allocation5] sm:$0xf]
    %v179 = vld [vmem:[#allocation5 + $0x4] sm:$0xf]
    %v180 = vld [vmem:[#allocation5 + $0x8] sm:$0xf]
    %v181 = vld [vmem:[#allocation5 + $0xc] sm:$0xf]
    %v182 = vld [vmem:[#allocation5 + $0x10] sm:$0xf]
    %v183 = vld [vmem:[#allocation5 + $0x14] sm:$0xf]
    %v184 = vld [vmem:[#allocation5 + $0x18] sm:$0xf]
    %v185 = vld [vmem:[#allocation5 + $0x1c] sm:$0xf]
    %v186 = vld [vmem:[#allocation7] sm:$0x1]
    %v188 = vlaneseq
    %v189 = vshrl.u32 %v188, 7
    %v190 = vsub.s32 0, %v189
    %v191 = vrot.slane %v186, %v190
    %v201 = vunpack.c.l.b16 %v178
    %v202 = vunpack.c.l.b16 %v179
    %v203 = vunpack.c.l.b16 %v180
    %v204 = vunpack.c.l.b16 %v181
    %v205 = vunpack.c.l.b16 %v182
    %v206 = vunpack.c.l.b16 %v183
    %v207 = vunpack.c.l.b16 %v184
    %v208 = vunpack.c.l.b16 %v185
    %v209 = vpack.c.b16 %v202, %v201
    %v210 = vpack.c.b16 %v204, %v203
    %v211 = vpack.c.b16 %v206, %v205
    %v212 = vpack.c.b16 %v208, %v207
    %vm217 = vcmask 523264
    %v219 = vsel %vm217, %v177, 0
    %221 = vmatprep.subr.bf16.mxu0 0
    %222 = vmatpush1.bf16.msra.mxu0 0
    %223 = vmatprep.subr.bf16.mxu0 0
    %224 = vmatpush1.bf16.msra.mxu0 0
    %225 = vmatprep.subr.bf16.mxu0 0
    %226 = vmatpush1.bf16.msra.mxu0 0
    %227 = vmatprep.subr.bf16.mxu0 0
    %228 = vmatpush1.bf16.msra.mxu0 0
    %229 = vmatprep.subr.bf16.mxu0 0
    %230 = vmatpush1.bf16.msra.mxu0 %v212
    %231 = vmatprep.subr.bf16.mxu0 0
    %232 = vmatpush1.bf16.msra.mxu0 %v211
    %233 = vmatprep.subr.bf16.mxu0 0
    %234 = vmatpush1.bf16.msra.mxu0 %v210
    %235 = vmatprep.subr.bf16.mxu0 0
    %236 = vmatpush1.bf16.msra.mxu0 %v209
    %237 = vmatprep.subr.bf16.mxu0 0
    %238 = vmatpush2.bf16.msra.mxu0 0
    %239 = vmatprep.subr.bf16.mxu0 0
    %240 = vmatpush2.bf16.msra.mxu0 0
    %241 = vmatprep.subr.bf16.mxu0 0
    %242 = vmatpush2.bf16.msra.mxu0 0
    %243 = vmatprep.subr.bf16.mxu0 0
    %244 = vmatpush2.bf16.msra.mxu0 0
    %245 = vmatprep.subr.bf16.mxu0 0
    %246 = vmatpush2.bf16.msra.mxu0 0
    %247 = vmatprep.subr.bf16.mxu0 0
    %248 = vmatpush2.bf16.msra.mxu0 0
    %249 = vmatprep.subr.bf16.mxu0 0
    %250 = vmatpush2.bf16.msra.mxu0 0
    %251 = vmatprep.subr.bf16.mxu0 0
    %252 = vmatpush2.bf16.msra.mxu0 0
    %253 = vmatprep.mubr.bf16.mxu0 0
    %254 = vmatmul.mubr.bf16.gmra.mxu0 %v219
    %v255 = vpop.f32.mrf.mxu0
    %v256 = vadd.f32 %v191, %v255
    %v257 = vpop.f32.mrf.mxu0
    %v258 = vpop.f32.mrf.mxu0
    %v259 = vpop.f32.mrf.mxu0
    %260 = vdwg.mxu0
    %v261 = vmul.f32 %v256, 0.2
    %v262 = vmax.f32 %v256, %v261
    %v263 = vpack.c.bf16 %v262, %v262
    %v264 = vld [vmem:[#allocation8] sm:$0xff]
    %v265 = vld [vmem:[#allocation8 + $0x8] sm:$0xff]
    %v266 = vld [vmem:[#allocation8 + $0x10] sm:$0xff]
    %v267 = vld [vmem:[#allocation8 + $0x18] sm:$0xff]
    %v268 = vld [vmem:[#allocation8 + $0x20] sm:$0xff]
    %v269 = vld [vmem:[#allocation8 + $0x28] sm:$0xff]
    %v270 = vld [vmem:[#allocation8 + $0x30] sm:$0xff]
    %v271 = vld [vmem:[#allocation8 + $0x38] sm:$0xff]
    %v272 = vld [vmem:[#allocation8 + $0x40] sm:$0xff]
    %v273 = vld [vmem:[#allocation8 + $0x48] sm:$0xff]
    %v274 = vld [vmem:[#allocation8 + $0x50] sm:$0xff]
    %v275 = vld [vmem:[#allocation8 + $0x58] sm:$0xff]
    %v276 = vld [vmem:[#allocation8 + $0x60] sm:$0xff]
    %v277 = vld [vmem:[#allocation8 + $0x68] sm:$0xff]
    %v278 = vld [vmem:[#allocation8 + $0x70] sm:$0xff]
    %v279 = vld [vmem:[#allocation8 + $0x78] sm:$0xff]
    %v280 = vld [vmem:[#allocation10] sm:$0x3]
    %v282 = vlaneseq
    %v283 = vshrl.u32 %v282, 7
    %v284 = vsub.s32 0, %v283
    %v285 = vrot.slane %v280, %v284
    %v286 = vlaneseq
    %v287 = vshrl.u32 %v286, 7
    %v288 = vsub.s32 1, %v287
    %v289 = vrot.slane %v280, %v288
    %v308 = vunpack.c.l.b16 %v264
    %v309 = vunpack.c.h.b16 %v264
    %v310 = vunpack.c.l.b16 %v265
    %v311 = vunpack.c.h.b16 %v265
    %v312 = vunpack.c.l.b16 %v266
    %v313 = vunpack.c.h.b16 %v266
    %v314 = vunpack.c.l.b16 %v267
    %v315 = vunpack.c.h.b16 %v267
    %v316 = vunpack.c.l.b16 %v268
    %v317 = vunpack.c.h.b16 %v268
    %v318 = vunpack.c.l.b16 %v269
    %v319 = vunpack.c.h.b16 %v269
    %v320 = vunpack.c.l.b16 %v270
    %v321 = vunpack.c.h.b16 %v270
    %v322 = vunpack.c.l.b16 %v271
    %v323 = vunpack.c.h.b16 %v271
    %v324 = vunpack.c.l.b16 %v272
    %v325 = vunpack.c.h.b16 %v272
    %v326 = vunpack.c.l.b16 %v273
    %v327 = vunpack.c.h.b16 %v273
    %v328 = vunpack.c.l.b16 %v274
    %v329 = vunpack.c.h.b16 %v274
    %v330 = vunpack.c.l.b16 %v275
    %v331 = vunpack.c.h.b16 %v275
    %v332 = vunpack.c.l.b16 %v276
    %v333 = vunpack.c.h.b16 %v276
    %v334 = vunpack.c.l.b16 %v277
    %v335 = vunpack.c.h.b16 %v277
    %v336 = vunpack.c.l.b16 %v278
    %v337 = vunpack.c.h.b16 %v278
    %v338 = vunpack.c.l.b16 %v279
    %v339 = vunpack.c.h.b16 %v279
    %v340 = vpack.c.b16 %v310, %v308
    %v341 = vpack.c.b16 %v311, %v309
    %v342 = vpack.c.b16 %v314, %v312
    %v343 = vpack.c.b16 %v315, %v313
    %v344 = vpack.c.b16 %v318, %v316
    %v345 = vpack.c.b16 %v319, %v317
    %v346 = vpack.c.b16 %v322, %v320
    %v347 = vpack.c.b16 %v323, %v321
    %v348 = vpack.c.b16 %v326, %v324
    %v349 = vpack.c.b16 %v327, %v325
    %v350 = vpack.c.b16 %v330, %v328
    %v351 = vpack.c.b16 %v331, %v329
    %v352 = vpack.c.b16 %v334, %v332
    %v353 = vpack.c.b16 %v335, %v333
    %v354 = vpack.c.b16 %v338, %v336
    %v355 = vpack.c.b16 %v339, %v337
    %372 = vmatprep.subr.bf16.mxu0 %v355
    %373 = vmatpush1.bf16.msra.mxu0 %v354
    %374 = vmatprep.subr.bf16.mxu0 %v353
    %375 = vmatpush1.bf16.msra.mxu0 %v352
    %376 = vmatprep.subr.bf16.mxu0 %v351
    %377 = vmatpush1.bf16.msra.mxu0 %v350
    %378 = vmatprep.subr.bf16.mxu0 %v349
    %379 = vmatpush1.bf16.msra.mxu0 %v348
    %380 = vmatprep.subr.bf16.mxu0 %v347
    %381 = vmatpush1.bf16.msra.mxu0 %v346
    %382 = vmatprep.subr.bf16.mxu0 %v345
    %383 = vmatpush1.bf16.msra.mxu0 %v344
    %384 = vmatprep.subr.bf16.mxu0 %v343
    %385 = vmatpush1.bf16.msra.mxu0 %v342
    %386 = vmatprep.subr.bf16.mxu0 %v341
    %387 = vmatpush1.bf16.msra.mxu0 %v340
    %388 = vmatprep.subr.bf16.mxu0 0
    %389 = vmatpush2.bf16.msra.mxu0 0
    %390 = vmatprep.subr.bf16.mxu0 0
    %391 = vmatpush2.bf16.msra.mxu0 0
    %392 = vmatprep.subr.bf16.mxu0 0
    %393 = vmatpush2.bf16.msra.mxu0 0
    %394 = vmatprep.subr.bf16.mxu0 0
    %395 = vmatpush2.bf16.msra.mxu0 0
    %396 = vmatprep.subr.bf16.mxu0 0
    %397 = vmatpush2.bf16.msra.mxu0 0
    %398 = vmatprep.subr.bf16.mxu0 0
    %399 = vmatpush2.bf16.msra.mxu0 0
    %400 = vmatprep.subr.bf16.mxu0 0
    %401 = vmatpush2.bf16.msra.mxu0 0
    %402 = vmatprep.subr.bf16.mxu0 0
    %403 = vmatpush2.bf16.msra.mxu0 0
    %404 = vmatprep.mubr.bf16.mxu0 0
    %405 = vmatmul.mubr.bf16.gmra.mxu0 %v263
    %v406 = vpop.f32.mrf.mxu0
    %v407 = vadd.f32 %v285, %v406
    %v408 = vpop.f32.mrf.mxu0
    %v409 = vadd.f32 %v289, %v408
    %v410 = vpop.f32.mrf.mxu0
    %v411 = vpop.f32.mrf.mxu0
    %412 = vdwg.mxu0
    %v413 = vmul.f32 %v407, 0.2
    %v414 = vmul.f32 %v409, 0.2
    %v415 = vmax.f32 %v407, %v413
    %v416 = vmax.f32 %v409, %v414
    %v417 = vpack.c.bf16 %v415, %v415
    %v418 = vpack.c.bf16 %v416, %v416
    %v419 = vld [vmem:[#allocation11] sm:$0xff]
    %v420 = vld [vmem:[#allocation11 + $0x8] sm:$0xff]
    %v421 = vld [vmem:[#allocation11 + $0x10] sm:$0xff]
    %v422 = vld [vmem:[#allocation11 + $0x18] sm:$0xff]
    %v423 = vld [vmem:[#allocation11 + $0x20] sm:$0xff]
    %v424 = vld [vmem:[#allocation11 + $0x28] sm:$0xff]
    %v425 = vld [vmem:[#allocation11 + $0x30] sm:$0xff]
    %v426 = vld [vmem:[#allocation11 + $0x38] sm:$0xff]
    %v427 = vld [vmem:[#allocation11 + $0x40] sm:$0xff]
    %v428 = vld [vmem:[#allocation11 + $0x48] sm:$0xff]
    %v429 = vld [vmem:[#allocation11 + $0x50] sm:$0xff]
    %v430 = vld [vmem:[#allocation11 + $0x58] sm:$0xff]
    %v431 = vld [vmem:[#allocation11 + $0x60] sm:$0xff]
    %v432 = vld [vmem:[#allocation11 + $0x68] sm:$0xff]
    %v433 = vld [vmem:[#allocation11 + $0x70] sm:$0xff]
    %v434 = vld [vmem:[#allocation11 + $0x78] sm:$0xff]
    %v435 = vld [vmem:[#allocation11 + $0x80] sm:$0xff]
    %v436 = vld [vmem:[#allocation11 + $0x88] sm:$0xff]
    %v437 = vld [vmem:[#allocation11 + $0x90] sm:$0xff]
    %v438 = vld [vmem:[#allocation11 + $0x98] sm:$0xff]
    %v439 = vld [vmem:[#allocation11 + $0xa0] sm:$0xff]
    %v440 = vld [vmem:[#allocation11 + $0xa8] sm:$0xff]
    %v441 = vld [vmem:[#allocation11 + $0xb0] sm:$0xff]
    %v442 = vld [vmem:[#allocation11 + $0xb8] sm:$0xff]
    %v443 = vld [vmem:[#allocation11 + $0xc0] sm:$0xff]
    %v444 = vld [vmem:[#allocation11 + $0xc8] sm:$0xff]
    %v445 = vld [vmem:[#allocation11 + $0xd0] sm:$0xff]
    %v446 = vld [vmem:[#allocation11 + $0xd8] sm:$0xff]
    %v447 = vld [vmem:[#allocation11 + $0xe0] sm:$0xff]
    %v448 = vld [vmem:[#allocation11 + $0xe8] sm:$0xff]
    %v449 = vld [vmem:[#allocation11 + $0xf0] sm:$0xff]
    %v450 = vld [vmem:[#allocation11 + $0xf8] sm:$0xff]
    %v451 = vld [vmem:[#allocation11 + $0x100] sm:$0xff]
    %v452 = vld [vmem:[#allocation11 + $0x108] sm:$0xff]
    %v453 = vld [vmem:[#allocation11 + $0x110] sm:$0xff]
    %v454 = vld [vmem:[#allocation11 + $0x118] sm:$0xff]
    %v455 = vld [vmem:[#allocation11 + $0x120] sm:$0xff]
    %v456 = vld [vmem:[#allocation11 + $0x128] sm:$0xff]
    %v457 = vld [vmem:[#allocation11 + $0x130] sm:$0xff]
    %v458 = vld [vmem:[#allocation11 + $0x138] sm:$0xff]
    %v459 = vld [vmem:[#allocation11 + $0x140] sm:$0xff]
    %v460 = vld [vmem:[#allocation11 + $0x148] sm:$0xff]
    %v461 = vld [vmem:[#allocation11 + $0x150] sm:$0xff]
    %v462 = vld [vmem:[#allocation11 + $0x158] sm:$0xff]
    %v463 = vld [vmem:[#allocation11 + $0x160] sm:$0xff]
    %v464 = vld [vmem:[#allocation11 + $0x168] sm:$0xff]
    %v465 = vld [vmem:[#allocation11 + $0x170] sm:$0xff]
    %v466 = vld [vmem:[#allocation11 + $0x178] sm:$0xff]
    %v467 = vld [vmem:[#allocation11 + $0x180] sm:$0xff]
    %v468 = vld [vmem:[#allocation11 + $0x188] sm:$0xff]
    %v469 = vld [vmem:[#allocation11 + $0x190] sm:$0xff]
    %v470 = vld [vmem:[#allocation11 + $0x198] sm:$0xff]
    %v471 = vld [vmem:[#allocation11 + $0x1a0] sm:$0xff]
    %v472 = vld [vmem:[#allocation11 + $0x1a8] sm:$0xff]
    %v473 = vld [vmem:[#allocation11 + $0x1b0] sm:$0xff]
    %v474 = vld [vmem:[#allocation11 + $0x1b8] sm:$0xff]
    %v475 = vld [vmem:[#allocation11 + $0x1c0] sm:$0xff]
    %v476 = vld [vmem:[#allocation11 + $0x1c8] sm:$0xff]
    %v477 = vld [vmem:[#allocation11 + $0x1d0] sm:$0xff]
    %v478 = vld [vmem:[#allocation11 + $0x1d8] sm:$0xff]
    %v479 = vld [vmem:[#allocation11 + $0x1e0] sm:$0xff]
    %v480 = vld [vmem:[#allocation11 + $0x1e8] sm:$0xff]
    %v481 = vld [vmem:[#allocation11 + $0x1f0] sm:$0xff]
    %v482 = vld [vmem:[#allocation11 + $0x1f8] sm:$0xff]
    %v483 = vld [vmem:[#allocation13] sm:$0xf]
    %v485 = vlaneseq
    %v486 = vshrl.u32 %v485, 7
    %v487 = vsub.s32 0, %v486
    %v488 = vrot.slane %v483, %v487
    %v489 = vlaneseq
    %v490 = vshrl.u32 %v489, 7
    %v491 = vsub.s32 1, %v490
    %v492 = vrot.slane %v483, %v491
    %v493 = vlaneseq
    %v494 = vshrl.u32 %v493, 7
    %v495 = vsub.s32 2, %v494
    %v496 = vrot.slane %v483, %v495
    %v497 = vlaneseq
    %v498 = vshrl.u32 %v497, 7
    %v499 = vsub.s32 3, %v498
    %v500 = vrot.slane %v483, %v499
    %v569 = vunpack.c.l.b16 %v419
    %v570 = vunpack.c.h.b16 %v419
    %v571 = vunpack.c.l.b16 %v420
    %v572 = vunpack.c.h.b16 %v420
    %v573 = vunpack.c.l.b16 %v421
    %v574 = vunpack.c.h.b16 %v421
    %v575 = vunpack.c.l.b16 %v422
    %v576 = vunpack.c.h.b16 %v422
    %v577 = vunpack.c.l.b16 %v423
    %v578 = vunpack.c.h.b16 %v423
    %v579 = vunpack.c.l.b16 %v424
    %v580 = vunpack.c.h.b16 %v424
    %v581 = vunpack.c.l.b16 %v425
    %v582 = vunpack.c.h.b16 %v425
    %v583 = vunpack.c.l.b16 %v426
    %v584 = vunpack.c.h.b16 %v426
    %v585 = vunpack.c.l.b16 %v427
    %v586 = vunpack.c.h.b16 %v427
    %v587 = vunpack.c.l.b16 %v428
    %v588 = vunpack.c.h.b16 %v428
    %v589 = vunpack.c.l.b16 %v429
    %v590 = vunpack.c.h.b16 %v429
    %v591 = vunpack.c.l.b16 %v430
    %v592 = vunpack.c.h.b16 %v430
    %v593 = vunpack.c.l.b16 %v431
    %v594 = vunpack.c.h.b16 %v431
    %v595 = vunpack.c.l.b16 %v432
    %v596 = vunpack.c.h.b16 %v432
    %v597 = vunpack.c.l.b16 %v433
    %v598 = vunpack.c.h.b16 %v433
    %v599 = vunpack.c.l.b16 %v434
    %v600 = vunpack.c.h.b16 %v434
    %v601 = vunpack.c.l.b16 %v435
    %v602 = vunpack.c.h.b16 %v435
    %v603 = vunpack.c.l.b16 %v436
    %v604 = vunpack.c.h.b16 %v436
    %v605 = vunpack.c.l.b16 %v437
    %v606 = vunpack.c.h.b16 %v437
    %v607 = vunpack.c.l.b16 %v438
    %v608 = vunpack.c.h.b16 %v438
    %v609 = vunpack.c.l.b16 %v439
    %v610 = vunpack.c.h.b16 %v439
    %v611 = vunpack.c.l.b16 %v440
    %v612 = vunpack.c.h.b16 %v440
    %v613 = vunpack.c.l.b16 %v441
    %v614 = vunpack.c.h.b16 %v441
    %v615 = vunpack.c.l.b16 %v442
    %v616 = vunpack.c.h.b16 %v442
    %v617 = vunpack.c.l.b16 %v443
    %v618 = vunpack.c.h.b16 %v443
    %v619 = vunpack.c.l.b16 %v444
    %v620 = vunpack.c.h.b16 %v444
    %v621 = vunpack.c.l.b16 %v445
    %v622 = vunpack.c.h.b16 %v445
    %v623 = vunpack.c.l.b16 %v446
    %v624 = vunpack.c.h.b16 %v446
    %v625 = vunpack.c.l.b16 %v447
    %v626 = vunpack.c.h.b16 %v447
    %v627 = vunpack.c.l.b16 %v448
    %v628 = vunpack.c.h.b16 %v448
    %v629 = vunpack.c.l.b16 %v449
    %v630 = vunpack.c.h.b16 %v449
    %v631 = vunpack.c.l.b16 %v450
    %v632 = vunpack.c.h.b16 %v450
    %v633 = vunpack.c.l.b16 %v451
    %v634 = vunpack.c.h.b16 %v451
    %v635 = vunpack.c.l.b16 %v452
    %v636 = vunpack.c.h.b16 %v452
    %v637 = vunpack.c.l.b16 %v453
    %v638 = vunpack.c.h.b16 %v453
    %v639 = vunpack.c.l.b16 %v454
    %v640 = vunpack.c.h.b16 %v454
    %v641 = vunpack.c.l.b16 %v455
    %v642 = vunpack.c.h.b16 %v455
    %v643 = vunpack.c.l.b16 %v456
    %v644 = vunpack.c.h.b16 %v456
    %v645 = vunpack.c.l.b16 %v457
    %v646 = vunpack.c.h.b16 %v457
    %v647 = vunpack.c.l.b16 %v458
    %v648 = vunpack.c.h.b16 %v458
    %v649 = vunpack.c.l.b16 %v459
    %v650 = vunpack.c.h.b16 %v459
    %v651 = vunpack.c.l.b16 %v460
    %v652 = vunpack.c.h.b16 %v460
    %v653 = vunpack.c.l.b16 %v461
    %v654 = vunpack.c.h.b16 %v461
    %v655 = vunpack.c.l.b16 %v462
    %v656 = vunpack.c.h.b16 %v462
    %v657 = vunpack.c.l.b16 %v463
    %v658 = vunpack.c.h.b16 %v463
    %v659 = vunpack.c.l.b16 %v464
    %v660 = vunpack.c.h.b16 %v464
    %v661 = vunpack.c.l.b16 %v465
    %v662 = vunpack.c.h.b16 %v465
    %v663 = vunpack.c.l.b16 %v466
    %v664 = vunpack.c.h.b16 %v466
    %v665 = vunpack.c.l.b16 %v467
    %v666 = vunpack.c.h.b16 %v467
    %v667 = vunpack.c.l.b16 %v468
    %v668 = vunpack.c.h.b16 %v468
    %v669 = vunpack.c.l.b16 %v469
    %v670 = vunpack.c.h.b16 %v469
    %v671 = vunpack.c.l.b16 %v470
    %v672 = vunpack.c.h.b16 %v470
    %v673 = vunpack.c.l.b16 %v471
    %v674 = vunpack.c.h.b16 %v471
    %v675 = vunpack.c.l.b16 %v472
    %v676 = vunpack.c.h.b16 %v472
    %v677 = vunpack.c.l.b16 %v473
    %v678 = vunpack.c.h.b16 %v473
    %v679 = vunpack.c.l.b16 %v474
    %v680 = vunpack.c.h.b16 %v474
    %v681 = vunpack.c.l.b16 %v475
    %v682 = vunpack.c.h.b16 %v475
    %v683 = vunpack.c.l.b16 %v476
    %v684 = vunpack.c.h.b16 %v476
    %v685 = vunpack.c.l.b16 %v477
    %v686 = vunpack.c.h.b16 %v477
    %v687 = vunpack.c.l.b16 %v478
    %v688 = vunpack.c.h.b16 %v478
    %v689 = vunpack.c.l.b16 %v479
    %v690 = vunpack.c.h.b16 %v479
    %v691 = vunpack.c.l.b16 %v480
    %v692 = vunpack.c.h.b16 %v480
    %v693 = vunpack.c.l.b16 %v481
    %v694 = vunpack.c.h.b16 %v481
    %v695 = vunpack.c.l.b16 %v482
    %v696 = vunpack.c.h.b16 %v482
    %v697 = vpack.c.b16 %v573, %v569
    %v698 = vpack.c.b16 %v574, %v570
    %v699 = vpack.c.b16 %v575, %v571
    %v700 = vpack.c.b16 %v576, %v572
    %v701 = vpack.c.b16 %v581, %v577
    %v702 = vpack.c.b16 %v582, %v578
    %v703 = vpack.c.b16 %v583, %v579
    %v704 = vpack.c.b16 %v584, %v580
    %v705 = vpack.c.b16 %v589, %v585
    %v706 = vpack.c.b16 %v590, %v586
    %v707 = vpack.c.b16 %v591, %v587
    %v708 = vpack.c.b16 %v592, %v588
    %v709 = vpack.c.b16 %v597, %v593
    %v710 = vpack.c.b16 %v598, %v594
    %v711 = vpack.c.b16 %v599, %v595
    %v712 = vpack.c.b16 %v600, %v596
    %v713 = vpack.c.b16 %v605, %v601
    %v714 = vpack.c.b16 %v606, %v602
    %v715 = vpack.c.b16 %v607, %v603
    %v716 = vpack.c.b16 %v608, %v604
    %v717 = vpack.c.b16 %v613, %v609
    %v718 = vpack.c.b16 %v614, %v610
    %v719 = vpack.c.b16 %v615, %v611
    %v720 = vpack.c.b16 %v616, %v612
    %v721 = vpack.c.b16 %v621, %v617
    %v722 = vpack.c.b16 %v622, %v618
    %v723 = vpack.c.b16 %v623, %v619
    %v724 = vpack.c.b16 %v624, %v620
    %v725 = vpack.c.b16 %v629, %v625
    %v726 = vpack.c.b16 %v630, %v626
    %v727 = vpack.c.b16 %v631, %v627
    %v728 = vpack.c.b16 %v632, %v628
    %v729 = vpack.c.b16 %v637, %v633
    %v730 = vpack.c.b16 %v638, %v634
    %v731 = vpack.c.b16 %v639, %v635
    %v732 = vpack.c.b16 %v640, %v636
    %v733 = vpack.c.b16 %v645, %v641
    %v734 = vpack.c.b16 %v646, %v642
    %v735 = vpack.c.b16 %v647, %v643
    %v736 = vpack.c.b16 %v648, %v644
    %v737 = vpack.c.b16 %v653, %v649
    %v738 = vpack.c.b16 %v654, %v650
    %v739 = vpack.c.b16 %v655, %v651
    %v740 = vpack.c.b16 %v656, %v652
    %v741 = vpack.c.b16 %v661, %v657
    %v742 = vpack.c.b16 %v662, %v658
    %v743 = vpack.c.b16 %v663, %v659
    %v744 = vpack.c.b16 %v664, %v660
    %v745 = vpack.c.b16 %v669, %v665
    %v746 = vpack.c.b16 %v670, %v666
    %v747 = vpack.c.b16 %v671, %v667
    %v748 = vpack.c.b16 %v672, %v668
    %v749 = vpack.c.b16 %v677, %v673
    %v750 = vpack.c.b16 %v678, %v674
    %v751 = vpack.c.b16 %v679, %v675
    %v752 = vpack.c.b16 %v680, %v676
    %v753 = vpack.c.b16 %v685, %v681
    %v754 = vpack.c.b16 %v686, %v682
    %v755 = vpack.c.b16 %v687, %v683
    %v756 = vpack.c.b16 %v688, %v684
    %v757 = vpack.c.b16 %v693, %v689
    %v758 = vpack.c.b16 %v694, %v690
    %v759 = vpack.c.b16 %v695, %v691
    %v760 = vpack.c.b16 %v696, %v692
    %825 = vmatprep.subr.bf16.mxu0 %v726
    %826 = vmatpush1.bf16.msra.mxu0 %v725
    %827 = vmatprep.subr.bf16.mxu0 %v722
    %828 = vmatpush1.bf16.msra.mxu0 %v721
    %829 = vmatprep.subr.bf16.mxu0 %v718
    %830 = vmatpush1.bf16.msra.mxu0 %v717
    %831 = vmatprep.subr.bf16.mxu0 %v714
    %832 = vmatpush1.bf16.msra.mxu0 %v713
    %833 = vmatprep.subr.bf16.mxu0 %v710
    %834 = vmatpush1.bf16.msra.mxu0 %v709
    %835 = vmatprep.subr.bf16.mxu0 %v706
    %836 = vmatpush1.bf16.msra.mxu0 %v705
    %837 = vmatprep.subr.bf16.mxu0 %v702
    %838 = vmatpush1.bf16.msra.mxu0 %v701
    %839 = vmatprep.subr.bf16.mxu0 %v698
    %840 = vmatpush1.bf16.msra.mxu0 %v697
    %841 = vmatprep.subr.bf16.mxu0 %v758
    %842 = vmatpush2.bf16.msra.mxu0 %v757
    %843 = vmatprep.subr.bf16.mxu0 %v754
    %844 = vmatpush2.bf16.msra.mxu0 %v753
    %845 = vmatprep.subr.bf16.mxu0 %v750
    %846 = vmatpush2.bf16.msra.mxu0 %v749
    %847 = vmatprep.subr.bf16.mxu0 %v746
    %848 = vmatpush2.bf16.msra.mxu0 %v745
    %849 = vmatprep.subr.bf16.mxu0 %v742
    %850 = vmatpush2.bf16.msra.mxu0 %v741
    %851 = vmatprep.subr.bf16.mxu0 %v738
    %852 = vmatpush2.bf16.msra.mxu0 %v737
    %853 = vmatprep.subr.bf16.mxu0 %v734
    %854 = vmatpush2.bf16.msra.mxu0 %v733
    %855 = vmatprep.subr.bf16.mxu0 %v730
    %856 = vmatpush2.bf16.msra.mxu0 %v729
    %857 = vmatprep.mubr.bf16.mxu0 %v418
    %858 = vmatmul.mubr.bf16.gmra.mxu0 %v417
    %v859 = vpop.f32.mrf.mxu0
    %v860 = vadd.f32 %v488, %v859
    %v861 = vpop.f32.mrf.mxu0
    %v862 = vadd.f32 %v492, %v861
    %v863 = vpop.f32.mrf.mxu0
    %v864 = vpop.f32.mrf.mxu0
    %865 = vdwg.mxu0
    %866 = vmatprep.subr.bf16.mxu0 %v728
    %867 = vmatpush1.bf16.msra.mxu0 %v727
    %868 = vmatprep.subr.bf16.mxu0 %v724
    %869 = vmatpush1.bf16.msra.mxu0 %v723
    %870 = vmatprep.subr.bf16.mxu0 %v720
    %871 = vmatpush1.bf16.msra.mxu0 %v719
    %872 = vmatprep.subr.bf16.mxu0 %v716
    %873 = vmatpush1.bf16.msra.mxu0 %v715
    %874 = vmatprep.subr.bf16.mxu0 %v712
    %875 = vmatpush1.bf16.msra.mxu0 %v711
    %876 = vmatprep.subr.bf16.mxu0 %v708
    %877 = vmatpush1.bf16.msra.mxu0 %v707
    %878 = vmatprep.subr.bf16.mxu0 %v704
    %879 = vmatpush1.bf16.msra.mxu0 %v703
    %880 = vmatprep.subr.bf16.mxu0 %v700
    %881 = vmatpush1.bf16.msra.mxu0 %v699
    %882 = vmatprep.subr.bf16.mxu0 %v760
    %883 = vmatpush2.bf16.msra.mxu0 %v759
    %884 = vmatprep.subr.bf16.mxu0 %v756
    %885 = vmatpush2.bf16.msra.mxu0 %v755
    %886 = vmatprep.subr.bf16.mxu0 %v752
    %887 = vmatpush2.bf16.msra.mxu0 %v751
    %888 = vmatprep.subr.bf16.mxu0 %v748
    %889 = vmatpush2.bf16.msra.mxu0 %v747
    %890 = vmatprep.subr.bf16.mxu0 %v744
    %891 = vmatpush2.bf16.msra.mxu0 %v743
    %892 = vmatprep.subr.bf16.mxu0 %v740
    %893 = vmatpush2.bf16.msra.mxu0 %v739
    %894 = vmatprep.subr.bf16.mxu0 %v736
    %895 = vmatpush2.bf16.msra.mxu0 %v735
    %896 = vmatprep.subr.bf16.mxu0 %v732
    %897 = vmatpush2.bf16.msra.mxu0 %v731
    %898 = vmatprep.mubr.bf16.mxu0 %v418
    %899 = vmatmul.mubr.bf16.gmra.mxu0 %v417
    %v900 = vpop.f32.mrf.mxu0
    %v901 = vadd.f32 %v496, %v900
    %v902 = vpop.f32.mrf.mxu0
    %v903 = vadd.f32 %v500, %v902
    %v904 = vpop.f32.mrf.mxu0
    %v905 = vpop.f32.mrf.mxu0
    %906 = vdwg.mxu0
    %v907 = vmul.f32 %v860, 0.2
    %v908 = vmul.f32 %v862, 0.2
    %v909 = vmul.f32 %v901, 0.2
    %v910 = vmul.f32 %v903, 0.2
    %v911 = vmax.f32 %v860, %v907
    %v912 = vmax.f32 %v862, %v908
    %v913 = vmax.f32 %v901, %v909
    %v914 = vmax.f32 %v903, %v910
    %v915 = vpack.c.bf16 %v911, %v911
    %v916 = vpack.c.bf16 %v912, %v912
    %v917 = vpack.c.bf16 %v913, %v913
    %v918 = vpack.c.bf16 %v914, %v914
    %v919 = vld [vmem:[#allocation14] sm:$0xff]
    %v920 = vld [vmem:[#allocation14 + $0x8] sm:$0xff]
    %v921 = vld [vmem:[#allocation14 + $0x10] sm:$0xff]
    %v922 = vld [vmem:[#allocation14 + $0x18] sm:$0xff]
    %v923 = vld [vmem:[#allocation14 + $0x20] sm:$0xff]
    %v924 = vld [vmem:[#allocation14 + $0x28] sm:$0xff]
    %v925 = vld [vmem:[#allocation14 + $0x30] sm:$0xff]
    %v926 = vld [vmem:[#allocation14 + $0x38] sm:$0xff]
    %v927 = vld [vmem:[#allocation14 + $0x40] sm:$0xff]
    %v928 = vld [vmem:[#allocation14 + $0x48] sm:$0xff]
    %v929 = vld [vmem:[#allocation14 + $0x50] sm:$0xff]
    %v930 = vld [vmem:[#allocation14 + $0x58] sm:$0xff]
    %v931 = vld [vmem:[#allocation14 + $0x60] sm:$0xff]
    %v932 = vld [vmem:[#allocation14 + $0x68] sm:$0xff]
    %v933 = vld [vmem:[#allocation14 + $0x70] sm:$0xff]
    %v934 = vld [vmem:[#allocation14 + $0x78] sm:$0xff]
    %v935 = vld [vmem:[#allocation14 + $0x80] sm:$0xff]
    %v936 = vld [vmem:[#allocation14 + $0x88] sm:$0xff]
    %v937 = vld [vmem:[#allocation14 + $0x90] sm:$0xff]
    %v938 = vld [vmem:[#allocation14 + $0x98] sm:$0xff]
    %v939 = vld [vmem:[#allocation14 + $0xa0] sm:$0xff]
    %v940 = vld [vmem:[#allocation14 + $0xa8] sm:$0xff]
    %v941 = vld [vmem:[#allocation14 + $0xb0] sm:$0xff]
    %v942 = vld [vmem:[#allocation14 + $0xb8] sm:$0xff]
    %v943 = vld [vmem:[#allocation14 + $0xc0] sm:$0xff]
    %v944 = vld [vmem:[#allocation14 + $0xc8] sm:$0xff]
    %v945 = vld [vmem:[#allocation14 + $0xd0] sm:$0xff]
    %v946 = vld [vmem:[#allocation14 + $0xd8] sm:$0xff]
    %v947 = vld [vmem:[#allocation14 + $0xe0] sm:$0xff]
    %v948 = vld [vmem:[#allocation14 + $0xe8] sm:$0xff]
    %v949 = vld [vmem:[#allocation14 + $0xf0] sm:$0xff]
    %v950 = vld [vmem:[#allocation14 + $0xf8] sm:$0xff]
    %v951 = vld [vmem:[#allocation14 + $0x100] sm:$0xff]
    %v952 = vld [vmem:[#allocation14 + $0x108] sm:$0xff]
    %v953 = vld [vmem:[#allocation14 + $0x110] sm:$0xff]
    %v954 = vld [vmem:[#allocation14 + $0x118] sm:$0xff]
    %v955 = vld [vmem:[#allocation14 + $0x120] sm:$0xff]
    %v956 = vld [vmem:[#allocation14 + $0x128] sm:$0xff]
    %v957 = vld [vmem:[#allocation14 + $0x130] sm:$0xff]
    %v958 = vld [vmem:[#allocation14 + $0x138] sm:$0xff]
    %v959 = vld [vmem:[#allocation14 + $0x140] sm:$0xff]
    %v960 = vld [vmem:[#allocation14 + $0x148] sm:$0xff]
    %v961 = vld [vmem:[#allocation14 + $0x150] sm:$0xff]
    %v962 = vld [vmem:[#allocation14 + $0x158] sm:$0xff]
    %v963 = vld [vmem:[#allocation14 + $0x160] sm:$0xff]
    %v964 = vld [vmem:[#allocation14 + $0x168] sm:$0xff]
    %v965 = vld [vmem:[#allocation14 + $0x170] sm:$0xff]
    %v966 = vld [vmem:[#allocation14 + $0x178] sm:$0xff]
    %v967 = vld [vmem:[#allocation14 + $0x180] sm:$0xff]
    %v968 = vld [vmem:[#allocation14 + $0x188] sm:$0xff]
    %v969 = vld [vmem:[#allocation14 + $0x190] sm:$0xff]
    %v970 = vld [vmem:[#allocation14 + $0x198] sm:$0xff]
    %v971 = vld [vmem:[#allocation14 + $0x1a0] sm:$0xff]
    %v972 = vld [vmem:[#allocation14 + $0x1a8] sm:$0xff]
    %v973 = vld [vmem:[#allocation14 + $0x1b0] sm:$0xff]
    %v974 = vld [vmem:[#allocation14 + $0x1b8] sm:$0xff]
    %v975 = vld [vmem:[#allocation14 + $0x1c0] sm:$0xff]
    %v976 = vld [vmem:[#allocation14 + $0x1c8] sm:$0xff]
    %v977 = vld [vmem:[#allocation14 + $0x1d0] sm:$0xff]
    %v978 = vld [vmem:[#allocation14 + $0x1d8] sm:$0xff]
    %v979 = vld [vmem:[#allocation14 + $0x1e0] sm:$0xff]
    %v980 = vld [vmem:[#allocation14 + $0x1e8] sm:$0xff]
    %v981 = vld [vmem:[#allocation14 + $0x1f0] sm:$0xff]
    %v982 = vld [vmem:[#allocation14 + $0x1f8] sm:$0xff]
    %v983 = vld [vmem:[#allocation14 + $0x200] sm:$0xff]
    %v984 = vld [vmem:[#allocation14 + $0x208] sm:$0xff]
    %v985 = vld [vmem:[#allocation14 + $0x210] sm:$0xff]
    %v986 = vld [vmem:[#allocation14 + $0x218] sm:$0xff]
    %v987 = vld [vmem:[#allocation14 + $0x220] sm:$0xff]
    %v988 = vld [vmem:[#allocation14 + $0x228] sm:$0xff]
    %v989 = vld [vmem:[#allocation14 + $0x230] sm:$0xff]
    %v990 = vld [vmem:[#allocation14 + $0x238] sm:$0xff]
    %v991 = vld [vmem:[#allocation14 + $0x240] sm:$0xff]
    %v992 = vld [vmem:[#allocation14 + $0x248] sm:$0xff]
    %v993 = vld [vmem:[#allocation14 + $0x250] sm:$0xff]
    %v994 = vld [vmem:[#allocation14 + $0x258] sm:$0xff]
    %v995 = vld [vmem:[#allocation14 + $0x260] sm:$0xff]
    %v996 = vld [vmem:[#allocation14 + $0x268] sm:$0xff]
    %v997 = vld [vmem:[#allocation14 + $0x270] sm:$0xff]
    %v998 = vld [vmem:[#allocation14 + $0x278] sm:$0xff]
    %v999 = vld [vmem:[#allocation14 + $0x280] sm:$0xff]
    %v1000 = vld [vmem:[#allocation14 + $0x288] sm:$0xff]
    %v1001 = vld [vmem:[#allocation14 + $0x290] sm:$0xff]
    %v1002 = vld [vmem:[#allocation14 + $0x298] sm:$0xff]
    %v1003 = vld [vmem:[#allocation14 + $0x2a0] sm:$0xff]
    %v1004 = vld [vmem:[#allocation14 + $0x2a8] sm:$0xff]
    %v1005 = vld [vmem:[#allocation14 + $0x2b0] sm:$0xff]
    %v1006 = vld [vmem:[#allocation14 + $0x2b8] sm:$0xff]
    %v1007 = vld [vmem:[#allocation14 + $0x2c0] sm:$0xff]
    %v1008 = vld [vmem:[#allocation14 + $0x2c8] sm:$0xff]
    %v1009 = vld [vmem:[#allocation14 + $0x2d0] sm:$0xff]
    %v1010 = vld [vmem:[#allocation14 + $0x2d8] sm:$0xff]
    %v1011 = vld [vmem:[#allocation14 + $0x2e0] sm:$0xff]
    %v1012 = vld [vmem:[#allocation14 + $0x2e8] sm:$0xff]
    %v1013 = vld [vmem:[#allocation14 + $0x2f0] sm:$0xff]
    %v1014 = vld [vmem:[#allocation14 + $0x2f8] sm:$0xff]
    %v1015 = vld [vmem:[#allocation14 + $0x300] sm:$0xff]
    %v1016 = vld [vmem:[#allocation14 + $0x308] sm:$0xff]
    %v1017 = vld [vmem:[#allocation14 + $0x310] sm:$0xff]
    %v1018 = vld [vmem:[#allocation14 + $0x318] sm:$0xff]
    %v1019 = vld [vmem:[#allocation14 + $0x320] sm:$0xff]
    %v1020 = vld [vmem:[#allocation14 + $0x328] sm:$0xff]
    %v1021 = vld [vmem:[#allocation14 + $0x330] sm:$0xff]
    %v1022 = vld [vmem:[#allocation14 + $0x338] sm:$0xff]
    %v1023 = vld [vmem:[#allocation14 + $0x340] sm:$0xff]
    %v1024 = vld [vmem:[#allocation14 + $0x348] sm:$0xff]
    %v1025 = vld [vmem:[#allocation14 + $0x350] sm:$0xff]
    %v1026 = vld [vmem:[#allocation14 + $0x358] sm:$0xff]
    %v1027 = vld [vmem:[#allocation14 + $0x360] sm:$0xff]
    %v1028 = vld [vmem:[#allocation14 + $0x368] sm:$0xff]
    %v1029 = vld [vmem:[#allocation14 + $0x370] sm:$0xff]
    %v1030 = vld [vmem:[#allocation14 + $0x378] sm:$0xff]
    %v1031 = vld [vmem:[#allocation14 + $0x380] sm:$0xff]
    %v1032 = vld [vmem:[#allocation14 + $0x388] sm:$0xff]
    %v1033 = vld [vmem:[#allocation14 + $0x390] sm:$0xff]
    %v1034 = vld [vmem:[#allocation14 + $0x398] sm:$0xff]
    %v1035 = vld [vmem:[#allocation14 + $0x3a0] sm:$0xff]
    %v1036 = vld [vmem:[#allocation14 + $0x3a8] sm:$0xff]
    %v1037 = vld [vmem:[#allocation14 + $0x3b0] sm:$0xff]
    %v1038 = vld [vmem:[#allocation14 + $0x3b8] sm:$0xff]
    %v1039 = vld [vmem:[#allocation14 + $0x3c0] sm:$0xff]
    %v1040 = vld [vmem:[#allocation14 + $0x3c8] sm:$0xff]
    %v1041 = vld [vmem:[#allocation14 + $0x3d0] sm:$0xff]
    %v1042 = vld [vmem:[#allocation14 + $0x3d8] sm:$0xff]
    %v1043 = vld [vmem:[#allocation14 + $0x3e0] sm:$0xff]
    %v1044 = vld [vmem:[#allocation14 + $0x3e8] sm:$0xff]
    %v1045 = vld [vmem:[#allocation14 + $0x3f0] sm:$0xff]
    %v1046 = vld [vmem:[#allocation14 + $0x3f8] sm:$0xff]
    %v1047 = vld [vmem:[#allocation14 + $0x400] sm:$0xff]
    %v1048 = vld [vmem:[#allocation14 + $0x408] sm:$0xff]
    %v1049 = vld [vmem:[#allocation14 + $0x410] sm:$0xff]
    %v1050 = vld [vmem:[#allocation14 + $0x418] sm:$0xff]
    %v1051 = vld [vmem:[#allocation14 + $0x420] sm:$0xff]
    %v1052 = vld [vmem:[#allocation14 + $0x428] sm:$0xff]
    %v1053 = vld [vmem:[#allocation14 + $0x430] sm:$0xff]
    %v1054 = vld [vmem:[#allocation14 + $0x438] sm:$0xff]
    %v1055 = vld [vmem:[#allocation14 + $0x440] sm:$0xff]
    %v1056 = vld [vmem:[#allocation14 + $0x448] sm:$0xff]
    %v1057 = vld [vmem:[#allocation14 + $0x450] sm:$0xff]
    %v1058 = vld [vmem:[#allocation14 + $0x458] sm:$0xff]
    %v1059 = vld [vmem:[#allocation14 + $0x460] sm:$0xff]
    %v1060 = vld [vmem:[#allocation14 + $0x468] sm:$0xff]
    %v1061 = vld [vmem:[#allocation14 + $0x470] sm:$0xff]
    %v1062 = vld [vmem:[#allocation14 + $0x478] sm:$0xff]
    %v1063 = vld [vmem:[#allocation14 + $0x480] sm:$0xff]
    %v1064 = vld [vmem:[#allocation14 + $0x488] sm:$0xff]
    %v1065 = vld [vmem:[#allocation14 + $0x490] sm:$0xff]
    %v1066 = vld [vmem:[#allocation14 + $0x498] sm:$0xff]
    %v1067 = vld [vmem:[#allocation14 + $0x4a0] sm:$0xff]
    %v1068 = vld [vmem:[#allocation14 + $0x4a8] sm:$0xff]
    %v1069 = vld [vmem:[#allocation14 + $0x4b0] sm:$0xff]
    %v1070 = vld [vmem:[#allocation14 + $0x4b8] sm:$0xff]
    %v1071 = vld [vmem:[#allocation14 + $0x4c0] sm:$0xff]
    %v1072 = vld [vmem:[#allocation14 + $0x4c8] sm:$0xff]
    %v1073 = vld [vmem:[#allocation14 + $0x4d0] sm:$0xff]
    %v1074 = vld [vmem:[#allocation14 + $0x4d8] sm:$0xff]
    %v1075 = vld [vmem:[#allocation14 + $0x4e0] sm:$0xff]
    %v1076 = vld [vmem:[#allocation14 + $0x4e8] sm:$0xff]
    %v1077 = vld [vmem:[#allocation14 + $0x4f0] sm:$0xff]
    %v1078 = vld [vmem:[#allocation14 + $0x4f8] sm:$0xff]
    %v1079 = vld [vmem:[#allocation14 + $0x500] sm:$0xff]
    %v1080 = vld [vmem:[#allocation14 + $0x508] sm:$0xff]
    %v1081 = vld [vmem:[#allocation14 + $0x510] sm:$0xff]
    %v1082 = vld [vmem:[#allocation14 + $0x518] sm:$0xff]
    %v1083 = vld [vmem:[#allocation14 + $0x520] sm:$0xff]
    %v1084 = vld [vmem:[#allocation14 + $0x528] sm:$0xff]
    %v1085 = vld [vmem:[#allocation14 + $0x530] sm:$0xff]
    %v1086 = vld [vmem:[#allocation14 + $0x538] sm:$0xff]
    %v1087 = vld [vmem:[#allocation14 + $0x540] sm:$0xff]
    %v1088 = vld [vmem:[#allocation14 + $0x548] sm:$0xff]
    %v1089 = vld [vmem:[#allocation14 + $0x550] sm:$0xff]
    %v1090 = vld [vmem:[#allocation14 + $0x558] sm:$0xff]
    %v1091 = vld [vmem:[#allocation14 + $0x560] sm:$0xff]
    %v1092 = vld [vmem:[#allocation14 + $0x568] sm:$0xff]
    %v1093 = vld [vmem:[#allocation14 + $0x570] sm:$0xff]
    %v1094 = vld [vmem:[#allocation14 + $0x578] sm:$0xff]
    %v1095 = vld [vmem:[#allocation14 + $0x580] sm:$0xff]
    %v1096 = vld [vmem:[#allocation14 + $0x588] sm:$0xff]
    %v1097 = vld [vmem:[#allocation14 + $0x590] sm:$0xff]
    %v1098 = vld [vmem:[#allocation14 + $0x598] sm:$0xff]
    %v1099 = vld [vmem:[#allocation14 + $0x5a0] sm:$0xff]
    %v1100 = vld [vmem:[#allocation14 + $0x5a8] sm:$0xff]
    %v1101 = vld [vmem:[#allocation14 + $0x5b0] sm:$0xff]
    %v1102 = vld [vmem:[#allocation14 + $0x5b8] sm:$0xff]
    %v1103 = vld [vmem:[#allocation14 + $0x5c0] sm:$0xff]
    %v1104 = vld [vmem:[#allocation14 + $0x5c8] sm:$0xff]
    %v1105 = vld [vmem:[#allocation14 + $0x5d0] sm:$0xff]
    %v1106 = vld [vmem:[#allocation14 + $0x5d8] sm:$0xff]
    %v1107 = vld [vmem:[#allocation14 + $0x5e0] sm:$0xff]
    %v1108 = vld [vmem:[#allocation14 + $0x5e8] sm:$0xff]
    %v1109 = vld [vmem:[#allocation14 + $0x5f0] sm:$0xff]
    %v1110 = vld [vmem:[#allocation14 + $0x5f8] sm:$0xff]
    %v1111 = vld [vmem:[#allocation14 + $0x600] sm:$0xff]
    %v1112 = vld [vmem:[#allocation14 + $0x608] sm:$0xff]
    %v1113 = vld [vmem:[#allocation14 + $0x610] sm:$0xff]
    %v1114 = vld [vmem:[#allocation14 + $0x618] sm:$0xff]
    %v1115 = vld [vmem:[#allocation14 + $0x620] sm:$0xff]
    %v1116 = vld [vmem:[#allocation14 + $0x628] sm:$0xff]
    %v1117 = vld [vmem:[#allocation14 + $0x630] sm:$0xff]
    %v1118 = vld [vmem:[#allocation14 + $0x638] sm:$0xff]
    %v1119 = vld [vmem:[#allocation14 + $0x640] sm:$0xff]
    %v1120 = vld [vmem:[#allocation14 + $0x648] sm:$0xff]
    %v1121 = vld [vmem:[#allocation14 + $0x650] sm:$0xff]
    %v1122 = vld [vmem:[#allocation14 + $0x658] sm:$0xff]
    %v1123 = vld [vmem:[#allocation14 + $0x660] sm:$0xff]
    %v1124 = vld [vmem:[#allocation14 + $0x668] sm:$0xff]
    %v1125 = vld [vmem:[#allocation14 + $0x670] sm:$0xff]
    %v1126 = vld [vmem:[#allocation14 + $0x678] sm:$0xff]
    %v1127 = vld [vmem:[#allocation14 + $0x680] sm:$0xff]
    %v1128 = vld [vmem:[#allocation14 + $0x688] sm:$0xff]
    %v1129 = vld [vmem:[#allocation14 + $0x690] sm:$0xff]
    %v1130 = vld [vmem:[#allocation14 + $0x698] sm:$0xff]
    %v1131 = vld [vmem:[#allocation14 + $0x6a0] sm:$0xff]
    %v1132 = vld [vmem:[#allocation14 + $0x6a8] sm:$0xff]
    %v1133 = vld [vmem:[#allocation14 + $0x6b0] sm:$0xff]
    %v1134 = vld [vmem:[#allocation14 + $0x6b8] sm:$0xff]
    %v1135 = vld [vmem:[#allocation14 + $0x6c0] sm:$0xff]
    %v1136 = vld [vmem:[#allocation14 + $0x6c8] sm:$0xff]
    %v1137 = vld [vmem:[#allocation14 + $0x6d0] sm:$0xff]
    %v1138 = vld [vmem:[#allocation14 + $0x6d8] sm:$0xff]
    %v1139 = vld [vmem:[#allocation14 + $0x6e0] sm:$0xff]
    %v1140 = vld [vmem:[#allocation14 + $0x6e8] sm:$0xff]
    %v1141 = vld [vmem:[#allocation14 + $0x6f0] sm:$0xff]
    %v1142 = vld [vmem:[#allocation14 + $0x6f8] sm:$0xff]
    %v1143 = vld [vmem:[#allocation14 + $0x700] sm:$0xff]
    %v1144 = vld [vmem:[#allocation14 + $0x708] sm:$0xff]
    %v1145 = vld [vmem:[#allocation14 + $0x710] sm:$0xff]
    %v1146 = vld [vmem:[#allocation14 + $0x718] sm:$0xff]
    %v1147 = vld [vmem:[#allocation14 + $0x720] sm:$0xff]
    %v1148 = vld [vmem:[#allocation14 + $0x728] sm:$0xff]
    %v1149 = vld [vmem:[#allocation14 + $0x730] sm:$0xff]
    %v1150 = vld [vmem:[#allocation14 + $0x738] sm:$0xff]
    %v1151 = vld [vmem:[#allocation14 + $0x740] sm:$0xff]
    %v1152 = vld [vmem:[#allocation14 + $0x748] sm:$0xff]
    %v1153 = vld [vmem:[#allocation14 + $0x750] sm:$0xff]
    %v1154 = vld [vmem:[#allocation14 + $0x758] sm:$0xff]
    %v1155 = vld [vmem:[#allocation14 + $0x760] sm:$0xff]
    %v1156 = vld [vmem:[#allocation14 + $0x768] sm:$0xff]
    %v1157 = vld [vmem:[#allocation14 + $0x770] sm:$0xff]
    %v1158 = vld [vmem:[#allocation14 + $0x778] sm:$0xff]
    %v1159 = vld [vmem:[#allocation14 + $0x780] sm:$0xff]
    %v1160 = vld [vmem:[#allocation14 + $0x788] sm:$0xff]
    %v1161 = vld [vmem:[#allocation14 + $0x790] sm:$0xff]
    %v1162 = vld [vmem:[#allocation14 + $0x798] sm:$0xff]
    %v1163 = vld [vmem:[#allocation14 + $0x7a0] sm:$0xff]
    %v1164 = vld [vmem:[#allocation14 + $0x7a8] sm:$0xff]
    %v1165 = vld [vmem:[#allocation14 + $0x7b0] sm:$0xff]
    %v1166 = vld [vmem:[#allocation14 + $0x7b8] sm:$0xff]
    %v1167 = vld [vmem:[#allocation14 + $0x7c0] sm:$0xff]
    %v1168 = vld [vmem:[#allocation14 + $0x7c8] sm:$0xff]
    %v1169 = vld [vmem:[#allocation14 + $0x7d0] sm:$0xff]
    %v1170 = vld [vmem:[#allocation14 + $0x7d8] sm:$0xff]
    %v1171 = vld [vmem:[#allocation14 + $0x7e0] sm:$0xff]
    %v1172 = vld [vmem:[#allocation14 + $0x7e8] sm:$0xff]
    %v1173 = vld [vmem:[#allocation14 + $0x7f0] sm:$0xff]
    %v1174 = vld [vmem:[#allocation14 + $0x7f8] sm:$0xff]
    %v1175 = vld [vmem:[#allocation16] sm:$0xff]
    %v1177 = vlaneseq
    %v1178 = vshrl.u32 %v1177, 7
    %v1179 = vsub.s32 0, %v1178
    %v1180 = vrot.slane %v1175, %v1179
    %v1181 = vlaneseq
    %v1182 = vshrl.u32 %v1181, 7
    %v1183 = vsub.s32 1, %v1182
    %v1184 = vrot.slane %v1175, %v1183
    %v1185 = vlaneseq
    %v1186 = vshrl.u32 %v1185, 7
    %v1187 = vsub.s32 2, %v1186
    %v1188 = vrot.slane %v1175, %v1187
    %v1189 = vlaneseq
    %v1190 = vshrl.u32 %v1189, 7
    %v1191 = vsub.s32 3, %v1190
    %v1192 = vrot.slane %v1175, %v1191
    %v1193 = vlaneseq
    %v1194 = vshrl.u32 %v1193, 7
    %v1195 = vsub.s32 4, %v1194
    %v1196 = vrot.slane %v1175, %v1195
    %v1197 = vlaneseq
    %v1198 = vshrl.u32 %v1197, 7
    %v1199 = vsub.s32 5, %v1198
    %v1200 = vrot.slane %v1175, %v1199
    %v1201 = vlaneseq
    %v1202 = vshrl.u32 %v1201, 7
    %v1203 = vsub.s32 6, %v1202
    %v1204 = vrot.slane %v1175, %v1203
    %v1205 = vlaneseq
    %v1206 = vshrl.u32 %v1205, 7
    %v1207 = vsub.s32 7, %v1206
    %v1208 = vrot.slane %v1175, %v1207
    %v1473 = vunpack.c.l.b16 %v919
    %v1474 = vunpack.c.h.b16 %v919
    %v1475 = vunpack.c.l.b16 %v920
    %v1476 = vunpack.c.h.b16 %v920
    %v1477 = vunpack.c.l.b16 %v921
    %v1478 = vunpack.c.h.b16 %v921
    %v1479 = vunpack.c.l.b16 %v922
    %v1480 = vunpack.c.h.b16 %v922
    %v1481 = vunpack.c.l.b16 %v923
    %v1482 = vunpack.c.h.b16 %v923
    %v1483 = vunpack.c.l.b16 %v924
    %v1484 = vunpack.c.h.b16 %v924
    %v1485 = vunpack.c.l.b16 %v925
    %v1486 = vunpack.c.h.b16 %v925
    %v1487 = vunpack.c.l.b16 %v926
    %v1488 = vunpack.c.h.b16 %v926
    %v1489 = vunpack.c.l.b16 %v927
    %v1490 = vunpack.c.h.b16 %v927
    %v1491 = vunpack.c.l.b16 %v928
    %v1492 = vunpack.c.h.b16 %v928
    %v1493 = vunpack.c.l.b16 %v929
    %v1494 = vunpack.c.h.b16 %v929
    %v1495 = vunpack.c.l.b16 %v930
    %v1496 = vunpack.c.h.b16 %v930
    %v1497 = vunpack.c.l.b16 %v931
    %v1498 = vunpack.c.h.b16 %v931
    %v1499 = vunpack.c.l.b16 %v932
    %v1500 = vunpack.c.h.b16 %v932
    %v1501 = vunpack.c.l.b16 %v933
    %v1502 = vunpack.c.h.b16 %v933
    %v1503 = vunpack.c.l.b16 %v934
    %v1504 = vunpack.c.h.b16 %v934
    %v1505 = vunpack.c.l.b16 %v935
    %v1506 = vunpack.c.h.b16 %v935
    %v1507 = vunpack.c.l.b16 %v936
    %v1508 = vunpack.c.h.b16 %v936
    %v1509 = vunpack.c.l.b16 %v937
    %v1510 = vunpack.c.h.b16 %v937
    %v1511 = vunpack.c.l.b16 %v938
    %v1512 = vunpack.c.h.b16 %v938
    %v1513 = vunpack.c.l.b16 %v939
    %v1514 = vunpack.c.h.b16 %v939
    %v1515 = vunpack.c.l.b16 %v940
    %v1516 = vunpack.c.h.b16 %v940
    %v1517 = vunpack.c.l.b16 %v941
    %v1518 = vunpack.c.h.b16 %v941
    %v1519 = vunpack.c.l.b16 %v942
    %v1520 = vunpack.c.h.b16 %v942
    %v1521 = vunpack.c.l.b16 %v943
    %v1522 = vunpack.c.h.b16 %v943
    %v1523 = vunpack.c.l.b16 %v944
    %v1524 = vunpack.c.h.b16 %v944
    %v1525 = vunpack.c.l.b16 %v945
    %v1526 = vunpack.c.h.b16 %v945
    %v1527 = vunpack.c.l.b16 %v946
    %v1528 = vunpack.c.h.b16 %v946
    %v1529 = vunpack.c.l.b16 %v947
    %v1530 = vunpack.c.h.b16 %v947
    %v1531 = vunpack.c.l.b16 %v948
    %v1532 = vunpack.c.h.b16 %v948
    %v1533 = vunpack.c.l.b16 %v949
    %v1534 = vunpack.c.h.b16 %v949
    %v1535 = vunpack.c.l.b16 %v950
    %v1536 = vunpack.c.h.b16 %v950
    %v1537 = vunpack.c.l.b16 %v951
    %v1538 = vunpack.c.h.b16 %v951
    %v1539 = vunpack.c.l.b16 %v952
    %v1540 = vunpack.c.h.b16 %v952
    %v1541 = vunpack.c.l.b16 %v953
    %v1542 = vunpack.c.h.b16 %v953
    %v1543 = vunpack.c.l.b16 %v954
    %v1544 = vunpack.c.h.b16 %v954
    %v1545 = vunpack.c.l.b16 %v955
    %v1546 = vunpack.c.h.b16 %v955
    %v1547 = vunpack.c.l.b16 %v956
    %v1548 = vunpack.c.h.b16 %v956
    %v1549 = vunpack.c.l.b16 %v957
    %v1550 = vunpack.c.h.b16 %v957
    %v1551 = vunpack.c.l.b16 %v958
    %v1552 = vunpack.c.h.b16 %v958
    %v1553 = vunpack.c.l.b16 %v959
    %v1554 = vunpack.c.h.b16 %v959
    %v1555 = vunpack.c.l.b16 %v960
    %v1556 = vunpack.c.h.b16 %v960
    %v1557 = vunpack.c.l.b16 %v961
    %v1558 = vunpack.c.h.b16 %v961
    %v1559 = vunpack.c.l.b16 %v962
    %v1560 = vunpack.c.h.b16 %v962
    %v1561 = vunpack.c.l.b16 %v963
    %v1562 = vunpack.c.h.b16 %v963
    %v1563 = vunpack.c.l.b16 %v964
    %v1564 = vunpack.c.h.b16 %v964
    %v1565 = vunpack.c.l.b16 %v965
    %v1566 = vunpack.c.h.b16 %v965
    %v1567 = vunpack.c.l.b16 %v966
    %v1568 = vunpack.c.h.b16 %v966
    %v1569 = vunpack.c.l.b16 %v967
    %v1570 = vunpack.c.h.b16 %v967
    %v1571 = vunpack.c.l.b16 %v968
    %v1572 = vunpack.c.h.b16 %v968
    %v1573 = vunpack.c.l.b16 %v969
    %v1574 = vunpack.c.h.b16 %v969
    %v1575 = vunpack.c.l.b16 %v970
    %v1576 = vunpack.c.h.b16 %v970
    %v1577 = vunpack.c.l.b16 %v971
    %v1578 = vunpack.c.h.b16 %v971
    %v1579 = vunpack.c.l.b16 %v972
    %v1580 = vunpack.c.h.b16 %v972
    %v1581 = vunpack.c.l.b16 %v973
    %v1582 = vunpack.c.h.b16 %v973
    %v1583 = vunpack.c.l.b16 %v974
    %v1584 = vunpack.c.h.b16 %v974
    %v1585 = vunpack.c.l.b16 %v975
    %v1586 = vunpack.c.h.b16 %v975
    %v1587 = vunpack.c.l.b16 %v976
    %v1588 = vunpack.c.h.b16 %v976
    %v1589 = vunpack.c.l.b16 %v977
    %v1590 = vunpack.c.h.b16 %v977
    %v1591 = vunpack.c.l.b16 %v978
    %v1592 = vunpack.c.h.b16 %v978
    %v1593 = vunpack.c.l.b16 %v979
    %v1594 = vunpack.c.h.b16 %v979
    %v1595 = vunpack.c.l.b16 %v980
    %v1596 = vunpack.c.h.b16 %v980
    %v1597 = vunpack.c.l.b16 %v981
    %v1598 = vunpack.c.h.b16 %v981
    %v1599 = vunpack.c.l.b16 %v982
    %v1600 = vunpack.c.h.b16 %v982
    %v1601 = vunpack.c.l.b16 %v983
    %v1602 = vunpack.c.h.b16 %v983
    %v1603 = vunpack.c.l.b16 %v984
    %v1604 = vunpack.c.h.b16 %v984
    %v1605 = vunpack.c.l.b16 %v985
    %v1606 = vunpack.c.h.b16 %v985
    %v1607 = vunpack.c.l.b16 %v986
    %v1608 = vunpack.c.h.b16 %v986
    %v1609 = vunpack.c.l.b16 %v987
    %v1610 = vunpack.c.h.b16 %v987
    %v1611 = vunpack.c.l.b16 %v988
    %v1612 = vunpack.c.h.b16 %v988
    %v1613 = vunpack.c.l.b16 %v989
    %v1614 = vunpack.c.h.b16 %v989
    %v1615 = vunpack.c.l.b16 %v990
    %v1616 = vunpack.c.h.b16 %v990
    %v1617 = vunpack.c.l.b16 %v991
    %v1618 = vunpack.c.h.b16 %v991
    %v1619 = vunpack.c.l.b16 %v992
    %v1620 = vunpack.c.h.b16 %v992
    %v1621 = vunpack.c.l.b16 %v993
    %v1622 = vunpack.c.h.b16 %v993
    %v1623 = vunpack.c.l.b16 %v994
    %v1624 = vunpack.c.h.b16 %v994
    %v1625 = vunpack.c.l.b16 %v995
    %v1626 = vunpack.c.h.b16 %v995
    %v1627 = vunpack.c.l.b16 %v996
    %v1628 = vunpack.c.h.b16 %v996
    %v1629 = vunpack.c.l.b16 %v997
    %v1630 = vunpack.c.h.b16 %v997
    %v1631 = vunpack.c.l.b16 %v998
    %v1632 = vunpack.c.h.b16 %v998
    %v1633 = vunpack.c.l.b16 %v999
    %v1634 = vunpack.c.h.b16 %v999
    %v1635 = vunpack.c.l.b16 %v1000
    %v1636 = vunpack.c.h.b16 %v1000
    %v1637 = vunpack.c.l.b16 %v1001
    %v1638 = vunpack.c.h.b16 %v1001
    %v1639 = vunpack.c.l.b16 %v1002
    %v1640 = vunpack.c.h.b16 %v1002
    %v1641 = vunpack.c.l.b16 %v1003
    %v1642 = vunpack.c.h.b16 %v1003
    %v1643 = vunpack.c.l.b16 %v1004
    %v1644 = vunpack.c.h.b16 %v1004
    %v1645 = vunpack.c.l.b16 %v1005
    %v1646 = vunpack.c.h.b16 %v1005
    %v1647 = vunpack.c.l.b16 %v1006
    %v1648 = vunpack.c.h.b16 %v1006
    %v1649 = vunpack.c.l.b16 %v1007
    %v1650 = vunpack.c.h.b16 %v1007
    %v1651 = vunpack.c.l.b16 %v1008
    %v1652 = vunpack.c.h.b16 %v1008
    %v1653 = vunpack.c.l.b16 %v1009
    %v1654 = vunpack.c.h.b16 %v1009
    %v1655 = vunpack.c.l.b16 %v1010
    %v1656 = vunpack.c.h.b16 %v1010
    %v1657 = vunpack.c.l.b16 %v1011
    %v1658 = vunpack.c.h.b16 %v1011
    %v1659 = vunpack.c.l.b16 %v1012
    %v1660 = vunpack.c.h.b16 %v1012
    %v1661 = vunpack.c.l.b16 %v1013
    %v1662 = vunpack.c.h.b16 %v1013
    %v1663 = vunpack.c.l.b16 %v1014
    %v1664 = vunpack.c.h.b16 %v1014
    %v1665 = vunpack.c.l.b16 %v1015
    %v1666 = vunpack.c.h.b16 %v1015
    %v1667 = vunpack.c.l.b16 %v1016
    %v1668 = vunpack.c.h.b16 %v1016
    %v1669 = vunpack.c.l.b16 %v1017
    %v1670 = vunpack.c.h.b16 %v1017
    %v1671 = vunpack.c.l.b16 %v1018
    %v1672 = vunpack.c.h.b16 %v1018
    %v1673 = vunpack.c.l.b16 %v1019
    %v1674 = vunpack.c.h.b16 %v1019
    %v1675 = vunpack.c.l.b16 %v1020
    %v1676 = vunpack.c.h.b16 %v1020
    %v1677 = vunpack.c.l.b16 %v1021
    %v1678 = vunpack.c.h.b16 %v1021
    %v1679 = vunpack.c.l.b16 %v1022
    %v1680 = vunpack.c.h.b16 %v1022
    %v1681 = vunpack.c.l.b16 %v1023
    %v1682 = vunpack.c.h.b16 %v1023
    %v1683 = vunpack.c.l.b16 %v1024
    %v1684 = vunpack.c.h.b16 %v1024
    %v1685 = vunpack.c.l.b16 %v1025
    %v1686 = vunpack.c.h.b16 %v1025
    %v1687 = vunpack.c.l.b16 %v1026
    %v1688 = vunpack.c.h.b16 %v1026
    %v1689 = vunpack.c.l.b16 %v1027
    %v1690 = vunpack.c.h.b16 %v1027
    %v1691 = vunpack.c.l.b16 %v1028
    %v1692 = vunpack.c.h.b16 %v1028
    %v1693 = vunpack.c.l.b16 %v1029
    %v1694 = vunpack.c.h.b16 %v1029
    %v1695 = vunpack.c.l.b16 %v1030
    %v1696 = vunpack.c.h.b16 %v1030
    %v1697 = vunpack.c.l.b16 %v1031
    %v1698 = vunpack.c.h.b16 %v1031
    %v1699 = vunpack.c.l.b16 %v1032
    %v1700 = vunpack.c.h.b16 %v1032
    %v1701 = vunpack.c.l.b16 %v1033
    %v1702 = vunpack.c.h.b16 %v1033
    %v1703 = vunpack.c.l.b16 %v1034
    %v1704 = vunpack.c.h.b16 %v1034
    %v1705 = vunpack.c.l.b16 %v1035
    %v1706 = vunpack.c.h.b16 %v1035
    %v1707 = vunpack.c.l.b16 %v1036
    %v1708 = vunpack.c.h.b16 %v1036
    %v1709 = vunpack.c.l.b16 %v1037
    %v1710 = vunpack.c.h.b16 %v1037
    %v1711 = vunpack.c.l.b16 %v1038
    %v1712 = vunpack.c.h.b16 %v1038
    %v1713 = vunpack.c.l.b16 %v1039
    %v1714 = vunpack.c.h.b16 %v1039
    %v1715 = vunpack.c.l.b16 %v1040
    %v1716 = vunpack.c.h.b16 %v1040
    %v1717 = vunpack.c.l.b16 %v1041
    %v1718 = vunpack.c.h.b16 %v1041
    %v1719 = vunpack.c.l.b16 %v1042
    %v1720 = vunpack.c.h.b16 %v1042
    %v1721 = vunpack.c.l.b16 %v1043
    %v1722 = vunpack.c.h.b16 %v1043
    %v1723 = vunpack.c.l.b16 %v1044
    %v1724 = vunpack.c.h.b16 %v1044
    %v1725 = vunpack.c.l.b16 %v1045
    %v1726 = vunpack.c.h.b16 %v1045
    %v1727 = vunpack.c.l.b16 %v1046
    %v1728 = vunpack.c.h.b16 %v1046
    %v1729 = vunpack.c.l.b16 %v1047
    %v1730 = vunpack.c.h.b16 %v1047
    %v1731 = vunpack.c.l.b16 %v1048
    %v1732 = vunpack.c.h.b16 %v1048
    %v1733 = vunpack.c.l.b16 %v1049
    %v1734 = vunpack.c.h.b16 %v1049
    %v1735 = vunpack.c.l.b16 %v1050
    %v1736 = vunpack.c.h.b16 %v1050
    %v1737 = vunpack.c.l.b16 %v1051
    %v1738 = vunpack.c.h.b16 %v1051
    %v1739 = vunpack.c.l.b16 %v1052
    %v1740 = vunpack.c.h.b16 %v1052
    %v1741 = vunpack.c.l.b16 %v1053
    %v1742 = vunpack.c.h.b16 %v1053
    %v1743 = vunpack.c.l.b16 %v1054
    %v1744 = vunpack.c.h.b16 %v1054
    %v1745 = vunpack.c.l.b16 %v1055
    %v1746 = vunpack.c.h.b16 %v1055
    %v1747 = vunpack.c.l.b16 %v1056
    %v1748 = vunpack.c.h.b16 %v1056
    %v1749 = vunpack.c.l.b16 %v1057
    %v1750 = vunpack.c.h.b16 %v1057
    %v1751 = vunpack.c.l.b16 %v1058
    %v1752 = vunpack.c.h.b16 %v1058
    %v1753 = vunpack.c.l.b16 %v1059
    %v1754 = vunpack.c.h.b16 %v1059
    %v1755 = vunpack.c.l.b16 %v1060
    %v1756 = vunpack.c.h.b16 %v1060
    %v1757 = vunpack.c.l.b16 %v1061
    %v1758 = vunpack.c.h.b16 %v1061
    %v1759 = vunpack.c.l.b16 %v1062
    %v1760 = vunpack.c.h.b16 %v1062
    %v1761 = vunpack.c.l.b16 %v1063
    %v1762 = vunpack.c.h.b16 %v1063
    %v1763 = vunpack.c.l.b16 %v1064
    %v1764 = vunpack.c.h.b16 %v1064
    %v1765 = vunpack.c.l.b16 %v1065
    %v1766 = vunpack.c.h.b16 %v1065
    %v1767 = vunpack.c.l.b16 %v1066
    %v1768 = vunpack.c.h.b16 %v1066
    %v1769 = vunpack.c.l.b16 %v1067
    %v1770 = vunpack.c.h.b16 %v1067
    %v1771 = vunpack.c.l.b16 %v1068
    %v1772 = vunpack.c.h.b16 %v1068
    %v1773 = vunpack.c.l.b16 %v1069
    %v1774 = vunpack.c.h.b16 %v1069
    %v1775 = vunpack.c.l.b16 %v1070
    %v1776 = vunpack.c.h.b16 %v1070
    %v1777 = vunpack.c.l.b16 %v1071
    %v1778 = vunpack.c.h.b16 %v1071
    %v1779 = vunpack.c.l.b16 %v1072
    %v1780 = vunpack.c.h.b16 %v1072
    %v1781 = vunpack.c.l.b16 %v1073
    %v1782 = vunpack.c.h.b16 %v1073
    %v1783 = vunpack.c.l.b16 %v1074
    %v1784 = vunpack.c.h.b16 %v1074
    %v1785 = vunpack.c.l.b16 %v1075
    %v1786 = vunpack.c.h.b16 %v1075
    %v1787 = vunpack.c.l.b16 %v1076
    %v1788 = vunpack.c.h.b16 %v1076
    %v1789 = vunpack.c.l.b16 %v1077
    %v1790 = vunpack.c.h.b16 %v1077
    %v1791 = vunpack.c.l.b16 %v1078
    %v1792 = vunpack.c.h.b16 %v1078
    %v1793 = vunpack.c.l.b16 %v1079
    %v1794 = vunpack.c.h.b16 %v1079
    %v1795 = vunpack.c.l.b16 %v1080
    %v1796 = vunpack.c.h.b16 %v1080
    %v1797 = vunpack.c.l.b16 %v1081
    %v1798 = vunpack.c.h.b16 %v1081
    %v1799 = vunpack.c.l.b16 %v1082
    %v1800 = vunpack.c.h.b16 %v1082
    %v1801 = vunpack.c.l.b16 %v1083
    %v1802 = vunpack.c.h.b16 %v1083
    %v1803 = vunpack.c.l.b16 %v1084
    %v1804 = vunpack.c.h.b16 %v1084
    %v1805 = vunpack.c.l.b16 %v1085
    %v1806 = vunpack.c.h.b16 %v1085
    %v1807 = vunpack.c.l.b16 %v1086
    %v1808 = vunpack.c.h.b16 %v1086
    %v1809 = vunpack.c.l.b16 %v1087
    %v1810 = vunpack.c.h.b16 %v1087
    %v1811 = vunpack.c.l.b16 %v1088
    %v1812 = vunpack.c.h.b16 %v1088
    %v1813 = vunpack.c.l.b16 %v1089
    %v1814 = vunpack.c.h.b16 %v1089
    %v1815 = vunpack.c.l.b16 %v1090
    %v1816 = vunpack.c.h.b16 %v1090
    %v1817 = vunpack.c.l.b16 %v1091
    %v1818 = vunpack.c.h.b16 %v1091
    %v1819 = vunpack.c.l.b16 %v1092
    %v1820 = vunpack.c.h.b16 %v1092
    %v1821 = vunpack.c.l.b16 %v1093
    %v1822 = vunpack.c.h.b16 %v1093
    %v1823 = vunpack.c.l.b16 %v1094
    %v1824 = vunpack.c.h.b16 %v1094
    %v1825 = vunpack.c.l.b16 %v1095
    %v1826 = vunpack.c.h.b16 %v1095
    %v1827 = vunpack.c.l.b16 %v1096
    %v1828 = vunpack.c.h.b16 %v1096
    %v1829 = vunpack.c.l.b16 %v1097
    %v1830 = vunpack.c.h.b16 %v1097
    %v1831 = vunpack.c.l.b16 %v1098
    %v1832 = vunpack.c.h.b16 %v1098
    %v1833 = vunpack.c.l.b16 %v1099
    %v1834 = vunpack.c.h.b16 %v1099
    %v1835 = vunpack.c.l.b16 %v1100
    %v1836 = vunpack.c.h.b16 %v1100
    %v1837 = vunpack.c.l.b16 %v1101
    %v1838 = vunpack.c.h.b16 %v1101
    %v1839 = vunpack.c.l.b16 %v1102
    %v1840 = vunpack.c.h.b16 %v1102
    %v1841 = vunpack.c.l.b16 %v1103
    %v1842 = vunpack.c.h.b16 %v1103
    %v1843 = vunpack.c.l.b16 %v1104
    %v1844 = vunpack.c.h.b16 %v1104
    %v1845 = vunpack.c.l.b16 %v1105
    %v1846 = vunpack.c.h.b16 %v1105
    %v1847 = vunpack.c.l.b16 %v1106
    %v1848 = vunpack.c.h.b16 %v1106
    %v1849 = vunpack.c.l.b16 %v1107
    %v1850 = vunpack.c.h.b16 %v1107
    %v1851 = vunpack.c.l.b16 %v1108
    %v1852 = vunpack.c.h.b16 %v1108
    %v1853 = vunpack.c.l.b16 %v1109
    %v1854 = vunpack.c.h.b16 %v1109
    %v1855 = vunpack.c.l.b16 %v1110
    %v1856 = vunpack.c.h.b16 %v1110
    %v1857 = vunpack.c.l.b16 %v1111
    %v1858 = vunpack.c.h.b16 %v1111
    %v1859 = vunpack.c.l.b16 %v1112
    %v1860 = vunpack.c.h.b16 %v1112
    %v1861 = vunpack.c.l.b16 %v1113
    %v1862 = vunpack.c.h.b16 %v1113
    %v1863 = vunpack.c.l.b16 %v1114
    %v1864 = vunpack.c.h.b16 %v1114
    %v1865 = vunpack.c.l.b16 %v1115
    %v1866 = vunpack.c.h.b16 %v1115
    %v1867 = vunpack.c.l.b16 %v1116
    %v1868 = vunpack.c.h.b16 %v1116
    %v1869 = vunpack.c.l.b16 %v1117
    %v1870 = vunpack.c.h.b16 %v1117
    %v1871 = vunpack.c.l.b16 %v1118
    %v1872 = vunpack.c.h.b16 %v1118
    %v1873 = vunpack.c.l.b16 %v1119
    %v1874 = vunpack.c.h.b16 %v1119
    %v1875 = vunpack.c.l.b16 %v1120
    %v1876 = vunpack.c.h.b16 %v1120
    %v1877 = vunpack.c.l.b16 %v1121
    %v1878 = vunpack.c.h.b16 %v1121
    %v1879 = vunpack.c.l.b16 %v1122
    %v1880 = vunpack.c.h.b16 %v1122
    %v1881 = vunpack.c.l.b16 %v1123
    %v1882 = vunpack.c.h.b16 %v1123
    %v1883 = vunpack.c.l.b16 %v1124
    %v1884 = vunpack.c.h.b16 %v1124
    %v1885 = vunpack.c.l.b16 %v1125
    %v1886 = vunpack.c.h.b16 %v1125
    %v1887 = vunpack.c.l.b16 %v1126
    %v1888 = vunpack.c.h.b16 %v1126
    %v1889 = vunpack.c.l.b16 %v1127
    %v1890 = vunpack.c.h.b16 %v1127
    %v1891 = vunpack.c.l.b16 %v1128
    %v1892 = vunpack.c.h.b16 %v1128
    %v1893 = vunpack.c.l.b16 %v1129
    %v1894 = vunpack.c.h.b16 %v1129
    %v1895 = vunpack.c.l.b16 %v1130
    %v1896 = vunpack.c.h.b16 %v1130
    %v1897 = vunpack.c.l.b16 %v1131
    %v1898 = vunpack.c.h.b16 %v1131
    %v1899 = vunpack.c.l.b16 %v1132
    %v1900 = vunpack.c.h.b16 %v1132
    %v1901 = vunpack.c.l.b16 %v1133
    %v1902 = vunpack.c.h.b16 %v1133
    %v1903 = vunpack.c.l.b16 %v1134
    %v1904 = vunpack.c.h.b16 %v1134
    %v1905 = vunpack.c.l.b16 %v1135
    %v1906 = vunpack.c.h.b16 %v1135
    %v1907 = vunpack.c.l.b16 %v1136
    %v1908 = vunpack.c.h.b16 %v1136
    %v1909 = vunpack.c.l.b16 %v1137
    %v1910 = vunpack.c.h.b16 %v1137
    %v1911 = vunpack.c.l.b16 %v1138
    %v1912 = vunpack.c.h.b16 %v1138
    %v1913 = vunpack.c.l.b16 %v1139
    %v1914 = vunpack.c.h.b16 %v1139
    %v1915 = vunpack.c.l.b16 %v1140
    %v1916 = vunpack.c.h.b16 %v1140
    %v1917 = vunpack.c.l.b16 %v1141
    %v1918 = vunpack.c.h.b16 %v1141
    %v1919 = vunpack.c.l.b16 %v1142
    %v1920 = vunpack.c.h.b16 %v1142
    %v1921 = vunpack.c.l.b16 %v1143
    %v1922 = vunpack.c.h.b16 %v1143
    %v1923 = vunpack.c.l.b16 %v1144
    %v1924 = vunpack.c.h.b16 %v1144
    %v1925 = vunpack.c.l.b16 %v1145
    %v1926 = vunpack.c.h.b16 %v1145
    %v1927 = vunpack.c.l.b16 %v1146
    %v1928 = vunpack.c.h.b16 %v1146
    %v1929 = vunpack.c.l.b16 %v1147
    %v1930 = vunpack.c.h.b16 %v1147
    %v1931 = vunpack.c.l.b16 %v1148
    %v1932 = vunpack.c.h.b16 %v1148
    %v1933 = vunpack.c.l.b16 %v1149
    %v1934 = vunpack.c.h.b16 %v1149
    %v1935 = vunpack.c.l.b16 %v1150
    %v1936 = vunpack.c.h.b16 %v1150
    %v1937 = vunpack.c.l.b16 %v1151
    %v1938 = vunpack.c.h.b16 %v1151
    %v1939 = vunpack.c.l.b16 %v1152
    %v1940 = vunpack.c.h.b16 %v1152
    %v1941 = vunpack.c.l.b16 %v1153
    %v1942 = vunpack.c.h.b16 %v1153
    %v1943 = vunpack.c.l.b16 %v1154
    %v1944 = vunpack.c.h.b16 %v1154
    %v1945 = vunpack.c.l.b16 %v1155
    %v1946 = vunpack.c.h.b16 %v1155
    %v1947 = vunpack.c.l.b16 %v1156
    %v1948 = vunpack.c.h.b16 %v1156
    %v1949 = vunpack.c.l.b16 %v1157
    %v1950 = vunpack.c.h.b16 %v1157
    %v1951 = vunpack.c.l.b16 %v1158
    %v1952 = vunpack.c.h.b16 %v1158
    %v1953 = vunpack.c.l.b16 %v1159
    %v1954 = vunpack.c.h.b16 %v1159
    %v1955 = vunpack.c.l.b16 %v1160
    %v1956 = vunpack.c.h.b16 %v1160
    %v1957 = vunpack.c.l.b16 %v1161
    %v1958 = vunpack.c.h.b16 %v1161
    %v1959 = vunpack.c.l.b16 %v1162
    %v1960 = vunpack.c.h.b16 %v1162
    %v1961 = vunpack.c.l.b16 %v1163
    %v1962 = vunpack.c.h.b16 %v1163
    %v1963 = vunpack.c.l.b16 %v1164
    %v1964 = vunpack.c.h.b16 %v1164
    %v1965 = vunpack.c.l.b16 %v1165
    %v1966 = vunpack.c.h.b16 %v1165
    %v1967 = vunpack.c.l.b16 %v1166
    %v1968 = vunpack.c.h.b16 %v1166
    %v1969 = vunpack.c.l.b16 %v1167
    %v1970 = vunpack.c.h.b16 %v1167
    %v1971 = vunpack.c.l.b16 %v1168
    %v1972 = vunpack.c.h.b16 %v1168
    %v1973 = vunpack.c.l.b16 %v1169
    %v1974 = vunpack.c.h.b16 %v1169
    %v1975 = vunpack.c.l.b16 %v1170
    %v1976 = vunpack.c.h.b16 %v1170
    %v1977 = vunpack.c.l.b16 %v1171
    %v1978 = vunpack.c.h.b16 %v1171
    %v1979 = vunpack.c.l.b16 %v1172
    %v1980 = vunpack.c.h.b16 %v1172
    %v1981 = vunpack.c.l.b16 %v1173
    %v1982 = vunpack.c.h.b16 %v1173
    %v1983 = vunpack.c.l.b16 %v1174
    %v1984 = vunpack.c.h.b16 %v1174
    %v1985 = vpack.c.b16 %v1481, %v1473
    %v1986 = vpack.c.b16 %v1482, %v1474
    %v1987 = vpack.c.b16 %v1483, %v1475
    %v1988 = vpack.c.b16 %v1484, %v1476
    %v1989 = vpack.c.b16 %v1485, %v1477
    %v1990 = vpack.c.b16 %v1486, %v1478
    %v1991 = vpack.c.b16 %v1487, %v1479
    %v1992 = vpack.c.b16 %v1488, %v1480
    %v1993 = vpack.c.b16 %v1497, %v1489
    %v1994 = vpack.c.b16 %v1498, %v1490
    %v1995 = vpack.c.b16 %v1499, %v1491
    %v1996 = vpack.c.b16 %v1500, %v1492
    %v1997 = vpack.c.b16 %v1501, %v1493
    %v1998 = vpack.c.b16 %v1502, %v1494
    %v1999 = vpack.c.b16 %v1503, %v1495
    %v2000 = vpack.c.b16 %v1504, %v1496
    %v2001 = vpack.c.b16 %v1513, %v1505
    %v2002 = vpack.c.b16 %v1514, %v1506
    %v2003 = vpack.c.b16 %v1515, %v1507
    %v2004 = vpack.c.b16 %v1516, %v1508
    %v2005 = vpack.c.b16 %v1517, %v1509
    %v2006 = vpack.c.b16 %v1518, %v1510
    %v2007 = vpack.c.b16 %v1519, %v1511
    %v2008 = vpack.c.b16 %v1520, %v1512
    %v2009 = vpack.c.b16 %v1529, %v1521
    %v2010 = vpack.c.b16 %v1530, %v1522
    %v2011 = vpack.c.b16 %v1531, %v1523
    %v2012 = vpack.c.b16 %v1532, %v1524
    %v2013 = vpack.c.b16 %v1533, %v1525
    %v2014 = vpack.c.b16 %v1534, %v1526
    %v2015 = vpack.c.b16 %v1535, %v1527
    %v2016 = vpack.c.b16 %v1536, %v1528
    %v2017 = vpack.c.b16 %v1545, %v1537
    %v2018 = vpack.c.b16 %v1546, %v1538
    %v2019 = vpack.c.b16 %v1547, %v1539
    %v2020 = vpack.c.b16 %v1548, %v1540
    %v2021 = vpack.c.b16 %v1549, %v1541
    %v2022 = vpack.c.b16 %v1550, %v1542
    %v2023 = vpack.c.b16 %v1551, %v1543
    %v2024 = vpack.c.b16 %v1552, %v1544
    %v2025 = vpack.c.b16 %v1561, %v1553
    %v2026 = vpack.c.b16 %v1562, %v1554
    %v2027 = vpack.c.b16 %v1563, %v1555
    %v2028 = vpack.c.b16 %v1564, %v1556
    %v2029 = vpack.c.b16 %v1565, %v1557
    %v2030 = vpack.c.b16 %v1566, %v1558
    %v2031 = vpack.c.b16 %v1567, %v1559
    %v2032 = vpack.c.b16 %v1568, %v1560
    %v2033 = vpack.c.b16 %v1577, %v1569
    %v2034 = vpack.c.b16 %v1578, %v1570
    %v2035 = vpack.c.b16 %v1579, %v1571
    %v2036 = vpack.c.b16 %v1580, %v1572
    %v2037 = vpack.c.b16 %v1581, %v1573
    %v2038 = vpack.c.b16 %v1582, %v1574
    %v2039 = vpack.c.b16 %v1583, %v1575
    %v2040 = vpack.c.b16 %v1584, %v1576
    %v2041 = vpack.c.b16 %v1593, %v1585
    %v2042 = vpack.c.b16 %v1594, %v1586
    %v2043 = vpack.c.b16 %v1595, %v1587
    %v2044 = vpack.c.b16 %v1596, %v1588
    %v2045 = vpack.c.b16 %v1597, %v1589
    %v2046 = vpack.c.b16 %v1598, %v1590
    %v2047 = vpack.c.b16 %v1599, %v1591
    %v2048 = vpack.c.b16 %v1600, %v1592
    %v2049 = vpack.c.b16 %v1609, %v1601
    %v2050 = vpack.c.b16 %v1610, %v1602
    %v2051 = vpack.c.b16 %v1611, %v1603
    %v2052 = vpack.c.b16 %v1612, %v1604
    %v2053 = vpack.c.b16 %v1613, %v1605
    %v2054 = vpack.c.b16 %v1614, %v1606
    %v2055 = vpack.c.b16 %v1615, %v1607
    %v2056 = vpack.c.b16 %v1616, %v1608
    %v2057 = vpack.c.b16 %v1625, %v1617
    %v2058 = vpack.c.b16 %v1626, %v1618
    %v2059 = vpack.c.b16 %v1627, %v1619
    %v2060 = vpack.c.b16 %v1628, %v1620
    %v2061 = vpack.c.b16 %v1629, %v1621
    %v2062 = vpack.c.b16 %v1630, %v1622
    %v2063 = vpack.c.b16 %v1631, %v1623
    %v2064 = vpack.c.b16 %v1632, %v1624
    %v2065 = vpack.c.b16 %v1641, %v1633
    %v2066 = vpack.c.b16 %v1642, %v1634
    %v2067 = vpack.c.b16 %v1643, %v1635
    %v2068 = vpack.c.b16 %v1644, %v1636
    %v2069 = vpack.c.b16 %v1645, %v1637
    %v2070 = vpack.c.b16 %v1646, %v1638
    %v2071 = vpack.c.b16 %v1647, %v1639
    %v2072 = vpack.c.b16 %v1648, %v1640
    %v2073 = vpack.c.b16 %v1657, %v1649
    %v2074 = vpack.c.b16 %v1658, %v1650
    %v2075 = vpack.c.b16 %v1659, %v1651
    %v2076 = vpack.c.b16 %v1660, %v1652
    %v2077 = vpack.c.b16 %v1661, %v1653
    %v2078 = vpack.c.b16 %v1662, %v1654
    %v2079 = vpack.c.b16 %v1663, %v1655
    %v2080 = vpack.c.b16 %v1664, %v1656
    %v2081 = vpack.c.b16 %v1673, %v1665
    %v2082 = vpack.c.b16 %v1674, %v1666
    %v2083 = vpack.c.b16 %v1675, %v1667
    %v2084 = vpack.c.b16 %v1676, %v1668
    %v2085 = vpack.c.b16 %v1677, %v1669
    %v2086 = vpack.c.b16 %v1678, %v1670
    %v2087 = vpack.c.b16 %v1679, %v1671
    %v2088 = vpack.c.b16 %v1680, %v1672
    %v2089 = vpack.c.b16 %v1689, %v1681
    %v2090 = vpack.c.b16 %v1690, %v1682
    %v2091 = vpack.c.b16 %v1691, %v1683
    %v2092 = vpack.c.b16 %v1692, %v1684
    %v2093 = vpack.c.b16 %v1693, %v1685
    %v2094 = vpack.c.b16 %v1694, %v1686
    %v2095 = vpack.c.b16 %v1695, %v1687
    %v2096 = vpack.c.b16 %v1696, %v1688
    %v2097 = vpack.c.b16 %v1705, %v1697
    %v2098 = vpack.c.b16 %v1706, %v1698
    %v2099 = vpack.c.b16 %v1707, %v1699
    %v2100 = vpack.c.b16 %v1708, %v1700
    %v2101 = vpack.c.b16 %v1709, %v1701
    %v2102 = vpack.c.b16 %v1710, %v1702
    %v2103 = vpack.c.b16 %v1711, %v1703
    %v2104 = vpack.c.b16 %v1712, %v1704
    %v2105 = vpack.c.b16 %v1721, %v1713
    %v2106 = vpack.c.b16 %v1722, %v1714
    %v2107 = vpack.c.b16 %v1723, %v1715
    %v2108 = vpack.c.b16 %v1724, %v1716
    %v2109 = vpack.c.b16 %v1725, %v1717
    %v2110 = vpack.c.b16 %v1726, %v1718
    %v2111 = vpack.c.b16 %v1727, %v1719
    %v2112 = vpack.c.b16 %v1728, %v1720
    %v2113 = vpack.c.b16 %v1737, %v1729
    %v2114 = vpack.c.b16 %v1738, %v1730
    %v2115 = vpack.c.b16 %v1739, %v1731
    %v2116 = vpack.c.b16 %v1740, %v1732
    %v2117 = vpack.c.b16 %v1741, %v1733
    %v2118 = vpack.c.b16 %v1742, %v1734
    %v2119 = vpack.c.b16 %v1743, %v1735
    %v2120 = vpack.c.b16 %v1744, %v1736
    %v2121 = vpack.c.b16 %v1753, %v1745
    %v2122 = vpack.c.b16 %v1754, %v1746
    %v2123 = vpack.c.b16 %v1755, %v1747
    %v2124 = vpack.c.b16 %v1756, %v1748
    %v2125 = vpack.c.b16 %v1757, %v1749
    %v2126 = vpack.c.b16 %v1758, %v1750
    %v2127 = vpack.c.b16 %v1759, %v1751
    %v2128 = vpack.c.b16 %v1760, %v1752
    %v2129 = vpack.c.b16 %v1769, %v1761
    %v2130 = vpack.c.b16 %v1770, %v1762
    %v2131 = vpack.c.b16 %v1771, %v1763
    %v2132 = vpack.c.b16 %v1772, %v1764
    %v2133 = vpack.c.b16 %v1773, %v1765
    %v2134 = vpack.c.b16 %v1774, %v1766
    %v2135 = vpack.c.b16 %v1775, %v1767
    %v2136 = vpack.c.b16 %v1776, %v1768
    %v2137 = vpack.c.b16 %v1785, %v1777
    %v2138 = vpack.c.b16 %v1786, %v1778
    %v2139 = vpack.c.b16 %v1787, %v1779
    %v2140 = vpack.c.b16 %v1788, %v1780
    %v2141 = vpack.c.b16 %v1789, %v1781
    %v2142 = vpack.c.b16 %v1790, %v1782
    %v2143 = vpack.c.b16 %v1791, %v1783
    %v2144 = vpack.c.b16 %v1792, %v1784
    %v2145 = vpack.c.b16 %v1801, %v1793
    %v2146 = vpack.c.b16 %v1802, %v1794
    %v2147 = vpack.c.b16 %v1803, %v1795
    %v2148 = vpack.c.b16 %v1804, %v1796
    %v2149 = vpack.c.b16 %v1805, %v1797
    %v2150 = vpack.c.b16 %v1806, %v1798
    %v2151 = vpack.c.b16 %v1807, %v1799
    %v2152 = vpack.c.b16 %v1808, %v1800
    %v2153 = vpack.c.b16 %v1817, %v1809
    %v2154 = vpack.c.b16 %v1818, %v1810
    %v2155 = vpack.c.b16 %v1819, %v1811
    %v2156 = vpack.c.b16 %v1820, %v1812
    %v2157 = vpack.c.b16 %v1821, %v1813
    %v2158 = vpack.c.b16 %v1822, %v1814
    %v2159 = vpack.c.b16 %v1823, %v1815
    %v2160 = vpack.c.b16 %v1824, %v1816
    %v2161 = vpack.c.b16 %v1833, %v1825
    %v2162 = vpack.c.b16 %v1834, %v1826
    %v2163 = vpack.c.b16 %v1835, %v1827
    %v2164 = vpack.c.b16 %v1836, %v1828
    %v2165 = vpack.c.b16 %v1837, %v1829
    %v2166 = vpack.c.b16 %v1838, %v1830
    %v2167 = vpack.c.b16 %v1839, %v1831
    %v2168 = vpack.c.b16 %v1840, %v1832
    %v2169 = vpack.c.b16 %v1849, %v1841
    %v2170 = vpack.c.b16 %v1850, %v1842
    %v2171 = vpack.c.b16 %v1851, %v1843
    %v2172 = vpack.c.b16 %v1852, %v1844
    %v2173 = vpack.c.b16 %v1853, %v1845
    %v2174 = vpack.c.b16 %v1854, %v1846
    %v2175 = vpack.c.b16 %v1855, %v1847
    %v2176 = vpack.c.b16 %v1856, %v1848
    %v2177 = vpack.c.b16 %v1865, %v1857
    %v2178 = vpack.c.b16 %v1866, %v1858
    %v2179 = vpack.c.b16 %v1867, %v1859
    %v2180 = vpack.c.b16 %v1868, %v1860
    %v2181 = vpack.c.b16 %v1869, %v1861
    %v2182 = vpack.c.b16 %v1870, %v1862
    %v2183 = vpack.c.b16 %v1871, %v1863
    %v2184 = vpack.c.b16 %v1872, %v1864
    %v2185 = vpack.c.b16 %v1881, %v1873
    %v2186 = vpack.c.b16 %v1882, %v1874
    %v2187 = vpack.c.b16 %v1883, %v1875
    %v2188 = vpack.c.b16 %v1884, %v1876
    %v2189 = vpack.c.b16 %v1885, %v1877
    %v2190 = vpack.c.b16 %v1886, %v1878
    %v2191 = vpack.c.b16 %v1887, %v1879
    %v2192 = vpack.c.b16 %v1888, %v1880
    %v2193 = vpack.c.b16 %v1897, %v1889
    %v2194 = vpack.c.b16 %v1898, %v1890
    %v2195 = vpack.c.b16 %v1899, %v1891
    %v2196 = vpack.c.b16 %v1900, %v1892
    %v2197 = vpack.c.b16 %v1901, %v1893
    %v2198 = vpack.c.b16 %v1902, %v1894
    %v2199 = vpack.c.b16 %v1903, %v1895
    %v2200 = vpack.c.b16 %v1904, %v1896
    %v2201 = vpack.c.b16 %v1913, %v1905
    %v2202 = vpack.c.b16 %v1914, %v1906
    %v2203 = vpack.c.b16 %v1915, %v1907
    %v2204 = vpack.c.b16 %v1916, %v1908
    %v2205 = vpack.c.b16 %v1917, %v1909
    %v2206 = vpack.c.b16 %v1918, %v1910
    %v2207 = vpack.c.b16 %v1919, %v1911
    %v2208 = vpack.c.b16 %v1920, %v1912
    %v2209 = vpack.c.b16 %v1929, %v1921
    %v2210 = vpack.c.b16 %v1930, %v1922
    %v2211 = vpack.c.b16 %v1931, %v1923
    %v2212 = vpack.c.b16 %v1932, %v1924
    %v2213 = vpack.c.b16 %v1933, %v1925
    %v2214 = vpack.c.b16 %v1934, %v1926
    %v2215 = vpack.c.b16 %v1935, %v1927
    %v2216 = vpack.c.b16 %v1936, %v1928
    %v2217 = vpack.c.b16 %v1945, %v1937
    %v2218 = vpack.c.b16 %v1946, %v1938
    %v2219 = vpack.c.b16 %v1947, %v1939
    %v2220 = vpack.c.b16 %v1948, %v1940
    %v2221 = vpack.c.b16 %v1949, %v1941
    %v2222 = vpack.c.b16 %v1950, %v1942
    %v2223 = vpack.c.b16 %v1951, %v1943
    %v2224 = vpack.c.b16 %v1952, %v1944
    %v2225 = vpack.c.b16 %v1961, %v1953
    %v2226 = vpack.c.b16 %v1962, %v1954
    %v2227 = vpack.c.b16 %v1963, %v1955
    %v2228 = vpack.c.b16 %v1964, %v1956
    %v2229 = vpack.c.b16 %v1965, %v1957
    %v2230 = vpack.c.b16 %v1966, %v1958
    %v2231 = vpack.c.b16 %v1967, %v1959
    %v2232 = vpack.c.b16 %v1968, %v1960
    %v2233 = vpack.c.b16 %v1977, %v1969
    %v2234 = vpack.c.b16 %v1978, %v1970
    %v2235 = vpack.c.b16 %v1979, %v1971
    %v2236 = vpack.c.b16 %v1980, %v1972
    %v2237 = vpack.c.b16 %v1981, %v1973
    %v2238 = vpack.c.b16 %v1982, %v1974
    %v2239 = vpack.c.b16 %v1983, %v1975
    %v2240 = vpack.c.b16 %v1984, %v1976
    %2497 = vmatprep.subr.bf16.mxu0 %v2042
    %2498 = vmatpush1.bf16.msra.mxu0 %v2041
    %2499 = vmatprep.subr.bf16.mxu0 %v2034
    %2500 = vmatpush1.bf16.msra.mxu0 %v2033
    %2501 = vmatprep.subr.bf16.mxu0 %v2026
    %2502 = vmatpush1.bf16.msra.mxu0 %v2025
    %2503 = vmatprep.subr.bf16.mxu0 %v2018
    %2504 = vmatpush1.bf16.msra.mxu0 %v2017
    %2505 = vmatprep.subr.bf16.mxu0 %v2010
    %2506 = vmatpush1.bf16.msra.mxu0 %v2009
    %2507 = vmatprep.subr.bf16.mxu0 %v2002
    %2508 = vmatpush1.bf16.msra.mxu0 %v2001
    %2509 = vmatprep.subr.bf16.mxu0 %v1994
    %2510 = vmatpush1.bf16.msra.mxu0 %v1993
    %2511 = vmatprep.subr.bf16.mxu0 %v1986
    %2512 = vmatpush1.bf16.msra.mxu0 %v1985
    %2513 = vmatprep.subr.bf16.mxu0 %v2106
    %2514 = vmatpush2.bf16.msra.mxu0 %v2105
    %2515 = vmatprep.subr.bf16.mxu0 %v2098
    %2516 = vmatpush2.bf16.msra.mxu0 %v2097
    %2517 = vmatprep.subr.bf16.mxu0 %v2090
    %2518 = vmatpush2.bf16.msra.mxu0 %v2089
    %2519 = vmatprep.subr.bf16.mxu0 %v2082
    %2520 = vmatpush2.bf16.msra.mxu0 %v2081
    %2521 = vmatprep.subr.bf16.mxu0 %v2074
    %2522 = vmatpush2.bf16.msra.mxu0 %v2073
    %2523 = vmatprep.subr.bf16.mxu0 %v2066
    %2524 = vmatpush2.bf16.msra.mxu0 %v2065
    %2525 = vmatprep.subr.bf16.mxu0 %v2058
    %2526 = vmatpush2.bf16.msra.mxu0 %v2057
    %2527 = vmatprep.subr.bf16.mxu0 %v2050
    %2528 = vmatpush2.bf16.msra.mxu0 %v2049
    %2529 = vmatprep.mubr.bf16.mxu0 %v916
    %2530 = vmatmul.mubr.bf16.gmra.mxu0 %v915
    %v2531 = vpop.f32.mrf.mxu0
    %v2532 = vadd.f32 %v1180, %v2531
    %v2533 = vpop.f32.mrf.mxu0
    %v2534 = vadd.f32 %v1184, %v2533
    %v2535 = vpop.f32.mrf.mxu0
    %v2536 = vpop.f32.mrf.mxu0
    %2537 = vdwg.mxu0
    %2538 = vmatprep.subr.bf16.mxu0 %v2170
    %2539 = vmatpush1.bf16.msra.mxu0 %v2169
    %2540 = vmatprep.subr.bf16.mxu0 %v2162
    %2541 = vmatpush1.bf16.msra.mxu0 %v2161
    %2542 = vmatprep.subr.bf16.mxu0 %v2154
    %2543 = vmatpush1.bf16.msra.mxu0 %v2153
    %2544 = vmatprep.subr.bf16.mxu0 %v2146
    %2545 = vmatpush1.bf16.msra.mxu0 %v2145
    %2546 = vmatprep.subr.bf16.mxu0 %v2138
    %2547 = vmatpush1.bf16.msra.mxu0 %v2137
    %2548 = vmatprep.subr.bf16.mxu0 %v2130
    %2549 = vmatpush1.bf16.msra.mxu0 %v2129
    %2550 = vmatprep.subr.bf16.mxu0 %v2122
    %2551 = vmatpush1.bf16.msra.mxu0 %v2121
    %2552 = vmatprep.subr.bf16.mxu0 %v2114
    %2553 = vmatpush1.bf16.msra.mxu0 %v2113
    %2554 = vmatprep.subr.bf16.mxu0 %v2234
    %2555 = vmatpush2.bf16.msra.mxu0 %v2233
    %2556 = vmatprep.subr.bf16.mxu0 %v2226
    %2557 = vmatpush2.bf16.msra.mxu0 %v2225
    %2558 = vmatprep.subr.bf16.mxu0 %v2218
    %2559 = vmatpush2.bf16.msra.mxu0 %v2217
    %2560 = vmatprep.subr.bf16.mxu0 %v2210
    %2561 = vmatpush2.bf16.msra.mxu0 %v2209
    %2562 = vmatprep.subr.bf16.mxu0 %v2202
    %2563 = vmatpush2.bf16.msra.mxu0 %v2201
    %2564 = vmatprep.subr.bf16.mxu0 %v2194
    %2565 = vmatpush2.bf16.msra.mxu0 %v2193
    %2566 = vmatprep.subr.bf16.mxu0 %v2186
    %2567 = vmatpush2.bf16.msra.mxu0 %v2185
    %2568 = vmatprep.subr.bf16.mxu0 %v2178
    %2569 = vmatpush2.bf16.msra.mxu0 %v2177
    %2570 = vmatprep.mubr.bf16.mxu0 %v918
    %2571 = vmatmul.mubr.bf16.gmra.mxu0 %v917
    %v2572 = vpop.f32.mrf.mxu0
    %v2573 = vadd.f32 %v2532, %v2572
    %v2574 = vpop.f32.mrf.mxu0
    %v2575 = vadd.f32 %v2534, %v2574
    %v2576 = vpop.f32.mrf.mxu0
    %v2577 = vpop.f32.mrf.mxu0
    %2578 = vdwg.mxu0
    %2579 = vmatprep.subr.bf16.mxu0 %v2044
    %2580 = vmatpush1.bf16.msra.mxu0 %v2043
    %2581 = vmatprep.subr.bf16.mxu0 %v2036
    %2582 = vmatpush1.bf16.msra.mxu0 %v2035
    %2583 = vmatprep.subr.bf16.mxu0 %v2028
    %2584 = vmatpush1.bf16.msra.mxu0 %v2027
    %2585 = vmatprep.subr.bf16.mxu0 %v2020
    %2586 = vmatpush1.bf16.msra.mxu0 %v2019
    %2587 = vmatprep.subr.bf16.mxu0 %v2012
    %2588 = vmatpush1.bf16.msra.mxu0 %v2011
    %2589 = vmatprep.subr.bf16.mxu0 %v2004
    %2590 = vmatpush1.bf16.msra.mxu0 %v2003
    %2591 = vmatprep.subr.bf16.mxu0 %v1996
    %2592 = vmatpush1.bf16.msra.mxu0 %v1995
    %2593 = vmatprep.subr.bf16.mxu0 %v1988
    %2594 = vmatpush1.bf16.msra.mxu0 %v1987
    %2595 = vmatprep.subr.bf16.mxu0 %v2108
    %2596 = vmatpush2.bf16.msra.mxu0 %v2107
    %2597 = vmatprep.subr.bf16.mxu0 %v2100
    %2598 = vmatpush2.bf16.msra.mxu0 %v2099
    %2599 = vmatprep.subr.bf16.mxu0 %v2092
    %2600 = vmatpush2.bf16.msra.mxu0 %v2091
    %2601 = vmatprep.subr.bf16.mxu0 %v2084
    %2602 = vmatpush2.bf16.msra.mxu0 %v2083
    %2603 = vmatprep.subr.bf16.mxu0 %v2076
    %2604 = vmatpush2.bf16.msra.mxu0 %v2075
    %2605 = vmatprep.subr.bf16.mxu0 %v2068
    %2606 = vmatpush2.bf16.msra.mxu0 %v2067
    %2607 = vmatprep.subr.bf16.mxu0 %v2060
    %2608 = vmatpush2.bf16.msra.mxu0 %v2059
    %2609 = vmatprep.subr.bf16.mxu0 %v2052
    %2610 = vmatpush2.bf16.msra.mxu0 %v2051
    %2611 = vmatprep.mubr.bf16.mxu0 %v916
    %2612 = vmatmul.mubr.bf16.gmra.mxu0 %v915
    %v2613 = vpop.f32.mrf.mxu0
    %v2614 = vadd.f32 %v1188, %v2613
    %v2615 = vpop.f32.mrf.mxu0
    %v2616 = vadd.f32 %v1192, %v2615
    %v2617 = vpop.f32.mrf.mxu0
    %v2618 = vpop.f32.mrf.mxu0
    %2619 = vdwg.mxu0
    %2620 = vmatprep.subr.bf16.mxu0 %v2172
    %2621 = vmatpush1.bf16.msra.mxu0 %v2171
    %2622 = vmatprep.subr.bf16.mxu0 %v2164
    %2623 = vmatpush1.bf16.msra.mxu0 %v2163
    %2624 = vmatprep.subr.bf16.mxu0 %v2156
    %2625 = vmatpush1.bf16.msra.mxu0 %v2155
    %2626 = vmatprep.subr.bf16.mxu0 %v2148
    %2627 = vmatpush1.bf16.msra.mxu0 %v2147
    %2628 = vmatprep.subr.bf16.mxu0 %v2140
    %2629 = vmatpush1.bf16.msra.mxu0 %v2139
    %2630 = vmatprep.subr.bf16.mxu0 %v2132
    %2631 = vmatpush1.bf16.msra.mxu0 %v2131
    %2632 = vmatprep.subr.bf16.mxu0 %v2124
    %2633 = vmatpush1.bf16.msra.mxu0 %v2123
    %2634 = vmatprep.subr.bf16.mxu0 %v2116
    %2635 = vmatpush1.bf16.msra.mxu0 %v2115
    %2636 = vmatprep.subr.bf16.mxu0 %v2236
    %2637 = vmatpush2.bf16.msra.mxu0 %v2235
    %2638 = vmatprep.subr.bf16.mxu0 %v2228
    %2639 = vmatpush2.bf16.msra.mxu0 %v2227
    %2640 = vmatprep.subr.bf16.mxu0 %v2220
    %2641 = vmatpush2.bf16.msra.mxu0 %v2219
    %2642 = vmatprep.subr.bf16.mxu0 %v2212
    %2643 = vmatpush2.bf16.msra.mxu0 %v2211
    %2644 = vmatprep.subr.bf16.mxu0 %v2204
    %2645 = vmatpush2.bf16.msra.mxu0 %v2203
    %2646 = vmatprep.subr.bf16.mxu0 %v2196
    %2647 = vmatpush2.bf16.msra.mxu0 %v2195
    %2648 = vmatprep.subr.bf16.mxu0 %v2188
    %2649 = vmatpush2.bf16.msra.mxu0 %v2187
    %2650 = vmatprep.subr.bf16.mxu0 %v2180
    %2651 = vmatpush2.bf16.msra.mxu0 %v2179
    %2652 = vmatprep.mubr.bf16.mxu0 %v918
    %2653 = vmatmul.mubr.bf16.gmra.mxu0 %v917
    %v2654 = vpop.f32.mrf.mxu0
    %v2655 = vadd.f32 %v2614, %v2654
    %v2656 = vpop.f32.mrf.mxu0
    %v2657 = vadd.f32 %v2616, %v2656
    %v2658 = vpop.f32.mrf.mxu0
    %v2659 = vpop.f32.mrf.mxu0
    %2660 = vdwg.mxu0
    %2661 = vmatprep.subr.bf16.mxu0 %v2046
    %2662 = vmatpush1.bf16.msra.mxu0 %v2045
    %2663 = vmatprep.subr.bf16.mxu0 %v2038
    %2664 = vmatpush1.bf16.msra.mxu0 %v2037
    %2665 = vmatprep.subr.bf16.mxu0 %v2030
    %2666 = vmatpush1.bf16.msra.mxu0 %v2029
    %2667 = vmatprep.subr.bf16.mxu0 %v2022
    %2668 = vmatpush1.bf16.msra.mxu0 %v2021
    %2669 = vmatprep.subr.bf16.mxu0 %v2014
    %2670 = vmatpush1.bf16.msra.mxu0 %v2013
    %2671 = vmatprep.subr.bf16.mxu0 %v2006
    %2672 = vmatpush1.bf16.msra.mxu0 %v2005
    %2673 = vmatprep.subr.bf16.mxu0 %v1998
    %2674 = vmatpush1.bf16.msra.mxu0 %v1997
    %2675 = vmatprep.subr.bf16.mxu0 %v1990
    %2676 = vmatpush1.bf16.msra.mxu0 %v1989
    %2677 = vmatprep.subr.bf16.mxu0 %v2110
    %2678 = vmatpush2.bf16.msra.mxu0 %v2109
    %2679 = vmatprep.subr.bf16.mxu0 %v2102
    %2680 = vmatpush2.bf16.msra.mxu0 %v2101
    %2681 = vmatprep.subr.bf16.mxu0 %v2094
    %2682 = vmatpush2.bf16.msra.mxu0 %v2093
    %2683 = vmatprep.subr.bf16.mxu0 %v2086
    %2684 = vmatpush2.bf16.msra.mxu0 %v2085
    %2685 = vmatprep.subr.bf16.mxu0 %v2078
    %2686 = vmatpush2.bf16.msra.mxu0 %v2077
    %2687 = vmatprep.subr.bf16.mxu0 %v2070
    %2688 = vmatpush2.bf16.msra.mxu0 %v2069
    %2689 = vmatprep.subr.bf16.mxu0 %v2062
    %2690 = vmatpush2.bf16.msra.mxu0 %v2061
    %2691 = vmatprep.subr.bf16.mxu0 %v2054
    %2692 = vmatpush2.bf16.msra.mxu0 %v2053
    %2693 = vmatprep.mubr.bf16.mxu0 %v916
    %2694 = vmatmul.mubr.bf16.gmra.mxu0 %v915
    %v2695 = vpop.f32.mrf.mxu0
    %v2696 = vadd.f32 %v1196, %v2695
    %v2697 = vpop.f32.mrf.mxu0
    %v2698 = vadd.f32 %v1200, %v2697
    %v2699 = vpop.f32.mrf.mxu0
    %v2700 = vpop.f32.mrf.mxu0
    %2701 = vdwg.mxu0
    %2702 = vmatprep.subr.bf16.mxu0 %v2174
    %2703 = vmatpush1.bf16.msra.mxu0 %v2173
    %2704 = vmatprep.subr.bf16.mxu0 %v2166
    %2705 = vmatpush1.bf16.msra.mxu0 %v2165
    %2706 = vmatprep.subr.bf16.mxu0 %v2158
    %2707 = vmatpush1.bf16.msra.mxu0 %v2157
    %2708 = vmatprep.subr.bf16.mxu0 %v2150
    %2709 = vmatpush1.bf16.msra.mxu0 %v2149
    %2710 = vmatprep.subr.bf16.mxu0 %v2142
    %2711 = vmatpush1.bf16.msra.mxu0 %v2141
    %2712 = vmatprep.subr.bf16.mxu0 %v2134
    %2713 = vmatpush1.bf16.msra.mxu0 %v2133
    %2714 = vmatprep.subr.bf16.mxu0 %v2126
    %2715 = vmatpush1.bf16.msra.mxu0 %v2125
    %2716 = vmatprep.subr.bf16.mxu0 %v2118
    %2717 = vmatpush1.bf16.msra.mxu0 %v2117
    %2718 = vmatprep.subr.bf16.mxu0 %v2238
    %2719 = vmatpush2.bf16.msra.mxu0 %v2237
    %2720 = vmatprep.subr.bf16.mxu0 %v2230
    %2721 = vmatpush2.bf16.msra.mxu0 %v2229
    %2722 = vmatprep.subr.bf16.mxu0 %v2222
    %2723 = vmatpush2.bf16.msra.mxu0 %v2221
    %2724 = vmatprep.subr.bf16.mxu0 %v2214
    %2725 = vmatpush2.bf16.msra.mxu0 %v2213
    %2726 = vmatprep.subr.bf16.mxu0 %v2206
    %2727 = vmatpush2.bf16.msra.mxu0 %v2205
    %2728 = vmatprep.subr.bf16.mxu0 %v2198
    %2729 = vmatpush2.bf16.msra.mxu0 %v2197
    %2730 = vmatprep.subr.bf16.mxu0 %v2190
    %2731 = vmatpush2.bf16.msra.mxu0 %v2189
    %2732 = vmatprep.subr.bf16.mxu0 %v2182
    %2733 = vmatpush2.bf16.msra.mxu0 %v2181
    %2734 = vmatprep.mubr.bf16.mxu0 %v918
    %2735 = vmatmul.mubr.bf16.gmra.mxu0 %v917
    %v2736 = vpop.f32.mrf.mxu0
    %v2737 = vadd.f32 %v2696, %v2736
    %v2738 = vpop.f32.mrf.mxu0
    %v2739 = vadd.f32 %v2698, %v2738
    %v2740 = vpop.f32.mrf.mxu0
    %v2741 = vpop.f32.mrf.mxu0
    %2742 = vdwg.mxu0
    %2743 = vmatprep.subr.bf16.mxu0 %v2048
    %2744 = vmatpush1.bf16.msra.mxu0 %v2047
    %2745 = vmatprep.subr.bf16.mxu0 %v2040
    %2746 = vmatpush1.bf16.msra.mxu0 %v2039
    %2747 = vmatprep.subr.bf16.mxu0 %v2032
    %2748 = vmatpush1.bf16.msra.mxu0 %v2031
    %2749 = vmatprep.subr.bf16.mxu0 %v2024
    %2750 = vmatpush1.bf16.msra.mxu0 %v2023
    %2751 = vmatprep.subr.bf16.mxu0 %v2016
    %2752 = vmatpush1.bf16.msra.mxu0 %v2015
    %2753 = vmatprep.subr.bf16.mxu0 %v2008
    %2754 = vmatpush1.bf16.msra.mxu0 %v2007
    %2755 = vmatprep.subr.bf16.mxu0 %v2000
    %2756 = vmatpush1.bf16.msra.mxu0 %v1999
    %2757 = vmatprep.subr.bf16.mxu0 %v1992
    %2758 = vmatpush1.bf16.msra.mxu0 %v1991
    %2759 = vmatprep.subr.bf16.mxu0 %v2112
    %2760 = vmatpush2.bf16.msra.mxu0 %v2111
    %2761 = vmatprep.subr.bf16.mxu0 %v2104
    %2762 = vmatpush2.bf16.msra.mxu0 %v2103
    %2763 = vmatprep.subr.bf16.mxu0 %v2096
    %2764 = vmatpush2.bf16.msra.mxu0 %v2095
    %2765 = vmatprep.subr.bf16.mxu0 %v2088
    %2766 = vmatpush2.bf16.msra.mxu0 %v2087
    %2767 = vmatprep.subr.bf16.mxu0 %v2080
    %2768 = vmatpush2.bf16.msra.mxu0 %v2079
    %2769 = vmatprep.subr.bf16.mxu0 %v2072
    %2770 = vmatpush2.bf16.msra.mxu0 %v2071
    %2771 = vmatprep.subr.bf16.mxu0 %v2064
    %2772 = vmatpush2.bf16.msra.mxu0 %v2063
    %2773 = vmatprep.subr.bf16.mxu0 %v2056
    %2774 = vmatpush2.bf16.msra.mxu0 %v2055
    %2775 = vmatprep.mubr.bf16.mxu0 %v916
    %2776 = vmatmul.mubr.bf16.gmra.mxu0 %v915
    %v2777 = vpop.f32.mrf.mxu0
    %v2778 = vadd.f32 %v1204, %v2777
    %v2779 = vpop.f32.mrf.mxu0
    %v2780 = vadd.f32 %v1208, %v2779
    %v2781 = vpop.f32.mrf.mxu0
    %v2782 = vpop.f32.mrf.mxu0
    %2783 = vdwg.mxu0
    %2784 = vmatprep.subr.bf16.mxu0 %v2176
    %2785 = vmatpush1.bf16.msra.mxu0 %v2175
    %2786 = vmatprep.subr.bf16.mxu0 %v2168
    %2787 = vmatpush1.bf16.msra.mxu0 %v2167
    %2788 = vmatprep.subr.bf16.mxu0 %v2160
    %2789 = vmatpush1.bf16.msra.mxu0 %v2159
    %2790 = vmatprep.subr.bf16.mxu0 %v2152
    %2791 = vmatpush1.bf16.msra.mxu0 %v2151
    %2792 = vmatprep.subr.bf16.mxu0 %v2144
    %2793 = vmatpush1.bf16.msra.mxu0 %v2143
    %2794 = vmatprep.subr.bf16.mxu0 %v2136
    %2795 = vmatpush1.bf16.msra.mxu0 %v2135
    %2796 = vmatprep.subr.bf16.mxu0 %v2128
    %2797 = vmatpush1.bf16.msra.mxu0 %v2127
    %2798 = vmatprep.subr.bf16.mxu0 %v2120
    %2799 = vmatpush1.bf16.msra.mxu0 %v2119
    %2800 = vmatprep.subr.bf16.mxu0 %v2240
    %2801 = vmatpush2.bf16.msra.mxu0 %v2239
    %2802 = vmatprep.subr.bf16.mxu0 %v2232
    %2803 = vmatpush2.bf16.msra.mxu0 %v2231
    %2804 = vmatprep.subr.bf16.mxu0 %v2224
    %2805 = vmatpush2.bf16.msra.mxu0 %v2223
    %2806 = vmatprep.subr.bf16.mxu0 %v2216
    %2807 = vmatpush2.bf16.msra.mxu0 %v2215
    %2808 = vmatprep.subr.bf16.mxu0 %v2208
    %2809 = vmatpush2.bf16.msra.mxu0 %v2207
    %2810 = vmatprep.subr.bf16.mxu0 %v2200
    %2811 = vmatpush2.bf16.msra.mxu0 %v2199
    %2812 = vmatprep.subr.bf16.mxu0 %v2192
    %2813 = vmatpush2.bf16.msra.mxu0 %v2191
    %2814 = vmatprep.subr.bf16.mxu0 %v2184
    %2815 = vmatpush2.bf16.msra.mxu0 %v2183
    %2816 = vmatprep.mubr.bf16.mxu0 %v918
    %2817 = vmatmul.mubr.bf16.gmra.mxu0 %v917
    %v2818 = vpop.f32.mrf.mxu0
    %v2819 = vadd.f32 %v2778, %v2818
    %v2820 = vpop.f32.mrf.mxu0
    %v2821 = vadd.f32 %v2780, %v2820
    %v2822 = vpop.f32.mrf.mxu0
    %v2823 = vpop.f32.mrf.mxu0
    %2824 = vdwg.mxu0
    %v2825 = vmul.f32 %v2573, 0.2
    %v2826 = vmul.f32 %v2575, 0.2
    %v2827 = vmul.f32 %v2655, 0.2
    %v2828 = vmul.f32 %v2657, 0.2
    %v2829 = vmul.f32 %v2737, 0.2
    %v2830 = vmul.f32 %v2739, 0.2
    %v2831 = vmul.f32 %v2819, 0.2
    %v2832 = vmul.f32 %v2821, 0.2
    %v2833 = vmax.f32 %v2573, %v2825
    %v2834 = vmax.f32 %v2575, %v2826
    %v2835 = vmax.f32 %v2655, %v2827
    %v2836 = vmax.f32 %v2657, %v2828
    %v2837 = vmax.f32 %v2737, %v2829
    %v2838 = vmax.f32 %v2739, %v2830
    %v2839 = vmax.f32 %v2819, %v2831
    %v2840 = vmax.f32 %v2821, %v2832
    %v2841 = vpack.c.bf16 %v2833, %v2833
    %v2842 = vpack.c.bf16 %v2834, %v2834
    %v2843 = vpack.c.bf16 %v2835, %v2835
    %v2844 = vpack.c.bf16 %v2836, %v2836
    %v2845 = vpack.c.bf16 %v2837, %v2837
    %v2846 = vpack.c.bf16 %v2838, %v2838
    %v2847 = vpack.c.bf16 %v2839, %v2839
    %v2848 = vpack.c.bf16 %v2840, %v2840
    %v2849 = vld [vmem:[#allocation17] sm:$0xff]
    %v2850 = vld [vmem:[#allocation17 + $0x8] sm:$0xff]
    %v2851 = vld [vmem:[#allocation17 + $0x10] sm:$0xff]
    %v2852 = vld [vmem:[#allocation17 + $0x18] sm:$0xf]
    %v2853 = vld [vmem:[#allocation17 + $0x1c] sm:$0xff]
    %v2854 = vld [vmem:[#allocation17 + $0x24] sm:$0xff]
    %v2855 = vld [vmem:[#allocation17 + $0x2c] sm:$0xff]
    %v2856 = vld [vmem:[#allocation17 + $0x34] sm:$0xf]
    %v2857 = vld [vmem:[#allocation17 + $0x38] sm:$0xff]
    %v2858 = vld [vmem:[#allocation17 + $0x40] sm:$0xff]
    %v2859 = vld [vmem:[#allocation17 + $0x48] sm:$0xff]
    %v2860 = vld [vmem:[#allocation17 + $0x50] sm:$0xf]
    %v2861 = vld [vmem:[#allocation17 + $0x54] sm:$0xff]
    %v2862 = vld [vmem:[#allocation17 + $0x5c] sm:$0xff]
    %v2863 = vld [vmem:[#allocation17 + $0x64] sm:$0xff]
    %v2864 = vld [vmem:[#allocation17 + $0x6c] sm:$0xf]
    %v2865 = vld [vmem:[#allocation17 + $0x70] sm:$0xff]
    %v2866 = vld [vmem:[#allocation17 + $0x78] sm:$0xff]
    %v2867 = vld [vmem:[#allocation17 + $0x80] sm:$0xff]
    %v2868 = vld [vmem:[#allocation17 + $0x88] sm:$0xf]
    %v2869 = vld [vmem:[#allocation17 + $0x8c] sm:$0xff]
    %v2870 = vld [vmem:[#allocation17 + $0x94] sm:$0xff]
    %v2871 = vld [vmem:[#allocation17 + $0x9c] sm:$0xff]
    %v2872 = vld [vmem:[#allocation17 + $0xa4] sm:$0xf]
    %v2873 = vld [vmem:[#allocation17 + $0xa8] sm:$0xff]
    %v2874 = vld [vmem:[#allocation17 + $0xb0] sm:$0xff]
    %v2875 = vld [vmem:[#allocation17 + $0xb8] sm:$0xff]
    %v2876 = vld [vmem:[#allocation17 + $0xc0] sm:$0xf]
    %v2877 = vld [vmem:[#allocation17 + $0xc4] sm:$0xff]
    %v2878 = vld [vmem:[#allocation17 + $0xcc] sm:$0xff]
    %v2879 = vld [vmem:[#allocation17 + $0xd4] sm:$0xff]
    %v2880 = vld [vmem:[#allocation17 + $0xdc] sm:$0xf]
    %v2881 = vld [vmem:[#allocation17 + $0xe0] sm:$0xff]
    %v2882 = vld [vmem:[#allocation17 + $0xe8] sm:$0xff]
    %v2883 = vld [vmem:[#allocation17 + $0xf0] sm:$0xff]
    %v2884 = vld [vmem:[#allocation17 + $0xf8] sm:$0xf]
    %v2885 = vld [vmem:[#allocation17 + $0xfc] sm:$0xff]
    %v2886 = vld [vmem:[#allocation17 + $0x104] sm:$0xff]
    %v2887 = vld [vmem:[#allocation17 + $0x10c] sm:$0xff]
    %v2888 = vld [vmem:[#allocation17 + $0x114] sm:$0xf]
    %v2889 = vld [vmem:[#allocation17 + $0x118] sm:$0xff]
    %v2890 = vld [vmem:[#allocation17 + $0x120] sm:$0xff]
    %v2891 = vld [vmem:[#allocation17 + $0x128] sm:$0xff]
    %v2892 = vld [vmem:[#allocation17 + $0x130] sm:$0xf]
    %v2893 = vld [vmem:[#allocation17 + $0x134] sm:$0xff]
    %v2894 = vld [vmem:[#allocation17 + $0x13c] sm:$0xff]
    %v2895 = vld [vmem:[#allocation17 + $0x144] sm:$0xff]
    %v2896 = vld [vmem:[#allocation17 + $0x14c] sm:$0xf]
    %v2897 = vld [vmem:[#allocation17 + $0x150] sm:$0xff]
    %v2898 = vld [vmem:[#allocation17 + $0x158] sm:$0xff]
    %v2899 = vld [vmem:[#allocation17 + $0x160] sm:$0xff]
    %v2900 = vld [vmem:[#allocation17 + $0x168] sm:$0xf]
    %v2901 = vld [vmem:[#allocation17 + $0x16c] sm:$0xff]
    %v2902 = vld [vmem:[#allocation17 + $0x174] sm:$0xff]
    %v2903 = vld [vmem:[#allocation17 + $0x17c] sm:$0xff]
    %v2904 = vld [vmem:[#allocation17 + $0x184] sm:$0xf]
    %v2905 = vld [vmem:[#allocation17 + $0x188] sm:$0xff]
    %v2906 = vld [vmem:[#allocation17 + $0x190] sm:$0xff]
    %v2907 = vld [vmem:[#allocation17 + $0x198] sm:$0xff]
    %v2908 = vld [vmem:[#allocation17 + $0x1a0] sm:$0xf]
    %v2909 = vld [vmem:[#allocation17 + $0x1a4] sm:$0xff]
    %v2910 = vld [vmem:[#allocation17 + $0x1ac] sm:$0xff]
    %v2911 = vld [vmem:[#allocation17 + $0x1b4] sm:$0xff]
    %v2912 = vld [vmem:[#allocation17 + $0x1bc] sm:$0xf]
    %v2913 = vld [vmem:[#allocation17 + $0x1c0] sm:$0xff]
    %v2914 = vld [vmem:[#allocation17 + $0x1c8] sm:$0xff]
    %v2915 = vld [vmem:[#allocation17 + $0x1d0] sm:$0xff]
    %v2916 = vld [vmem:[#allocation17 + $0x1d8] sm:$0xf]
    %v2917 = vld [vmem:[#allocation17 + $0x1dc] sm:$0xff]
    %v2918 = vld [vmem:[#allocation17 + $0x1e4] sm:$0xff]
    %v2919 = vld [vmem:[#allocation17 + $0x1ec] sm:$0xff]
    %v2920 = vld [vmem:[#allocation17 + $0x1f4] sm:$0xf]
    %v2921 = vld [vmem:[#allocation17 + $0x1f8] sm:$0xff]
    %v2922 = vld [vmem:[#allocation17 + $0x200] sm:$0xff]
    %v2923 = vld [vmem:[#allocation17 + $0x208] sm:$0xff]
    %v2924 = vld [vmem:[#allocation17 + $0x210] sm:$0xf]
    %v2925 = vld [vmem:[#allocation17 + $0x214] sm:$0xff]
    %v2926 = vld [vmem:[#allocation17 + $0x21c] sm:$0xff]
    %v2927 = vld [vmem:[#allocation17 + $0x224] sm:$0xff]
    %v2928 = vld [vmem:[#allocation17 + $0x22c] sm:$0xf]
    %v2929 = vld [vmem:[#allocation17 + $0x230] sm:$0xff]
    %v2930 = vld [vmem:[#allocation17 + $0x238] sm:$0xff]
    %v2931 = vld [vmem:[#allocation17 + $0x240] sm:$0xff]
    %v2932 = vld [vmem:[#allocation17 + $0x248] sm:$0xf]
    %v2933 = vld [vmem:[#allocation17 + $0x24c] sm:$0xff]
    %v2934 = vld [vmem:[#allocation17 + $0x254] sm:$0xff]
    %v2935 = vld [vmem:[#allocation17 + $0x25c] sm:$0xff]
    %v2936 = vld [vmem:[#allocation17 + $0x264] sm:$0xf]
    %v2937 = vld [vmem:[#allocation17 + $0x268] sm:$0xff]
    %v2938 = vld [vmem:[#allocation17 + $0x270] sm:$0xff]
    %v2939 = vld [vmem:[#allocation17 + $0x278] sm:$0xff]
    %v2940 = vld [vmem:[#allocation17 + $0x280] sm:$0xf]
    %v2941 = vld [vmem:[#allocation17 + $0x284] sm:$0xff]
    %v2942 = vld [vmem:[#allocation17 + $0x28c] sm:$0xff]
    %v2943 = vld [vmem:[#allocation17 + $0x294] sm:$0xff]
    %v2944 = vld [vmem:[#allocation17 + $0x29c] sm:$0xf]
    %v2945 = vld [vmem:[#allocation17 + $0x2a0] sm:$0xff]
    %v2946 = vld [vmem:[#allocation17 + $0x2a8] sm:$0xff]
    %v2947 = vld [vmem:[#allocation17 + $0x2b0] sm:$0xff]
    %v2948 = vld [vmem:[#allocation17 + $0x2b8] sm:$0xf]
    %v2949 = vld [vmem:[#allocation17 + $0x2bc] sm:$0xff]
    %v2950 = vld [vmem:[#allocation17 + $0x2c4] sm:$0xff]
    %v2951 = vld [vmem:[#allocation17 + $0x2cc] sm:$0xff]
    %v2952 = vld [vmem:[#allocation17 + $0x2d4] sm:$0xf]
    %v2953 = vld [vmem:[#allocation17 + $0x2d8] sm:$0xff]
    %v2954 = vld [vmem:[#allocation17 + $0x2e0] sm:$0xff]
    %v2955 = vld [vmem:[#allocation17 + $0x2e8] sm:$0xff]
    %v2956 = vld [vmem:[#allocation17 + $0x2f0] sm:$0xf]
    %v2957 = vld [vmem:[#allocation17 + $0x2f4] sm:$0xff]
    %v2958 = vld [vmem:[#allocation17 + $0x2fc] sm:$0xff]
    %v2959 = vld [vmem:[#allocation17 + $0x304] sm:$0xff]
    %v2960 = vld [vmem:[#allocation17 + $0x30c] sm:$0xf]
    %v2961 = vld [vmem:[#allocation17 + $0x310] sm:$0xff]
    %v2962 = vld [vmem:[#allocation17 + $0x318] sm:$0xff]
    %v2963 = vld [vmem:[#allocation17 + $0x320] sm:$0xff]
    %v2964 = vld [vmem:[#allocation17 + $0x328] sm:$0xf]
    %v2965 = vld [vmem:[#allocation17 + $0x32c] sm:$0xff]
    %v2966 = vld [vmem:[#allocation17 + $0x334] sm:$0xff]
    %v2967 = vld [vmem:[#allocation17 + $0x33c] sm:$0xff]
    %v2968 = vld [vmem:[#allocation17 + $0x344] sm:$0xf]
    %v2969 = vld [vmem:[#allocation17 + $0x348] sm:$0xff]
    %v2970 = vld [vmem:[#allocation17 + $0x350] sm:$0xff]
    %v2971 = vld [vmem:[#allocation17 + $0x358] sm:$0xff]
    %v2972 = vld [vmem:[#allocation17 + $0x360] sm:$0xf]
    %v2973 = vld [vmem:[#allocation17 + $0x364] sm:$0xff]
    %v2974 = vld [vmem:[#allocation17 + $0x36c] sm:$0xff]
    %v2975 = vld [vmem:[#allocation17 + $0x374] sm:$0xff]
    %v2976 = vld [vmem:[#allocation17 + $0x37c] sm:$0xf]
    %v2977 = vld [vmem:[#allocation17 + $0x380] sm:$0xff]
    %v2978 = vld [vmem:[#allocation17 + $0x388] sm:$0xff]
    %v2979 = vld [vmem:[#allocation17 + $0x390] sm:$0xff]
    %v2980 = vld [vmem:[#allocation17 + $0x398] sm:$0xf]
    %v2981 = vld [vmem:[#allocation17 + $0x39c] sm:$0xff]
    %v2982 = vld [vmem:[#allocation17 + $0x3a4] sm:$0xff]
    %v2983 = vld [vmem:[#allocation17 + $0x3ac] sm:$0xff]
    %v2984 = vld [vmem:[#allocation17 + $0x3b4] sm:$0xf]
    %v2985 = vld [vmem:[#allocation17 + $0x3b8] sm:$0xff]
    %v2986 = vld [vmem:[#allocation17 + $0x3c0] sm:$0xff]
    %v2987 = vld [vmem:[#allocation17 + $0x3c8] sm:$0xff]
    %v2988 = vld [vmem:[#allocation17 + $0x3d0] sm:$0xf]
    %v2989 = vld [vmem:[#allocation17 + $0x3d4] sm:$0xff]
    %v2990 = vld [vmem:[#allocation17 + $0x3dc] sm:$0xff]
    %v2991 = vld [vmem:[#allocation17 + $0x3e4] sm:$0xff]
    %v2992 = vld [vmem:[#allocation17 + $0x3ec] sm:$0xf]
    %v2993 = vld [vmem:[#allocation17 + $0x3f0] sm:$0xff]
    %v2994 = vld [vmem:[#allocation17 + $0x3f8] sm:$0xff]
    %v2995 = vld [vmem:[#allocation17 + $0x400] sm:$0xff]
    %v2996 = vld [vmem:[#allocation17 + $0x408] sm:$0xf]
    %v2997 = vld [vmem:[#allocation17 + $0x40c] sm:$0xff]
    %v2998 = vld [vmem:[#allocation17 + $0x414] sm:$0xff]
    %v2999 = vld [vmem:[#allocation17 + $0x41c] sm:$0xff]
    %v3000 = vld [vmem:[#allocation17 + $0x424] sm:$0xf]
    %v3001 = vld [vmem:[#allocation17 + $0x428] sm:$0xff]
    %v3002 = vld [vmem:[#allocation17 + $0x430] sm:$0xff]
    %v3003 = vld [vmem:[#allocation17 + $0x438] sm:$0xff]
    %v3004 = vld [vmem:[#allocation17 + $0x440] sm:$0xf]
    %v3005 = vld [vmem:[#allocation17 + $0x444] sm:$0xff]
    %v3006 = vld [vmem:[#allocation17 + $0x44c] sm:$0xff]
    %v3007 = vld [vmem:[#allocation17 + $0x454] sm:$0xff]
    %v3008 = vld [vmem:[#allocation17 + $0x45c] sm:$0xf]
    %v3009 = vld [vmem:[#allocation17 + $0x460] sm:$0xff]
    %v3010 = vld [vmem:[#allocation17 + $0x468] sm:$0xff]
    %v3011 = vld [vmem:[#allocation17 + $0x470] sm:$0xff]
    %v3012 = vld [vmem:[#allocation17 + $0x478] sm:$0xf]
    %v3013 = vld [vmem:[#allocation17 + $0x47c] sm:$0xff]
    %v3014 = vld [vmem:[#allocation17 + $0x484] sm:$0xff]
    %v3015 = vld [vmem:[#allocation17 + $0x48c] sm:$0xff]
    %v3016 = vld [vmem:[#allocation17 + $0x494] sm:$0xf]
    %v3017 = vld [vmem:[#allocation17 + $0x498] sm:$0xff]
    %v3018 = vld [vmem:[#allocation17 + $0x4a0] sm:$0xff]
    %v3019 = vld [vmem:[#allocation17 + $0x4a8] sm:$0xff]
    %v3020 = vld [vmem:[#allocation17 + $0x4b0] sm:$0xf]
    %v3021 = vld [vmem:[#allocation17 + $0x4b4] sm:$0xff]
    %v3022 = vld [vmem:[#allocation17 + $0x4bc] sm:$0xff]
    %v3023 = vld [vmem:[#allocation17 + $0x4c4] sm:$0xff]
    %v3024 = vld [vmem:[#allocation17 + $0x4cc] sm:$0xf]
    %v3025 = vld [vmem:[#allocation17 + $0x4d0] sm:$0xff]
    %v3026 = vld [vmem:[#allocation17 + $0x4d8] sm:$0xff]
    %v3027 = vld [vmem:[#allocation17 + $0x4e0] sm:$0xff]
    %v3028 = vld [vmem:[#allocation17 + $0x4e8] sm:$0xf]
    %v3029 = vld [vmem:[#allocation17 + $0x4ec] sm:$0xff]
    %v3030 = vld [vmem:[#allocation17 + $0x4f4] sm:$0xff]
    %v3031 = vld [vmem:[#allocation17 + $0x4fc] sm:$0xff]
    %v3032 = vld [vmem:[#allocation17 + $0x504] sm:$0xf]
    %v3033 = vld [vmem:[#allocation17 + $0x508] sm:$0xff]
    %v3034 = vld [vmem:[#allocation17 + $0x510] sm:$0xff]
    %v3035 = vld [vmem:[#allocation17 + $0x518] sm:$0xff]
    %v3036 = vld [vmem:[#allocation17 + $0x520] sm:$0xf]
    %v3037 = vld [vmem:[#allocation17 + $0x524] sm:$0xff]
    %v3038 = vld [vmem:[#allocation17 + $0x52c] sm:$0xff]
    %v3039 = vld [vmem:[#allocation17 + $0x534] sm:$0xff]
    %v3040 = vld [vmem:[#allocation17 + $0x53c] sm:$0xf]
    %v3041 = vld [vmem:[#allocation17 + $0x540] sm:$0xff]
    %v3042 = vld [vmem:[#allocation17 + $0x548] sm:$0xff]
    %v3043 = vld [vmem:[#allocation17 + $0x550] sm:$0xff]
    %v3044 = vld [vmem:[#allocation17 + $0x558] sm:$0xf]
    %v3045 = vld [vmem:[#allocation17 + $0x55c] sm:$0xff]
    %v3046 = vld [vmem:[#allocation17 + $0x564] sm:$0xff]
    %v3047 = vld [vmem:[#allocation17 + $0x56c] sm:$0xff]
    %v3048 = vld [vmem:[#allocation17 + $0x574] sm:$0xf]
    %v3049 = vld [vmem:[#allocation17 + $0x578] sm:$0xff]
    %v3050 = vld [vmem:[#allocation17 + $0x580] sm:$0xff]
    %v3051 = vld [vmem:[#allocation17 + $0x588] sm:$0xff]
    %v3052 = vld [vmem:[#allocation17 + $0x590] sm:$0xf]
    %v3053 = vld [vmem:[#allocation17 + $0x594] sm:$0xff]
    %v3054 = vld [vmem:[#allocation17 + $0x59c] sm:$0xff]
    %v3055 = vld [vmem:[#allocation17 + $0x5a4] sm:$0xff]
    %v3056 = vld [vmem:[#allocation17 + $0x5ac] sm:$0xf]
    %v3057 = vld [vmem:[#allocation17 + $0x5b0] sm:$0xff]
    %v3058 = vld [vmem:[#allocation17 + $0x5b8] sm:$0xff]
    %v3059 = vld [vmem:[#allocation17 + $0x5c0] sm:$0xff]
    %v3060 = vld [vmem:[#allocation17 + $0x5c8] sm:$0xf]
    %v3061 = vld [vmem:[#allocation17 + $0x5cc] sm:$0xff]
    %v3062 = vld [vmem:[#allocation17 + $0x5d4] sm:$0xff]
    %v3063 = vld [vmem:[#allocation17 + $0x5dc] sm:$0xff]
    %v3064 = vld [vmem:[#allocation17 + $0x5e4] sm:$0xf]
    %v3065 = vld [vmem:[#allocation17 + $0x5e8] sm:$0xff]
    %v3066 = vld [vmem:[#allocation17 + $0x5f0] sm:$0xff]
    %v3067 = vld [vmem:[#allocation17 + $0x5f8] sm:$0xff]
    %v3068 = vld [vmem:[#allocation17 + $0x600] sm:$0xf]
    %v3069 = vld [vmem:[#allocation17 + $0x604] sm:$0xff]
    %v3070 = vld [vmem:[#allocation17 + $0x60c] sm:$0xff]
    %v3071 = vld [vmem:[#allocation17 + $0x614] sm:$0xff]
    %v3072 = vld [vmem:[#allocation17 + $0x61c] sm:$0xf]
    %v3073 = vld [vmem:[#allocation17 + $0x620] sm:$0xff]
    %v3074 = vld [vmem:[#allocation17 + $0x628] sm:$0xff]
    %v3075 = vld [vmem:[#allocation17 + $0x630] sm:$0xff]
    %v3076 = vld [vmem:[#allocation17 + $0x638] sm:$0xf]
    %v3077 = vld [vmem:[#allocation17 + $0x63c] sm:$0xff]
    %v3078 = vld [vmem:[#allocation17 + $0x644] sm:$0xff]
    %v3079 = vld [vmem:[#allocation17 + $0x64c] sm:$0xff]
    %v3080 = vld [vmem:[#allocation17 + $0x654] sm:$0xf]
    %v3081 = vld [vmem:[#allocation17 + $0x658] sm:$0xff]
    %v3082 = vld [vmem:[#allocation17 + $0x660] sm:$0xff]
    %v3083 = vld [vmem:[#allocation17 + $0x668] sm:$0xff]
    %v3084 = vld [vmem:[#allocation17 + $0x670] sm:$0xf]
    %v3085 = vld [vmem:[#allocation17 + $0x674] sm:$0xff]
    %v3086 = vld [vmem:[#allocation17 + $0x67c] sm:$0xff]
    %v3087 = vld [vmem:[#allocation17 + $0x684] sm:$0xff]
    %v3088 = vld [vmem:[#allocation17 + $0x68c] sm:$0xf]
    %v3089 = vld [vmem:[#allocation17 + $0x690] sm:$0xff]
    %v3090 = vld [vmem:[#allocation17 + $0x698] sm:$0xff]
    %v3091 = vld [vmem:[#allocation17 + $0x6a0] sm:$0xff]
    %v3092 = vld [vmem:[#allocation17 + $0x6a8] sm:$0xf]
    %v3093 = vld [vmem:[#allocation17 + $0x6ac] sm:$0xff]
    %v3094 = vld [vmem:[#allocation17 + $0x6b4] sm:$0xff]
    %v3095 = vld [vmem:[#allocation17 + $0x6bc] sm:$0xff]
    %v3096 = vld [vmem:[#allocation17 + $0x6c4] sm:$0xf]
    %v3097 = vld [vmem:[#allocation17 + $0x6c8] sm:$0xff]
    %v3098 = vld [vmem:[#allocation17 + $0x6d0] sm:$0xff]
    %v3099 = vld [vmem:[#allocation17 + $0x6d8] sm:$0xff]
    %v3100 = vld [vmem:[#allocation17 + $0x6e0] sm:$0xf]
    %v3101 = vld [vmem:[#allocation17 + $0x6e4] sm:$0xff]
    %v3102 = vld [vmem:[#allocation17 + $0x6ec] sm:$0xff]
    %v3103 = vld [vmem:[#allocation17 + $0x6f4] sm:$0xff]
    %v3104 = vld [vmem:[#allocation17 + $0x6fc] sm:$0xf]
    %v3105 = vld [vmem:[#allocation17 + $0x700] sm:$0xff]
    %v3106 = vld [vmem:[#allocation17 + $0x708] sm:$0xff]
    %v3107 = vld [vmem:[#allocation17 + $0x710] sm:$0xff]
    %v3108 = vld [vmem:[#allocation17 + $0x718] sm:$0xf]
    %v3109 = vld [vmem:[#allocation17 + $0x71c] sm:$0xff]
    %v3110 = vld [vmem:[#allocation17 + $0x724] sm:$0xff]
    %v3111 = vld [vmem:[#allocation17 + $0x72c] sm:$0xff]
    %v3112 = vld [vmem:[#allocation17 + $0x734] sm:$0xf]
    %v3113 = vld [vmem:[#allocation17 + $0x738] sm:$0xff]
    %v3114 = vld [vmem:[#allocation17 + $0x740] sm:$0xff]
    %v3115 = vld [vmem:[#allocation17 + $0x748] sm:$0xff]
    %v3116 = vld [vmem:[#allocation17 + $0x750] sm:$0xf]
    %v3117 = vld [vmem:[#allocation17 + $0x754] sm:$0xff]
    %v3118 = vld [vmem:[#allocation17 + $0x75c] sm:$0xff]
    %v3119 = vld [vmem:[#allocation17 + $0x764] sm:$0xff]
    %v3120 = vld [vmem:[#allocation17 + $0x76c] sm:$0xf]
    %v3121 = vld [vmem:[#allocation17 + $0x770] sm:$0xff]
    %v3122 = vld [vmem:[#allocation17 + $0x778] sm:$0xff]
    %v3123 = vld [vmem:[#allocation17 + $0x780] sm:$0xff]
    %v3124 = vld [vmem:[#allocation17 + $0x788] sm:$0xf]
    %v3125 = vld [vmem:[#allocation17 + $0x78c] sm:$0xff]
    %v3126 = vld [vmem:[#allocation17 + $0x794] sm:$0xff]
    %v3127 = vld [vmem:[#allocation17 + $0x79c] sm:$0xff]
    %v3128 = vld [vmem:[#allocation17 + $0x7a4] sm:$0xf]
    %v3129 = vld [vmem:[#allocation17 + $0x7a8] sm:$0xff]
    %v3130 = vld [vmem:[#allocation17 + $0x7b0] sm:$0xff]
    %v3131 = vld [vmem:[#allocation17 + $0x7b8] sm:$0xff]
    %v3132 = vld [vmem:[#allocation17 + $0x7c0] sm:$0xf]
    %v3133 = vld [vmem:[#allocation17 + $0x7c4] sm:$0xff]
    %v3134 = vld [vmem:[#allocation17 + $0x7cc] sm:$0xff]
    %v3135 = vld [vmem:[#allocation17 + $0x7d4] sm:$0xff]
    %v3136 = vld [vmem:[#allocation17 + $0x7dc] sm:$0xf]
    %v3137 = vld [vmem:[#allocation17 + $0x7e0] sm:$0xff]
    %v3138 = vld [vmem:[#allocation17 + $0x7e8] sm:$0xff]
    %v3139 = vld [vmem:[#allocation17 + $0x7f0] sm:$0xff]
    %v3140 = vld [vmem:[#allocation17 + $0x7f8] sm:$0xf]
    %v3141 = vld [vmem:[#allocation17 + $0x7fc] sm:$0xff]
    %v3142 = vld [vmem:[#allocation17 + $0x804] sm:$0xff]
    %v3143 = vld [vmem:[#allocation17 + $0x80c] sm:$0xff]
    %v3144 = vld [vmem:[#allocation17 + $0x814] sm:$0xf]
    %v3145 = vld [vmem:[#allocation17 + $0x818] sm:$0xff]
    %v3146 = vld [vmem:[#allocation17 + $0x820] sm:$0xff]
    %v3147 = vld [vmem:[#allocation17 + $0x828] sm:$0xff]
    %v3148 = vld [vmem:[#allocation17 + $0x830] sm:$0xf]
    %v3149 = vld [vmem:[#allocation17 + $0x834] sm:$0xff]
    %v3150 = vld [vmem:[#allocation17 + $0x83c] sm:$0xff]
    %v3151 = vld [vmem:[#allocation17 + $0x844] sm:$0xff]
    %v3152 = vld [vmem:[#allocation17 + $0x84c] sm:$0xf]
    %v3153 = vld [vmem:[#allocation17 + $0x850] sm:$0xff]
    %v3154 = vld [vmem:[#allocation17 + $0x858] sm:$0xff]
    %v3155 = vld [vmem:[#allocation17 + $0x860] sm:$0xff]
    %v3156 = vld [vmem:[#allocation17 + $0x868] sm:$0xf]
    %v3157 = vld [vmem:[#allocation17 + $0x86c] sm:$0xff]
    %v3158 = vld [vmem:[#allocation17 + $0x874] sm:$0xff]
    %v3159 = vld [vmem:[#allocation17 + $0x87c] sm:$0xff]
    %v3160 = vld [vmem:[#allocation17 + $0x884] sm:$0xf]
    %v3161 = vld [vmem:[#allocation17 + $0x888] sm:$0xff]
    %v3162 = vld [vmem:[#allocation17 + $0x890] sm:$0xff]
    %v3163 = vld [vmem:[#allocation17 + $0x898] sm:$0xff]
    %v3164 = vld [vmem:[#allocation17 + $0x8a0] sm:$0xf]
    %v3165 = vld [vmem:[#allocation17 + $0x8a4] sm:$0xff]
    %v3166 = vld [vmem:[#allocation17 + $0x8ac] sm:$0xff]
    %v3167 = vld [vmem:[#allocation17 + $0x8b4] sm:$0xff]
    %v3168 = vld [vmem:[#allocation17 + $0x8bc] sm:$0xf]
    %v3169 = vld [vmem:[#allocation17 + $0x8c0] sm:$0xff]
    %v3170 = vld [vmem:[#allocation17 + $0x8c8] sm:$0xff]
    %v3171 = vld [vmem:[#allocation17 + $0x8d0] sm:$0xff]
    %v3172 = vld [vmem:[#allocation17 + $0x8d8] sm:$0xf]
    %v3173 = vld [vmem:[#allocation17 + $0x8dc] sm:$0xff]
    %v3174 = vld [vmem:[#allocation17 + $0x8e4] sm:$0xff]
    %v3175 = vld [vmem:[#allocation17 + $0x8ec] sm:$0xff]
    %v3176 = vld [vmem:[#allocation17 + $0x8f4] sm:$0xf]
    %v3177 = vld [vmem:[#allocation17 + $0x8f8] sm:$0xff]
    %v3178 = vld [vmem:[#allocation17 + $0x900] sm:$0xff]
    %v3179 = vld [vmem:[#allocation17 + $0x908] sm:$0xff]
    %v3180 = vld [vmem:[#allocation17 + $0x910] sm:$0xf]
    %v3181 = vld [vmem:[#allocation17 + $0x914] sm:$0xff]
    %v3182 = vld [vmem:[#allocation17 + $0x91c] sm:$0xff]
    %v3183 = vld [vmem:[#allocation17 + $0x924] sm:$0xff]
    %v3184 = vld [vmem:[#allocation17 + $0x92c] sm:$0xf]
    %v3185 = vld [vmem:[#allocation17 + $0x930] sm:$0xff]
    %v3186 = vld [vmem:[#allocation17 + $0x938] sm:$0xff]
    %v3187 = vld [vmem:[#allocation17 + $0x940] sm:$0xff]
    %v3188 = vld [vmem:[#allocation17 + $0x948] sm:$0xf]
    %v3189 = vld [vmem:[#allocation17 + $0x94c] sm:$0xff]
    %v3190 = vld [vmem:[#allocation17 + $0x954] sm:$0xff]
    %v3191 = vld [vmem:[#allocation17 + $0x95c] sm:$0xff]
    %v3192 = vld [vmem:[#allocation17 + $0x964] sm:$0xf]
    %v3193 = vld [vmem:[#allocation17 + $0x968] sm:$0xff]
    %v3194 = vld [vmem:[#allocation17 + $0x970] sm:$0xff]
    %v3195 = vld [vmem:[#allocation17 + $0x978] sm:$0xff]
    %v3196 = vld [vmem:[#allocation17 + $0x980] sm:$0xf]
    %v3197 = vld [vmem:[#allocation17 + $0x984] sm:$0xff]
    %v3198 = vld [vmem:[#allocation17 + $0x98c] sm:$0xff]
    %v3199 = vld [vmem:[#allocation17 + $0x994] sm:$0xff]
    %v3200 = vld [vmem:[#allocation17 + $0x99c] sm:$0xf]
    %v3201 = vld [vmem:[#allocation17 + $0x9a0] sm:$0xff]
    %v3202 = vld [vmem:[#allocation17 + $0x9a8] sm:$0xff]
    %v3203 = vld [vmem:[#allocation17 + $0x9b0] sm:$0xff]
    %v3204 = vld [vmem:[#allocation17 + $0x9b8] sm:$0xf]
    %v3205 = vld [vmem:[#allocation17 + $0x9bc] sm:$0xff]
    %v3206 = vld [vmem:[#allocation17 + $0x9c4] sm:$0xff]
    %v3207 = vld [vmem:[#allocation17 + $0x9cc] sm:$0xff]
    %v3208 = vld [vmem:[#allocation17 + $0x9d4] sm:$0xf]
    %v3209 = vld [vmem:[#allocation17 + $0x9d8] sm:$0xff]
    %v3210 = vld [vmem:[#allocation17 + $0x9e0] sm:$0xff]
    %v3211 = vld [vmem:[#allocation17 + $0x9e8] sm:$0xff]
    %v3212 = vld [vmem:[#allocation17 + $0x9f0] sm:$0xf]
    %v3213 = vld [vmem:[#allocation17 + $0x9f4] sm:$0xff]
    %v3214 = vld [vmem:[#allocation17 + $0x9fc] sm:$0xff]
    %v3215 = vld [vmem:[#allocation17 + $0xa04] sm:$0xff]
    %v3216 = vld [vmem:[#allocation17 + $0xa0c] sm:$0xf]
    %v3217 = vld [vmem:[#allocation17 + $0xa10] sm:$0xff]
    %v3218 = vld [vmem:[#allocation17 + $0xa18] sm:$0xff]
    %v3219 = vld [vmem:[#allocation17 + $0xa20] sm:$0xff]
    %v3220 = vld [vmem:[#allocation17 + $0xa28] sm:$0xf]
    %v3221 = vld [vmem:[#allocation17 + $0xa2c] sm:$0xff]
    %v3222 = vld [vmem:[#allocation17 + $0xa34] sm:$0xff]
    %v3223 = vld [vmem:[#allocation17 + $0xa3c] sm:$0xff]
    %v3224 = vld [vmem:[#allocation17 + $0xa44] sm:$0xf]
    %v3225 = vld [vmem:[#allocation17 + $0xa48] sm:$0xff]
    %v3226 = vld [vmem:[#allocation17 + $0xa50] sm:$0xff]
    %v3227 = vld [vmem:[#allocation17 + $0xa58] sm:$0xff]
    %v3228 = vld [vmem:[#allocation17 + $0xa60] sm:$0xf]
    %v3229 = vld [vmem:[#allocation17 + $0xa64] sm:$0xff]
    %v3230 = vld [vmem:[#allocation17 + $0xa6c] sm:$0xff]
    %v3231 = vld [vmem:[#allocation17 + $0xa74] sm:$0xff]
    %v3232 = vld [vmem:[#allocation17 + $0xa7c] sm:$0xf]
    %v3233 = vld [vmem:[#allocation17 + $0xa80] sm:$0xff]
    %v3234 = vld [vmem:[#allocation17 + $0xa88] sm:$0xff]
    %v3235 = vld [vmem:[#allocation17 + $0xa90] sm:$0xff]
    %v3236 = vld [vmem:[#allocation17 + $0xa98] sm:$0xf]
    %v3237 = vld [vmem:[#allocation17 + $0xa9c] sm:$0xff]
    %v3238 = vld [vmem:[#allocation17 + $0xaa4] sm:$0xff]
    %v3239 = vld [vmem:[#allocation17 + $0xaac] sm:$0xff]
    %v3240 = vld [vmem:[#allocation17 + $0xab4] sm:$0xf]
    %v3241 = vld [vmem:[#allocation17 + $0xab8] sm:$0xff]
    %v3242 = vld [vmem:[#allocation17 + $0xac0] sm:$0xff]
    %v3243 = vld [vmem:[#allocation17 + $0xac8] sm:$0xff]
    %v3244 = vld [vmem:[#allocation17 + $0xad0] sm:$0xf]
    %v3245 = vld [vmem:[#allocation17 + $0xad4] sm:$0xff]
    %v3246 = vld [vmem:[#allocation17 + $0xadc] sm:$0xff]
    %v3247 = vld [vmem:[#allocation17 + $0xae4] sm:$0xff]
    %v3248 = vld [vmem:[#allocation17 + $0xaec] sm:$0xf]
    %v3249 = vld [vmem:[#allocation17 + $0xaf0] sm:$0xff]
    %v3250 = vld [vmem:[#allocation17 + $0xaf8] sm:$0xff]
    %v3251 = vld [vmem:[#allocation17 + $0xb00] sm:$0xff]
    %v3252 = vld [vmem:[#allocation17 + $0xb08] sm:$0xf]
    %v3253 = vld [vmem:[#allocation17 + $0xb0c] sm:$0xff]
    %v3254 = vld [vmem:[#allocation17 + $0xb14] sm:$0xff]
    %v3255 = vld [vmem:[#allocation17 + $0xb1c] sm:$0xff]
    %v3256 = vld [vmem:[#allocation17 + $0xb24] sm:$0xf]
    %v3257 = vld [vmem:[#allocation17 + $0xb28] sm:$0xff]
    %v3258 = vld [vmem:[#allocation17 + $0xb30] sm:$0xff]
    %v3259 = vld [vmem:[#allocation17 + $0xb38] sm:$0xff]
    %v3260 = vld [vmem:[#allocation17 + $0xb40] sm:$0xf]
    %v3261 = vld [vmem:[#allocation17 + $0xb44] sm:$0xff]
    %v3262 = vld [vmem:[#allocation17 + $0xb4c] sm:$0xff]
    %v3263 = vld [vmem:[#allocation17 + $0xb54] sm:$0xff]
    %v3264 = vld [vmem:[#allocation17 + $0xb5c] sm:$0xf]
    %v3265 = vld [vmem:[#allocation17 + $0xb60] sm:$0xff]
    %v3266 = vld [vmem:[#allocation17 + $0xb68] sm:$0xff]
    %v3267 = vld [vmem:[#allocation17 + $0xb70] sm:$0xff]
    %v3268 = vld [vmem:[#allocation17 + $0xb78] sm:$0xf]
    %v3269 = vld [vmem:[#allocation17 + $0xb7c] sm:$0xff]
    %v3270 = vld [vmem:[#allocation17 + $0xb84] sm:$0xff]
    %v3271 = vld [vmem:[#allocation17 + $0xb8c] sm:$0xff]
    %v3272 = vld [vmem:[#allocation17 + $0xb94] sm:$0xf]
    %v3273 = vld [vmem:[#allocation17 + $0xb98] sm:$0xff]
    %v3274 = vld [vmem:[#allocation17 + $0xba0] sm:$0xff]
    %v3275 = vld [vmem:[#allocation17 + $0xba8] sm:$0xff]
    %v3276 = vld [vmem:[#allocation17 + $0xbb0] sm:$0xf]
    %v3277 = vld [vmem:[#allocation17 + $0xbb4] sm:$0xff]
    %v3278 = vld [vmem:[#allocation17 + $0xbbc] sm:$0xff]
    %v3279 = vld [vmem:[#allocation17 + $0xbc4] sm:$0xff]
    %v3280 = vld [vmem:[#allocation17 + $0xbcc] sm:$0xf]
    %v3281 = vld [vmem:[#allocation17 + $0xbd0] sm:$0xff]
    %v3282 = vld [vmem:[#allocation17 + $0xbd8] sm:$0xff]
    %v3283 = vld [vmem:[#allocation17 + $0xbe0] sm:$0xff]
    %v3284 = vld [vmem:[#allocation17 + $0xbe8] sm:$0xf]
    %v3285 = vld [vmem:[#allocation17 + $0xbec] sm:$0xff]
    %v3286 = vld [vmem:[#allocation17 + $0xbf4] sm:$0xff]
    %v3287 = vld [vmem:[#allocation17 + $0xbfc] sm:$0xff]
    %v3288 = vld [vmem:[#allocation17 + $0xc04] sm:$0xf]
    %v3289 = vld [vmem:[#allocation17 + $0xc08] sm:$0xff]
    %v3290 = vld [vmem:[#allocation17 + $0xc10] sm:$0xff]
    %v3291 = vld [vmem:[#allocation17 + $0xc18] sm:$0xff]
    %v3292 = vld [vmem:[#allocation17 + $0xc20] sm:$0xf]
    %v3293 = vld [vmem:[#allocation17 + $0xc24] sm:$0xff]
    %v3294 = vld [vmem:[#allocation17 + $0xc2c] sm:$0xff]
    %v3295 = vld [vmem:[#allocation17 + $0xc34] sm:$0xff]
    %v3296 = vld [vmem:[#allocation17 + $0xc3c] sm:$0xf]
    %v3297 = vld [vmem:[#allocation17 + $0xc40] sm:$0xff]
    %v3298 = vld [vmem:[#allocation17 + $0xc48] sm:$0xff]
    %v3299 = vld [vmem:[#allocation17 + $0xc50] sm:$0xff]
    %v3300 = vld [vmem:[#allocation17 + $0xc58] sm:$0xf]
    %v3301 = vld [vmem:[#allocation17 + $0xc5c] sm:$0xff]
    %v3302 = vld [vmem:[#allocation17 + $0xc64] sm:$0xff]
    %v3303 = vld [vmem:[#allocation17 + $0xc6c] sm:$0xff]
    %v3304 = vld [vmem:[#allocation17 + $0xc74] sm:$0xf]
    %v3305 = vld [vmem:[#allocation17 + $0xc78] sm:$0xff]
    %v3306 = vld [vmem:[#allocation17 + $0xc80] sm:$0xff]
    %v3307 = vld [vmem:[#allocation17 + $0xc88] sm:$0xff]
    %v3308 = vld [vmem:[#allocation17 + $0xc90] sm:$0xf]
    %v3309 = vld [vmem:[#allocation17 + $0xc94] sm:$0xff]
    %v3310 = vld [vmem:[#allocation17 + $0xc9c] sm:$0xff]
    %v3311 = vld [vmem:[#allocation17 + $0xca4] sm:$0xff]
    %v3312 = vld [vmem:[#allocation17 + $0xcac] sm:$0xf]
    %v3313 = vld [vmem:[#allocation17 + $0xcb0] sm:$0xff]
    %v3314 = vld [vmem:[#allocation17 + $0xcb8] sm:$0xff]
    %v3315 = vld [vmem:[#allocation17 + $0xcc0] sm:$0xff]
    %v3316 = vld [vmem:[#allocation17 + $0xcc8] sm:$0xf]
    %v3317 = vld [vmem:[#allocation17 + $0xccc] sm:$0xff]
    %v3318 = vld [vmem:[#allocation17 + $0xcd4] sm:$0xff]
    %v3319 = vld [vmem:[#allocation17 + $0xcdc] sm:$0xff]
    %v3320 = vld [vmem:[#allocation17 + $0xce4] sm:$0xf]
    %v3321 = vld [vmem:[#allocation17 + $0xce8] sm:$0xff]
    %v3322 = vld [vmem:[#allocation17 + $0xcf0] sm:$0xff]
    %v3323 = vld [vmem:[#allocation17 + $0xcf8] sm:$0xff]
    %v3324 = vld [vmem:[#allocation17 + $0xd00] sm:$0xf]
    %v3325 = vld [vmem:[#allocation17 + $0xd04] sm:$0xff]
    %v3326 = vld [vmem:[#allocation17 + $0xd0c] sm:$0xff]
    %v3327 = vld [vmem:[#allocation17 + $0xd14] sm:$0xff]
    %v3328 = vld [vmem:[#allocation17 + $0xd1c] sm:$0xf]
    %v3329 = vld [vmem:[#allocation17 + $0xd20] sm:$0xff]
    %v3330 = vld [vmem:[#allocation17 + $0xd28] sm:$0xff]
    %v3331 = vld [vmem:[#allocation17 + $0xd30] sm:$0xff]
    %v3332 = vld [vmem:[#allocation17 + $0xd38] sm:$0xf]
    %v3333 = vld [vmem:[#allocation17 + $0xd3c] sm:$0xff]
    %v3334 = vld [vmem:[#allocation17 + $0xd44] sm:$0xff]
    %v3335 = vld [vmem:[#allocation17 + $0xd4c] sm:$0xff]
    %v3336 = vld [vmem:[#allocation17 + $0xd54] sm:$0xf]
    %v3337 = vld [vmem:[#allocation17 + $0xd58] sm:$0xff]
    %v3338 = vld [vmem:[#allocation17 + $0xd60] sm:$0xff]
    %v3339 = vld [vmem:[#allocation17 + $0xd68] sm:$0xff]
    %v3340 = vld [vmem:[#allocation17 + $0xd70] sm:$0xf]
    %v3341 = vld [vmem:[#allocation17 + $0xd74] sm:$0xff]
    %v3342 = vld [vmem:[#allocation17 + $0xd7c] sm:$0xff]
    %v3343 = vld [vmem:[#allocation17 + $0xd84] sm:$0xff]
    %v3344 = vld [vmem:[#allocation17 + $0xd8c] sm:$0xf]
    %v3345 = vld [vmem:[#allocation17 + $0xd90] sm:$0xff]
    %v3346 = vld [vmem:[#allocation17 + $0xd98] sm:$0xff]
    %v3347 = vld [vmem:[#allocation17 + $0xda0] sm:$0xff]
    %v3348 = vld [vmem:[#allocation17 + $0xda8] sm:$0xf]
    %v3349 = vld [vmem:[#allocation17 + $0xdac] sm:$0xff]
    %v3350 = vld [vmem:[#allocation17 + $0xdb4] sm:$0xff]
    %v3351 = vld [vmem:[#allocation17 + $0xdbc] sm:$0xff]
    %v3352 = vld [vmem:[#allocation17 + $0xdc4] sm:$0xf]
    %v3353 = vld [vmem:[#allocation17 + $0xdc8] sm:$0xff]
    %v3354 = vld [vmem:[#allocation17 + $0xdd0] sm:$0xff]
    %v3355 = vld [vmem:[#allocation17 + $0xdd8] sm:$0xff]
    %v3356 = vld [vmem:[#allocation17 + $0xde0] sm:$0xf]
    %v3357 = vld [vmem:[#allocation17 + $0xde4] sm:$0xff]
    %v3358 = vld [vmem:[#allocation17 + $0xdec] sm:$0xff]
    %v3359 = vld [vmem:[#allocation17 + $0xdf4] sm:$0xff]
    %v3360 = vld [vmem:[#allocation17 + $0xdfc] sm:$0xf]
    %v3361 = vld [vmem:[#allocation19] sm:$0xff]
    %v3363 = vlaneseq
    %v3364 = vshrl.u32 %v3363, 7
    %v3365 = vsub.s32 0, %v3364
    %v3366 = vrot.slane %v3361, %v3365
    %v3367 = vlaneseq
    %v3368 = vshrl.u32 %v3367, 7
    %v3369 = vsub.s32 1, %v3368
    %v3370 = vrot.slane %v3361, %v3369
    %v3371 = vlaneseq
    %v3372 = vshrl.u32 %v3371, 7
    %v3373 = vsub.s32 2, %v3372
    %v3374 = vrot.slane %v3361, %v3373
    %v3375 = vlaneseq
    %v3376 = vshrl.u32 %v3375, 7
    %v3377 = vsub.s32 3, %v3376
    %v3378 = vrot.slane %v3361, %v3377
    %v3379 = vlaneseq
    %v3380 = vshrl.u32 %v3379, 7
    %v3381 = vsub.s32 4, %v3380
    %v3382 = vrot.slane %v3361, %v3381
    %v3383 = vlaneseq
    %v3384 = vshrl.u32 %v3383, 7
    %v3385 = vsub.s32 5, %v3384
    %v3386 = vrot.slane %v3361, %v3385
    %v3387 = vlaneseq
    %v3388 = vshrl.u32 %v3387, 7
    %v3389 = vsub.s32 6, %v3388
    %v3390 = vrot.slane %v3361, %v3389
    %v3910 = vunpack.c.l.b16 %v2849
    %v3911 = vunpack.c.h.b16 %v2849
    %v3912 = vunpack.c.l.b16 %v2850
    %v3913 = vunpack.c.h.b16 %v2850
    %v3914 = vunpack.c.l.b16 %v2851
    %v3915 = vunpack.c.h.b16 %v2851
    %v3916 = vunpack.c.l.b16 %v2852
    %v3917 = vunpack.c.l.b16 %v2853
    %v3918 = vunpack.c.h.b16 %v2853
    %v3919 = vunpack.c.l.b16 %v2854
    %v3920 = vunpack.c.h.b16 %v2854
    %v3921 = vunpack.c.l.b16 %v2855
    %v3922 = vunpack.c.h.b16 %v2855
    %v3923 = vunpack.c.l.b16 %v2856
    %v3924 = vunpack.c.l.b16 %v2857
    %v3925 = vunpack.c.h.b16 %v2857
    %v3926 = vunpack.c.l.b16 %v2858
    %v3927 = vunpack.c.h.b16 %v2858
    %v3928 = vunpack.c.l.b16 %v2859
    %v3929 = vunpack.c.h.b16 %v2859
    %v3930 = vunpack.c.l.b16 %v2860
    %v3931 = vunpack.c.l.b16 %v2861
    %v3932 = vunpack.c.h.b16 %v2861
    %v3933 = vunpack.c.l.b16 %v2862
    %v3934 = vunpack.c.h.b16 %v2862
    %v3935 = vunpack.c.l.b16 %v2863
    %v3936 = vunpack.c.h.b16 %v2863
    %v3937 = vunpack.c.l.b16 %v2864
    %v3938 = vunpack.c.l.b16 %v2865
    %v3939 = vunpack.c.h.b16 %v2865
    %v3940 = vunpack.c.l.b16 %v2866
    %v3941 = vunpack.c.h.b16 %v2866
    %v3942 = vunpack.c.l.b16 %v2867
    %v3943 = vunpack.c.h.b16 %v2867
    %v3944 = vunpack.c.l.b16 %v2868
    %v3945 = vunpack.c.l.b16 %v2869
    %v3946 = vunpack.c.h.b16 %v2869
    %v3947 = vunpack.c.l.b16 %v2870
    %v3948 = vunpack.c.h.b16 %v2870
    %v3949 = vunpack.c.l.b16 %v2871
    %v3950 = vunpack.c.h.b16 %v2871
    %v3951 = vunpack.c.l.b16 %v2872
    %v3952 = vunpack.c.l.b16 %v2873
    %v3953 = vunpack.c.h.b16 %v2873
    %v3954 = vunpack.c.l.b16 %v2874
    %v3955 = vunpack.c.h.b16 %v2874
    %v3956 = vunpack.c.l.b16 %v2875
    %v3957 = vunpack.c.h.b16 %v2875
    %v3958 = vunpack.c.l.b16 %v2876
    %v3959 = vunpack.c.l.b16 %v2877
    %v3960 = vunpack.c.h.b16 %v2877
    %v3961 = vunpack.c.l.b16 %v2878
    %v3962 = vunpack.c.h.b16 %v2878
    %v3963 = vunpack.c.l.b16 %v2879
    %v3964 = vunpack.c.h.b16 %v2879
    %v3965 = vunpack.c.l.b16 %v2880
    %v3966 = vunpack.c.l.b16 %v2881
    %v3967 = vunpack.c.h.b16 %v2881
    %v3968 = vunpack.c.l.b16 %v2882
    %v3969 = vunpack.c.h.b16 %v2882
    %v3970 = vunpack.c.l.b16 %v2883
    %v3971 = vunpack.c.h.b16 %v2883
    %v3972 = vunpack.c.l.b16 %v2884
    %v3973 = vunpack.c.l.b16 %v2885
    %v3974 = vunpack.c.h.b16 %v2885
    %v3975 = vunpack.c.l.b16 %v2886
    %v3976 = vunpack.c.h.b16 %v2886
    %v3977 = vunpack.c.l.b16 %v2887
    %v3978 = vunpack.c.h.b16 %v2887
    %v3979 = vunpack.c.l.b16 %v2888
    %v3980 = vunpack.c.l.b16 %v2889
    %v3981 = vunpack.c.h.b16 %v2889
    %v3982 = vunpack.c.l.b16 %v2890
    %v3983 = vunpack.c.h.b16 %v2890
    %v3984 = vunpack.c.l.b16 %v2891
    %v3985 = vunpack.c.h.b16 %v2891
    %v3986 = vunpack.c.l.b16 %v2892
    %v3987 = vunpack.c.l.b16 %v2893
    %v3988 = vunpack.c.h.b16 %v2893
    %v3989 = vunpack.c.l.b16 %v2894
    %v3990 = vunpack.c.h.b16 %v2894
    %v3991 = vunpack.c.l.b16 %v2895
    %v3992 = vunpack.c.h.b16 %v2895
    %v3993 = vunpack.c.l.b16 %v2896
    %v3994 = vunpack.c.l.b16 %v2897
    %v3995 = vunpack.c.h.b16 %v2897
    %v3996 = vunpack.c.l.b16 %v2898
    %v3997 = vunpack.c.h.b16 %v2898
    %v3998 = vunpack.c.l.b16 %v2899
    %v3999 = vunpack.c.h.b16 %v2899
    %v4000 = vunpack.c.l.b16 %v2900
    %v4001 = vunpack.c.l.b16 %v2901
    %v4002 = vunpack.c.h.b16 %v2901
    %v4003 = vunpack.c.l.b16 %v2902
    %v4004 = vunpack.c.h.b16 %v2902
    %v4005 = vunpack.c.l.b16 %v2903
    %v4006 = vunpack.c.h.b16 %v2903
    %v4007 = vunpack.c.l.b16 %v2904
    %v4008 = vunpack.c.l.b16 %v2905
    %v4009 = vunpack.c.h.b16 %v2905
    %v4010 = vunpack.c.l.b16 %v2906
    %v4011 = vunpack.c.h.b16 %v2906
    %v4012 = vunpack.c.l.b16 %v2907
    %v4013 = vunpack.c.h.b16 %v2907
    %v4014 = vunpack.c.l.b16 %v2908
    %v4015 = vunpack.c.l.b16 %v2909
    %v4016 = vunpack.c.h.b16 %v2909
    %v4017 = vunpack.c.l.b16 %v2910
    %v4018 = vunpack.c.h.b16 %v2910
    %v4019 = vunpack.c.l.b16 %v2911
    %v4020 = vunpack.c.h.b16 %v2911
    %v4021 = vunpack.c.l.b16 %v2912
    %v4022 = vunpack.c.l.b16 %v2913
    %v4023 = vunpack.c.h.b16 %v2913
    %v4024 = vunpack.c.l.b16 %v2914
    %v4025 = vunpack.c.h.b16 %v2914
    %v4026 = vunpack.c.l.b16 %v2915
    %v4027 = vunpack.c.h.b16 %v2915
    %v4028 = vunpack.c.l.b16 %v2916
    %v4029 = vunpack.c.l.b16 %v2917
    %v4030 = vunpack.c.h.b16 %v2917
    %v4031 = vunpack.c.l.b16 %v2918
    %v4032 = vunpack.c.h.b16 %v2918
    %v4033 = vunpack.c.l.b16 %v2919
    %v4034 = vunpack.c.h.b16 %v2919
    %v4035 = vunpack.c.l.b16 %v2920
    %v4036 = vunpack.c.l.b16 %v2921
    %v4037 = vunpack.c.h.b16 %v2921
    %v4038 = vunpack.c.l.b16 %v2922
    %v4039 = vunpack.c.h.b16 %v2922
    %v4040 = vunpack.c.l.b16 %v2923
    %v4041 = vunpack.c.h.b16 %v2923
    %v4042 = vunpack.c.l.b16 %v2924
    %v4043 = vunpack.c.l.b16 %v2925
    %v4044 = vunpack.c.h.b16 %v2925
    %v4045 = vunpack.c.l.b16 %v2926
    %v4046 = vunpack.c.h.b16 %v2926
    %v4047 = vunpack.c.l.b16 %v2927
    %v4048 = vunpack.c.h.b16 %v2927
    %v4049 = vunpack.c.l.b16 %v2928
    %v4050 = vunpack.c.l.b16 %v2929
    %v4051 = vunpack.c.h.b16 %v2929
    %v4052 = vunpack.c.l.b16 %v2930
    %v4053 = vunpack.c.h.b16 %v2930
    %v4054 = vunpack.c.l.b16 %v2931
    %v4055 = vunpack.c.h.b16 %v2931
    %v4056 = vunpack.c.l.b16 %v2932
    %v4057 = vunpack.c.l.b16 %v2933
    %v4058 = vunpack.c.h.b16 %v2933
    %v4059 = vunpack.c.l.b16 %v2934
    %v4060 = vunpack.c.h.b16 %v2934
    %v4061 = vunpack.c.l.b16 %v2935
    %v4062 = vunpack.c.h.b16 %v2935
    %v4063 = vunpack.c.l.b16 %v2936
    %v4064 = vunpack.c.l.b16 %v2937
    %v4065 = vunpack.c.h.b16 %v2937
    %v4066 = vunpack.c.l.b16 %v2938
    %v4067 = vunpack.c.h.b16 %v2938
    %v4068 = vunpack.c.l.b16 %v2939
    %v4069 = vunpack.c.h.b16 %v2939
    %v4070 = vunpack.c.l.b16 %v2940
    %v4071 = vunpack.c.l.b16 %v2941
    %v4072 = vunpack.c.h.b16 %v2941
    %v4073 = vunpack.c.l.b16 %v2942
    %v4074 = vunpack.c.h.b16 %v2942
    %v4075 = vunpack.c.l.b16 %v2943
    %v4076 = vunpack.c.h.b16 %v2943
    %v4077 = vunpack.c.l.b16 %v2944
    %v4078 = vunpack.c.l.b16 %v2945
    %v4079 = vunpack.c.h.b16 %v2945
    %v4080 = vunpack.c.l.b16 %v2946
    %v4081 = vunpack.c.h.b16 %v2946
    %v4082 = vunpack.c.l.b16 %v2947
    %v4083 = vunpack.c.h.b16 %v2947
    %v4084 = vunpack.c.l.b16 %v2948
    %v4085 = vunpack.c.l.b16 %v2949
    %v4086 = vunpack.c.h.b16 %v2949
    %v4087 = vunpack.c.l.b16 %v2950
    %v4088 = vunpack.c.h.b16 %v2950
    %v4089 = vunpack.c.l.b16 %v2951
    %v4090 = vunpack.c.h.b16 %v2951
    %v4091 = vunpack.c.l.b16 %v2952
    %v4092 = vunpack.c.l.b16 %v2953
    %v4093 = vunpack.c.h.b16 %v2953
    %v4094 = vunpack.c.l.b16 %v2954
    %v4095 = vunpack.c.h.b16 %v2954
    %v4096 = vunpack.c.l.b16 %v2955
    %v4097 = vunpack.c.h.b16 %v2955
    %v4098 = vunpack.c.l.b16 %v2956
    %v4099 = vunpack.c.l.b16 %v2957
    %v4100 = vunpack.c.h.b16 %v2957
    %v4101 = vunpack.c.l.b16 %v2958
    %v4102 = vunpack.c.h.b16 %v2958
    %v4103 = vunpack.c.l.b16 %v2959
    %v4104 = vunpack.c.h.b16 %v2959
    %v4105 = vunpack.c.l.b16 %v2960
    %v4106 = vunpack.c.l.b16 %v2961
    %v4107 = vunpack.c.h.b16 %v2961
    %v4108 = vunpack.c.l.b16 %v2962
    %v4109 = vunpack.c.h.b16 %v2962
    %v4110 = vunpack.c.l.b16 %v2963
    %v4111 = vunpack.c.h.b16 %v2963
    %v4112 = vunpack.c.l.b16 %v2964
    %v4113 = vunpack.c.l.b16 %v2965
    %v4114 = vunpack.c.h.b16 %v2965
    %v4115 = vunpack.c.l.b16 %v2966
    %v4116 = vunpack.c.h.b16 %v2966
    %v4117 = vunpack.c.l.b16 %v2967
    %v4118 = vunpack.c.h.b16 %v2967
    %v4119 = vunpack.c.l.b16 %v2968
    %v4120 = vunpack.c.l.b16 %v2969
    %v4121 = vunpack.c.h.b16 %v2969
    %v4122 = vunpack.c.l.b16 %v2970
    %v4123 = vunpack.c.h.b16 %v2970
    %v4124 = vunpack.c.l.b16 %v2971
    %v4125 = vunpack.c.h.b16 %v2971
    %v4126 = vunpack.c.l.b16 %v2972
    %v4127 = vunpack.c.l.b16 %v2973
    %v4128 = vunpack.c.h.b16 %v2973
    %v4129 = vunpack.c.l.b16 %v2974
    %v4130 = vunpack.c.h.b16 %v2974
    %v4131 = vunpack.c.l.b16 %v2975
    %v4132 = vunpack.c.h.b16 %v2975
    %v4133 = vunpack.c.l.b16 %v2976
    %v4134 = vunpack.c.l.b16 %v2977
    %v4135 = vunpack.c.h.b16 %v2977
    %v4136 = vunpack.c.l.b16 %v2978
    %v4137 = vunpack.c.h.b16 %v2978
    %v4138 = vunpack.c.l.b16 %v2979
    %v4139 = vunpack.c.h.b16 %v2979
    %v4140 = vunpack.c.l.b16 %v2980
    %v4141 = vunpack.c.l.b16 %v2981
    %v4142 = vunpack.c.h.b16 %v2981
    %v4143 = vunpack.c.l.b16 %v2982
    %v4144 = vunpack.c.h.b16 %v2982
    %v4145 = vunpack.c.l.b16 %v2983
    %v4146 = vunpack.c.h.b16 %v2983
    %v4147 = vunpack.c.l.b16 %v2984
    %v4148 = vunpack.c.l.b16 %v2985
    %v4149 = vunpack.c.h.b16 %v2985
    %v4150 = vunpack.c.l.b16 %v2986
    %v4151 = vunpack.c.h.b16 %v2986
    %v4152 = vunpack.c.l.b16 %v2987
    %v4153 = vunpack.c.h.b16 %v2987
    %v4154 = vunpack.c.l.b16 %v2988
    %v4155 = vunpack.c.l.b16 %v2989
    %v4156 = vunpack.c.h.b16 %v2989
    %v4157 = vunpack.c.l.b16 %v2990
    %v4158 = vunpack.c.h.b16 %v2990
    %v4159 = vunpack.c.l.b16 %v2991
    %v4160 = vunpack.c.h.b16 %v2991
    %v4161 = vunpack.c.l.b16 %v2992
    %v4162 = vunpack.c.l.b16 %v2993
    %v4163 = vunpack.c.h.b16 %v2993
    %v4164 = vunpack.c.l.b16 %v2994
    %v4165 = vunpack.c.h.b16 %v2994
    %v4166 = vunpack.c.l.b16 %v2995
    %v4167 = vunpack.c.h.b16 %v2995
    %v4168 = vunpack.c.l.b16 %v2996
    %v4169 = vunpack.c.l.b16 %v2997
    %v4170 = vunpack.c.h.b16 %v2997
    %v4171 = vunpack.c.l.b16 %v2998
    %v4172 = vunpack.c.h.b16 %v2998
    %v4173 = vunpack.c.l.b16 %v2999
    %v4174 = vunpack.c.h.b16 %v2999
    %v4175 = vunpack.c.l.b16 %v3000
    %v4176 = vunpack.c.l.b16 %v3001
    %v4177 = vunpack.c.h.b16 %v3001
    %v4178 = vunpack.c.l.b16 %v3002
    %v4179 = vunpack.c.h.b16 %v3002
    %v4180 = vunpack.c.l.b16 %v3003
    %v4181 = vunpack.c.h.b16 %v3003
    %v4182 = vunpack.c.l.b16 %v3004
    %v4183 = vunpack.c.l.b16 %v3005
    %v4184 = vunpack.c.h.b16 %v3005
    %v4185 = vunpack.c.l.b16 %v3006
    %v4186 = vunpack.c.h.b16 %v3006
    %v4187 = vunpack.c.l.b16 %v3007
    %v4188 = vunpack.c.h.b16 %v3007
    %v4189 = vunpack.c.l.b16 %v3008
    %v4190 = vunpack.c.l.b16 %v3009
    %v4191 = vunpack.c.h.b16 %v3009
    %v4192 = vunpack.c.l.b16 %v3010
    %v4193 = vunpack.c.h.b16 %v3010
    %v4194 = vunpack.c.l.b16 %v3011
    %v4195 = vunpack.c.h.b16 %v3011
    %v4196 = vunpack.c.l.b16 %v3012
    %v4197 = vunpack.c.l.b16 %v3013
    %v4198 = vunpack.c.h.b16 %v3013
    %v4199 = vunpack.c.l.b16 %v3014
    %v4200 = vunpack.c.h.b16 %v3014
    %v4201 = vunpack.c.l.b16 %v3015
    %v4202 = vunpack.c.h.b16 %v3015
    %v4203 = vunpack.c.l.b16 %v3016
    %v4204 = vunpack.c.l.b16 %v3017
    %v4205 = vunpack.c.h.b16 %v3017
    %v4206 = vunpack.c.l.b16 %v3018
    %v4207 = vunpack.c.h.b16 %v3018
    %v4208 = vunpack.c.l.b16 %v3019
    %v4209 = vunpack.c.h.b16 %v3019
    %v4210 = vunpack.c.l.b16 %v3020
    %v4211 = vunpack.c.l.b16 %v3021
    %v4212 = vunpack.c.h.b16 %v3021
    %v4213 = vunpack.c.l.b16 %v3022
    %v4214 = vunpack.c.h.b16 %v3022
    %v4215 = vunpack.c.l.b16 %v3023
    %v4216 = vunpack.c.h.b16 %v3023
    %v4217 = vunpack.c.l.b16 %v3024
    %v4218 = vunpack.c.l.b16 %v3025
    %v4219 = vunpack.c.h.b16 %v3025
    %v4220 = vunpack.c.l.b16 %v3026
    %v4221 = vunpack.c.h.b16 %v3026
    %v4222 = vunpack.c.l.b16 %v3027
    %v4223 = vunpack.c.h.b16 %v3027
    %v4224 = vunpack.c.l.b16 %v3028
    %v4225 = vunpack.c.l.b16 %v3029
    %v4226 = vunpack.c.h.b16 %v3029
    %v4227 = vunpack.c.l.b16 %v3030
    %v4228 = vunpack.c.h.b16 %v3030
    %v4229 = vunpack.c.l.b16 %v3031
    %v4230 = vunpack.c.h.b16 %v3031
    %v4231 = vunpack.c.l.b16 %v3032
    %v4232 = vunpack.c.l.b16 %v3033
    %v4233 = vunpack.c.h.b16 %v3033
    %v4234 = vunpack.c.l.b16 %v3034
    %v4235 = vunpack.c.h.b16 %v3034
    %v4236 = vunpack.c.l.b16 %v3035
    %v4237 = vunpack.c.h.b16 %v3035
    %v4238 = vunpack.c.l.b16 %v3036
    %v4239 = vunpack.c.l.b16 %v3037
    %v4240 = vunpack.c.h.b16 %v3037
    %v4241 = vunpack.c.l.b16 %v3038
    %v4242 = vunpack.c.h.b16 %v3038
    %v4243 = vunpack.c.l.b16 %v3039
    %v4244 = vunpack.c.h.b16 %v3039
    %v4245 = vunpack.c.l.b16 %v3040
    %v4246 = vunpack.c.l.b16 %v3041
    %v4247 = vunpack.c.h.b16 %v3041
    %v4248 = vunpack.c.l.b16 %v3042
    %v4249 = vunpack.c.h.b16 %v3042
    %v4250 = vunpack.c.l.b16 %v3043
    %v4251 = vunpack.c.h.b16 %v3043
    %v4252 = vunpack.c.l.b16 %v3044
    %v4253 = vunpack.c.l.b16 %v3045
    %v4254 = vunpack.c.h.b16 %v3045
    %v4255 = vunpack.c.l.b16 %v3046
    %v4256 = vunpack.c.h.b16 %v3046
    %v4257 = vunpack.c.l.b16 %v3047
    %v4258 = vunpack.c.h.b16 %v3047
    %v4259 = vunpack.c.l.b16 %v3048
    %v4260 = vunpack.c.l.b16 %v3049
    %v4261 = vunpack.c.h.b16 %v3049
    %v4262 = vunpack.c.l.b16 %v3050
    %v4263 = vunpack.c.h.b16 %v3050
    %v4264 = vunpack.c.l.b16 %v3051
    %v4265 = vunpack.c.h.b16 %v3051
    %v4266 = vunpack.c.l.b16 %v3052
    %v4267 = vunpack.c.l.b16 %v3053
    %v4268 = vunpack.c.h.b16 %v3053
    %v4269 = vunpack.c.l.b16 %v3054
    %v4270 = vunpack.c.h.b16 %v3054
    %v4271 = vunpack.c.l.b16 %v3055
    %v4272 = vunpack.c.h.b16 %v3055
    %v4273 = vunpack.c.l.b16 %v3056
    %v4274 = vunpack.c.l.b16 %v3057
    %v4275 = vunpack.c.h.b16 %v3057
    %v4276 = vunpack.c.l.b16 %v3058
    %v4277 = vunpack.c.h.b16 %v3058
    %v4278 = vunpack.c.l.b16 %v3059
    %v4279 = vunpack.c.h.b16 %v3059
    %v4280 = vunpack.c.l.b16 %v3060
    %v4281 = vunpack.c.l.b16 %v3061
    %v4282 = vunpack.c.h.b16 %v3061
    %v4283 = vunpack.c.l.b16 %v3062
    %v4284 = vunpack.c.h.b16 %v3062
    %v4285 = vunpack.c.l.b16 %v3063
    %v4286 = vunpack.c.h.b16 %v3063
    %v4287 = vunpack.c.l.b16 %v3064
    %v4288 = vunpack.c.l.b16 %v3065
    %v4289 = vunpack.c.h.b16 %v3065
    %v4290 = vunpack.c.l.b16 %v3066
    %v4291 = vunpack.c.h.b16 %v3066
    %v4292 = vunpack.c.l.b16 %v3067
    %v4293 = vunpack.c.h.b16 %v3067
    %v4294 = vunpack.c.l.b16 %v3068
    %v4295 = vunpack.c.l.b16 %v3069
    %v4296 = vunpack.c.h.b16 %v3069
    %v4297 = vunpack.c.l.b16 %v3070
    %v4298 = vunpack.c.h.b16 %v3070
    %v4299 = vunpack.c.l.b16 %v3071
    %v4300 = vunpack.c.h.b16 %v3071
    %v4301 = vunpack.c.l.b16 %v3072
    %v4302 = vunpack.c.l.b16 %v3073
    %v4303 = vunpack.c.h.b16 %v3073
    %v4304 = vunpack.c.l.b16 %v3074
    %v4305 = vunpack.c.h.b16 %v3074
    %v4306 = vunpack.c.l.b16 %v3075
    %v4307 = vunpack.c.h.b16 %v3075
    %v4308 = vunpack.c.l.b16 %v3076
    %v4309 = vunpack.c.l.b16 %v3077
    %v4310 = vunpack.c.h.b16 %v3077
    %v4311 = vunpack.c.l.b16 %v3078
    %v4312 = vunpack.c.h.b16 %v3078
    %v4313 = vunpack.c.l.b16 %v3079
    %v4314 = vunpack.c.h.b16 %v3079
    %v4315 = vunpack.c.l.b16 %v3080
    %v4316 = vunpack.c.l.b16 %v3081
    %v4317 = vunpack.c.h.b16 %v3081
    %v4318 = vunpack.c.l.b16 %v3082
    %v4319 = vunpack.c.h.b16 %v3082
    %v4320 = vunpack.c.l.b16 %v3083
    %v4321 = vunpack.c.h.b16 %v3083
    %v4322 = vunpack.c.l.b16 %v3084
    %v4323 = vunpack.c.l.b16 %v3085
    %v4324 = vunpack.c.h.b16 %v3085
    %v4325 = vunpack.c.l.b16 %v3086
    %v4326 = vunpack.c.h.b16 %v3086
    %v4327 = vunpack.c.l.b16 %v3087
    %v4328 = vunpack.c.h.b16 %v3087
    %v4329 = vunpack.c.l.b16 %v3088
    %v4330 = vunpack.c.l.b16 %v3089
    %v4331 = vunpack.c.h.b16 %v3089
    %v4332 = vunpack.c.l.b16 %v3090
    %v4333 = vunpack.c.h.b16 %v3090
    %v4334 = vunpack.c.l.b16 %v3091
    %v4335 = vunpack.c.h.b16 %v3091
    %v4336 = vunpack.c.l.b16 %v3092
    %v4337 = vunpack.c.l.b16 %v3093
    %v4338 = vunpack.c.h.b16 %v3093
    %v4339 = vunpack.c.l.b16 %v3094
    %v4340 = vunpack.c.h.b16 %v3094
    %v4341 = vunpack.c.l.b16 %v3095
    %v4342 = vunpack.c.h.b16 %v3095
    %v4343 = vunpack.c.l.b16 %v3096
    %v4344 = vunpack.c.l.b16 %v3097
    %v4345 = vunpack.c.h.b16 %v3097
    %v4346 = vunpack.c.l.b16 %v3098
    %v4347 = vunpack.c.h.b16 %v3098
    %v4348 = vunpack.c.l.b16 %v3099
    %v4349 = vunpack.c.h.b16 %v3099
    %v4350 = vunpack.c.l.b16 %v3100
    %v4351 = vunpack.c.l.b16 %v3101
    %v4352 = vunpack.c.h.b16 %v3101
    %v4353 = vunpack.c.l.b16 %v3102
    %v4354 = vunpack.c.h.b16 %v3102
    %v4355 = vunpack.c.l.b16 %v3103
    %v4356 = vunpack.c.h.b16 %v3103
    %v4357 = vunpack.c.l.b16 %v3104
    %v4358 = vunpack.c.l.b16 %v3105
    %v4359 = vunpack.c.h.b16 %v3105
    %v4360 = vunpack.c.l.b16 %v3106
    %v4361 = vunpack.c.h.b16 %v3106
    %v4362 = vunpack.c.l.b16 %v3107
    %v4363 = vunpack.c.h.b16 %v3107
    %v4364 = vunpack.c.l.b16 %v3108
    %v4365 = vunpack.c.l.b16 %v3109
    %v4366 = vunpack.c.h.b16 %v3109
    %v4367 = vunpack.c.l.b16 %v3110
    %v4368 = vunpack.c.h.b16 %v3110
    %v4369 = vunpack.c.l.b16 %v3111
    %v4370 = vunpack.c.h.b16 %v3111
    %v4371 = vunpack.c.l.b16 %v3112
    %v4372 = vunpack.c.l.b16 %v3113
    %v4373 = vunpack.c.h.b16 %v3113
    %v4374 = vunpack.c.l.b16 %v3114
    %v4375 = vunpack.c.h.b16 %v3114
    %v4376 = vunpack.c.l.b16 %v3115
    %v4377 = vunpack.c.h.b16 %v3115
    %v4378 = vunpack.c.l.b16 %v3116
    %v4379 = vunpack.c.l.b16 %v3117
    %v4380 = vunpack.c.h.b16 %v3117
    %v4381 = vunpack.c.l.b16 %v3118
    %v4382 = vunpack.c.h.b16 %v3118
    %v4383 = vunpack.c.l.b16 %v3119
    %v4384 = vunpack.c.h.b16 %v3119
    %v4385 = vunpack.c.l.b16 %v3120
    %v4386 = vunpack.c.l.b16 %v3121
    %v4387 = vunpack.c.h.b16 %v3121
    %v4388 = vunpack.c.l.b16 %v3122
    %v4389 = vunpack.c.h.b16 %v3122
    %v4390 = vunpack.c.l.b16 %v3123
    %v4391 = vunpack.c.h.b16 %v3123
    %v4392 = vunpack.c.l.b16 %v3124
    %v4393 = vunpack.c.l.b16 %v3125
    %v4394 = vunpack.c.h.b16 %v3125
    %v4395 = vunpack.c.l.b16 %v3126
    %v4396 = vunpack.c.h.b16 %v3126
    %v4397 = vunpack.c.l.b16 %v3127
    %v4398 = vunpack.c.h.b16 %v3127
    %v4399 = vunpack.c.l.b16 %v3128
    %v4400 = vunpack.c.l.b16 %v3129
    %v4401 = vunpack.c.h.b16 %v3129
    %v4402 = vunpack.c.l.b16 %v3130
    %v4403 = vunpack.c.h.b16 %v3130
    %v4404 = vunpack.c.l.b16 %v3131
    %v4405 = vunpack.c.h.b16 %v3131
    %v4406 = vunpack.c.l.b16 %v3132
    %v4407 = vunpack.c.l.b16 %v3133
    %v4408 = vunpack.c.h.b16 %v3133
    %v4409 = vunpack.c.l.b16 %v3134
    %v4410 = vunpack.c.h.b16 %v3134
    %v4411 = vunpack.c.l.b16 %v3135
    %v4412 = vunpack.c.h.b16 %v3135
    %v4413 = vunpack.c.l.b16 %v3136
    %v4414 = vunpack.c.l.b16 %v3137
    %v4415 = vunpack.c.h.b16 %v3137
    %v4416 = vunpack.c.l.b16 %v3138
    %v4417 = vunpack.c.h.b16 %v3138
    %v4418 = vunpack.c.l.b16 %v3139
    %v4419 = vunpack.c.h.b16 %v3139
    %v4420 = vunpack.c.l.b16 %v3140
    %v4421 = vunpack.c.l.b16 %v3141
    %v4422 = vunpack.c.h.b16 %v3141
    %v4423 = vunpack.c.l.b16 %v3142
    %v4424 = vunpack.c.h.b16 %v3142
    %v4425 = vunpack.c.l.b16 %v3143
    %v4426 = vunpack.c.h.b16 %v3143
    %v4427 = vunpack.c.l.b16 %v3144
    %v4428 = vunpack.c.l.b16 %v3145
    %v4429 = vunpack.c.h.b16 %v3145
    %v4430 = vunpack.c.l.b16 %v3146
    %v4431 = vunpack.c.h.b16 %v3146
    %v4432 = vunpack.c.l.b16 %v3147
    %v4433 = vunpack.c.h.b16 %v3147
    %v4434 = vunpack.c.l.b16 %v3148
    %v4435 = vunpack.c.l.b16 %v3149
    %v4436 = vunpack.c.h.b16 %v3149
    %v4437 = vunpack.c.l.b16 %v3150
    %v4438 = vunpack.c.h.b16 %v3150
    %v4439 = vunpack.c.l.b16 %v3151
    %v4440 = vunpack.c.h.b16 %v3151
    %v4441 = vunpack.c.l.b16 %v3152
    %v4442 = vunpack.c.l.b16 %v3153
    %v4443 = vunpack.c.h.b16 %v3153
    %v4444 = vunpack.c.l.b16 %v3154
    %v4445 = vunpack.c.h.b16 %v3154
    %v4446 = vunpack.c.l.b16 %v3155
    %v4447 = vunpack.c.h.b16 %v3155
    %v4448 = vunpack.c.l.b16 %v3156
    %v4449 = vunpack.c.l.b16 %v3157
    %v4450 = vunpack.c.h.b16 %v3157
    %v4451 = vunpack.c.l.b16 %v3158
    %v4452 = vunpack.c.h.b16 %v3158
    %v4453 = vunpack.c.l.b16 %v3159
    %v4454 = vunpack.c.h.b16 %v3159
    %v4455 = vunpack.c.l.b16 %v3160
    %v4456 = vunpack.c.l.b16 %v3161
    %v4457 = vunpack.c.h.b16 %v3161
    %v4458 = vunpack.c.l.b16 %v3162
    %v4459 = vunpack.c.h.b16 %v3162
    %v4460 = vunpack.c.l.b16 %v3163
    %v4461 = vunpack.c.h.b16 %v3163
    %v4462 = vunpack.c.l.b16 %v3164
    %v4463 = vunpack.c.l.b16 %v3165
    %v4464 = vunpack.c.h.b16 %v3165
    %v4465 = vunpack.c.l.b16 %v3166
    %v4466 = vunpack.c.h.b16 %v3166
    %v4467 = vunpack.c.l.b16 %v3167
    %v4468 = vunpack.c.h.b16 %v3167
    %v4469 = vunpack.c.l.b16 %v3168
    %v4470 = vunpack.c.l.b16 %v3169
    %v4471 = vunpack.c.h.b16 %v3169
    %v4472 = vunpack.c.l.b16 %v3170
    %v4473 = vunpack.c.h.b16 %v3170
    %v4474 = vunpack.c.l.b16 %v3171
    %v4475 = vunpack.c.h.b16 %v3171
    %v4476 = vunpack.c.l.b16 %v3172
    %v4477 = vunpack.c.l.b16 %v3173
    %v4478 = vunpack.c.h.b16 %v3173
    %v4479 = vunpack.c.l.b16 %v3174
    %v4480 = vunpack.c.h.b16 %v3174
    %v4481 = vunpack.c.l.b16 %v3175
    %v4482 = vunpack.c.h.b16 %v3175
    %v4483 = vunpack.c.l.b16 %v3176
    %v4484 = vunpack.c.l.b16 %v3177
    %v4485 = vunpack.c.h.b16 %v3177
    %v4486 = vunpack.c.l.b16 %v3178
    %v4487 = vunpack.c.h.b16 %v3178
    %v4488 = vunpack.c.l.b16 %v3179
    %v4489 = vunpack.c.h.b16 %v3179
    %v4490 = vunpack.c.l.b16 %v3180
    %v4491 = vunpack.c.l.b16 %v3181
    %v4492 = vunpack.c.h.b16 %v3181
    %v4493 = vunpack.c.l.b16 %v3182
    %v4494 = vunpack.c.h.b16 %v3182
    %v4495 = vunpack.c.l.b16 %v3183
    %v4496 = vunpack.c.h.b16 %v3183
    %v4497 = vunpack.c.l.b16 %v3184
    %v4498 = vunpack.c.l.b16 %v3185
    %v4499 = vunpack.c.h.b16 %v3185
    %v4500 = vunpack.c.l.b16 %v3186
    %v4501 = vunpack.c.h.b16 %v3186
    %v4502 = vunpack.c.l.b16 %v3187
    %v4503 = vunpack.c.h.b16 %v3187
    %v4504 = vunpack.c.l.b16 %v3188
    %v4505 = vunpack.c.l.b16 %v3189
    %v4506 = vunpack.c.h.b16 %v3189
    %v4507 = vunpack.c.l.b16 %v3190
    %v4508 = vunpack.c.h.b16 %v3190
    %v4509 = vunpack.c.l.b16 %v3191
    %v4510 = vunpack.c.h.b16 %v3191
    %v4511 = vunpack.c.l.b16 %v3192
    %v4512 = vunpack.c.l.b16 %v3193
    %v4513 = vunpack.c.h.b16 %v3193
    %v4514 = vunpack.c.l.b16 %v3194
    %v4515 = vunpack.c.h.b16 %v3194
    %v4516 = vunpack.c.l.b16 %v3195
    %v4517 = vunpack.c.h.b16 %v3195
    %v4518 = vunpack.c.l.b16 %v3196
    %v4519 = vunpack.c.l.b16 %v3197
    %v4520 = vunpack.c.h.b16 %v3197
    %v4521 = vunpack.c.l.b16 %v3198
    %v4522 = vunpack.c.h.b16 %v3198
    %v4523 = vunpack.c.l.b16 %v3199
    %v4524 = vunpack.c.h.b16 %v3199
    %v4525 = vunpack.c.l.b16 %v3200
    %v4526 = vunpack.c.l.b16 %v3201
    %v4527 = vunpack.c.h.b16 %v3201
    %v4528 = vunpack.c.l.b16 %v3202
    %v4529 = vunpack.c.h.b16 %v3202
    %v4530 = vunpack.c.l.b16 %v3203
    %v4531 = vunpack.c.h.b16 %v3203
    %v4532 = vunpack.c.l.b16 %v3204
    %v4533 = vunpack.c.l.b16 %v3205
    %v4534 = vunpack.c.h.b16 %v3205
    %v4535 = vunpack.c.l.b16 %v3206
    %v4536 = vunpack.c.h.b16 %v3206
    %v4537 = vunpack.c.l.b16 %v3207
    %v4538 = vunpack.c.h.b16 %v3207
    %v4539 = vunpack.c.l.b16 %v3208
    %v4540 = vunpack.c.l.b16 %v3209
    %v4541 = vunpack.c.h.b16 %v3209
    %v4542 = vunpack.c.l.b16 %v3210
    %v4543 = vunpack.c.h.b16 %v3210
    %v4544 = vunpack.c.l.b16 %v3211
    %v4545 = vunpack.c.h.b16 %v3211
    %v4546 = vunpack.c.l.b16 %v3212
    %v4547 = vunpack.c.l.b16 %v3213
    %v4548 = vunpack.c.h.b16 %v3213
    %v4549 = vunpack.c.l.b16 %v3214
    %v4550 = vunpack.c.h.b16 %v3214
    %v4551 = vunpack.c.l.b16 %v3215
    %v4552 = vunpack.c.h.b16 %v3215
    %v4553 = vunpack.c.l.b16 %v3216
    %v4554 = vunpack.c.l.b16 %v3217
    %v4555 = vunpack.c.h.b16 %v3217
    %v4556 = vunpack.c.l.b16 %v3218
    %v4557 = vunpack.c.h.b16 %v3218
    %v4558 = vunpack.c.l.b16 %v3219
    %v4559 = vunpack.c.h.b16 %v3219
    %v4560 = vunpack.c.l.b16 %v3220
    %v4561 = vunpack.c.l.b16 %v3221
    %v4562 = vunpack.c.h.b16 %v3221
    %v4563 = vunpack.c.l.b16 %v3222
    %v4564 = vunpack.c.h.b16 %v3222
    %v4565 = vunpack.c.l.b16 %v3223
    %v4566 = vunpack.c.h.b16 %v3223
    %v4567 = vunpack.c.l.b16 %v3224
    %v4568 = vunpack.c.l.b16 %v3225
    %v4569 = vunpack.c.h.b16 %v3225
    %v4570 = vunpack.c.l.b16 %v3226
    %v4571 = vunpack.c.h.b16 %v3226
    %v4572 = vunpack.c.l.b16 %v3227
    %v4573 = vunpack.c.h.b16 %v3227
    %v4574 = vunpack.c.l.b16 %v3228
    %v4575 = vunpack.c.l.b16 %v3229
    %v4576 = vunpack.c.h.b16 %v3229
    %v4577 = vunpack.c.l.b16 %v3230
    %v4578 = vunpack.c.h.b16 %v3230
    %v4579 = vunpack.c.l.b16 %v3231
    %v4580 = vunpack.c.h.b16 %v3231
    %v4581 = vunpack.c.l.b16 %v3232
    %v4582 = vunpack.c.l.b16 %v3233
    %v4583 = vunpack.c.h.b16 %v3233
    %v4584 = vunpack.c.l.b16 %v3234
    %v4585 = vunpack.c.h.b16 %v3234
    %v4586 = vunpack.c.l.b16 %v3235
    %v4587 = vunpack.c.h.b16 %v3235
    %v4588 = vunpack.c.l.b16 %v3236
    %v4589 = vunpack.c.l.b16 %v3237
    %v4590 = vunpack.c.h.b16 %v3237
    %v4591 = vunpack.c.l.b16 %v3238
    %v4592 = vunpack.c.h.b16 %v3238
    %v4593 = vunpack.c.l.b16 %v3239
    %v4594 = vunpack.c.h.b16 %v3239
    %v4595 = vunpack.c.l.b16 %v3240
    %v4596 = vunpack.c.l.b16 %v3241
    %v4597 = vunpack.c.h.b16 %v3241
    %v4598 = vunpack.c.l.b16 %v3242
    %v4599 = vunpack.c.h.b16 %v3242
    %v4600 = vunpack.c.l.b16 %v3243
    %v4601 = vunpack.c.h.b16 %v3243
    %v4602 = vunpack.c.l.b16 %v3244
    %v4603 = vunpack.c.l.b16 %v3245
    %v4604 = vunpack.c.h.b16 %v3245
    %v4605 = vunpack.c.l.b16 %v3246
    %v4606 = vunpack.c.h.b16 %v3246
    %v4607 = vunpack.c.l.b16 %v3247
    %v4608 = vunpack.c.h.b16 %v3247
    %v4609 = vunpack.c.l.b16 %v3248
    %v4610 = vunpack.c.l.b16 %v3249
    %v4611 = vunpack.c.h.b16 %v3249
    %v4612 = vunpack.c.l.b16 %v3250
    %v4613 = vunpack.c.h.b16 %v3250
    %v4614 = vunpack.c.l.b16 %v3251
    %v4615 = vunpack.c.h.b16 %v3251
    %v4616 = vunpack.c.l.b16 %v3252
    %v4617 = vunpack.c.l.b16 %v3253
    %v4618 = vunpack.c.h.b16 %v3253
    %v4619 = vunpack.c.l.b16 %v3254
    %v4620 = vunpack.c.h.b16 %v3254
    %v4621 = vunpack.c.l.b16 %v3255
    %v4622 = vunpack.c.h.b16 %v3255
    %v4623 = vunpack.c.l.b16 %v3256
    %v4624 = vunpack.c.l.b16 %v3257
    %v4625 = vunpack.c.h.b16 %v3257
    %v4626 = vunpack.c.l.b16 %v3258
    %v4627 = vunpack.c.h.b16 %v3258
    %v4628 = vunpack.c.l.b16 %v3259
    %v4629 = vunpack.c.h.b16 %v3259
    %v4630 = vunpack.c.l.b16 %v3260
    %v4631 = vunpack.c.l.b16 %v3261
    %v4632 = vunpack.c.h.b16 %v3261
    %v4633 = vunpack.c.l.b16 %v3262
    %v4634 = vunpack.c.h.b16 %v3262
    %v4635 = vunpack.c.l.b16 %v3263
    %v4636 = vunpack.c.h.b16 %v3263
    %v4637 = vunpack.c.l.b16 %v3264
    %v4638 = vunpack.c.l.b16 %v3265
    %v4639 = vunpack.c.h.b16 %v3265
    %v4640 = vunpack.c.l.b16 %v3266
    %v4641 = vunpack.c.h.b16 %v3266
    %v4642 = vunpack.c.l.b16 %v3267
    %v4643 = vunpack.c.h.b16 %v3267
    %v4644 = vunpack.c.l.b16 %v3268
    %v4645 = vunpack.c.l.b16 %v3269
    %v4646 = vunpack.c.h.b16 %v3269
    %v4647 = vunpack.c.l.b16 %v3270
    %v4648 = vunpack.c.h.b16 %v3270
    %v4649 = vunpack.c.l.b16 %v3271
    %v4650 = vunpack.c.h.b16 %v3271
    %v4651 = vunpack.c.l.b16 %v3272
    %v4652 = vunpack.c.l.b16 %v3273
    %v4653 = vunpack.c.h.b16 %v3273
    %v4654 = vunpack.c.l.b16 %v3274
    %v4655 = vunpack.c.h.b16 %v3274
    %v4656 = vunpack.c.l.b16 %v3275
    %v4657 = vunpack.c.h.b16 %v3275
    %v4658 = vunpack.c.l.b16 %v3276
    %v4659 = vunpack.c.l.b16 %v3277
    %v4660 = vunpack.c.h.b16 %v3277
    %v4661 = vunpack.c.l.b16 %v3278
    %v4662 = vunpack.c.h.b16 %v3278
    %v4663 = vunpack.c.l.b16 %v3279
    %v4664 = vunpack.c.h.b16 %v3279
    %v4665 = vunpack.c.l.b16 %v3280
    %v4666 = vunpack.c.l.b16 %v3281
    %v4667 = vunpack.c.h.b16 %v3281
    %v4668 = vunpack.c.l.b16 %v3282
    %v4669 = vunpack.c.h.b16 %v3282
    %v4670 = vunpack.c.l.b16 %v3283
    %v4671 = vunpack.c.h.b16 %v3283
    %v4672 = vunpack.c.l.b16 %v3284
    %v4673 = vunpack.c.l.b16 %v3285
    %v4674 = vunpack.c.h.b16 %v3285
    %v4675 = vunpack.c.l.b16 %v3286
    %v4676 = vunpack.c.h.b16 %v3286
    %v4677 = vunpack.c.l.b16 %v3287
    %v4678 = vunpack.c.h.b16 %v3287
    %v4679 = vunpack.c.l.b16 %v3288
    %v4680 = vunpack.c.l.b16 %v3289
    %v4681 = vunpack.c.h.b16 %v3289
    %v4682 = vunpack.c.l.b16 %v3290
    %v4683 = vunpack.c.h.b16 %v3290
    %v4684 = vunpack.c.l.b16 %v3291
    %v4685 = vunpack.c.h.b16 %v3291
    %v4686 = vunpack.c.l.b16 %v3292
    %v4687 = vunpack.c.l.b16 %v3293
    %v4688 = vunpack.c.h.b16 %v3293
    %v4689 = vunpack.c.l.b16 %v3294
    %v4690 = vunpack.c.h.b16 %v3294
    %v4691 = vunpack.c.l.b16 %v3295
    %v4692 = vunpack.c.h.b16 %v3295
    %v4693 = vunpack.c.l.b16 %v3296
    %v4694 = vunpack.c.l.b16 %v3297
    %v4695 = vunpack.c.h.b16 %v3297
    %v4696 = vunpack.c.l.b16 %v3298
    %v4697 = vunpack.c.h.b16 %v3298
    %v4698 = vunpack.c.l.b16 %v3299
    %v4699 = vunpack.c.h.b16 %v3299
    %v4700 = vunpack.c.l.b16 %v3300
    %v4701 = vunpack.c.l.b16 %v3301
    %v4702 = vunpack.c.h.b16 %v3301
    %v4703 = vunpack.c.l.b16 %v3302
    %v4704 = vunpack.c.h.b16 %v3302
    %v4705 = vunpack.c.l.b16 %v3303
    %v4706 = vunpack.c.h.b16 %v3303
    %v4707 = vunpack.c.l.b16 %v3304
    %v4708 = vunpack.c.l.b16 %v3305
    %v4709 = vunpack.c.h.b16 %v3305
    %v4710 = vunpack.c.l.b16 %v3306
    %v4711 = vunpack.c.h.b16 %v3306
    %v4712 = vunpack.c.l.b16 %v3307
    %v4713 = vunpack.c.h.b16 %v3307
    %v4714 = vunpack.c.l.b16 %v3308
    %v4715 = vunpack.c.l.b16 %v3309
    %v4716 = vunpack.c.h.b16 %v3309
    %v4717 = vunpack.c.l.b16 %v3310
    %v4718 = vunpack.c.h.b16 %v3310
    %v4719 = vunpack.c.l.b16 %v3311
    %v4720 = vunpack.c.h.b16 %v3311
    %v4721 = vunpack.c.l.b16 %v3312
    %v4722 = vunpack.c.l.b16 %v3313
    %v4723 = vunpack.c.h.b16 %v3313
    %v4724 = vunpack.c.l.b16 %v3314
    %v4725 = vunpack.c.h.b16 %v3314
    %v4726 = vunpack.c.l.b16 %v3315
    %v4727 = vunpack.c.h.b16 %v3315
    %v4728 = vunpack.c.l.b16 %v3316
    %v4729 = vunpack.c.l.b16 %v3317
    %v4730 = vunpack.c.h.b16 %v3317
    %v4731 = vunpack.c.l.b16 %v3318
    %v4732 = vunpack.c.h.b16 %v3318
    %v4733 = vunpack.c.l.b16 %v3319
    %v4734 = vunpack.c.h.b16 %v3319
    %v4735 = vunpack.c.l.b16 %v3320
    %v4736 = vunpack.c.l.b16 %v3321
    %v4737 = vunpack.c.h.b16 %v3321
    %v4738 = vunpack.c.l.b16 %v3322
    %v4739 = vunpack.c.h.b16 %v3322
    %v4740 = vunpack.c.l.b16 %v3323
    %v4741 = vunpack.c.h.b16 %v3323
    %v4742 = vunpack.c.l.b16 %v3324
    %v4743 = vunpack.c.l.b16 %v3325
    %v4744 = vunpack.c.h.b16 %v3325
    %v4745 = vunpack.c.l.b16 %v3326
    %v4746 = vunpack.c.h.b16 %v3326
    %v4747 = vunpack.c.l.b16 %v3327
    %v4748 = vunpack.c.h.b16 %v3327
    %v4749 = vunpack.c.l.b16 %v3328
    %v4750 = vunpack.c.l.b16 %v3329
    %v4751 = vunpack.c.h.b16 %v3329
    %v4752 = vunpack.c.l.b16 %v3330
    %v4753 = vunpack.c.h.b16 %v3330
    %v4754 = vunpack.c.l.b16 %v3331
    %v4755 = vunpack.c.h.b16 %v3331
    %v4756 = vunpack.c.l.b16 %v3332
    %v4757 = vunpack.c.l.b16 %v3333
    %v4758 = vunpack.c.h.b16 %v3333
    %v4759 = vunpack.c.l.b16 %v3334
    %v4760 = vunpack.c.h.b16 %v3334
    %v4761 = vunpack.c.l.b16 %v3335
    %v4762 = vunpack.c.h.b16 %v3335
    %v4763 = vunpack.c.l.b16 %v3336
    %v4764 = vunpack.c.l.b16 %v3337
    %v4765 = vunpack.c.h.b16 %v3337
    %v4766 = vunpack.c.l.b16 %v3338
    %v4767 = vunpack.c.h.b16 %v3338
    %v4768 = vunpack.c.l.b16 %v3339
    %v4769 = vunpack.c.h.b16 %v3339
    %v4770 = vunpack.c.l.b16 %v3340
    %v4771 = vunpack.c.l.b16 %v3341
    %v4772 = vunpack.c.h.b16 %v3341
    %v4773 = vunpack.c.l.b16 %v3342
    %v4774 = vunpack.c.h.b16 %v3342
    %v4775 = vunpack.c.l.b16 %v3343
    %v4776 = vunpack.c.h.b16 %v3343
    %v4777 = vunpack.c.l.b16 %v3344
    %v4778 = vunpack.c.l.b16 %v3345
    %v4779 = vunpack.c.h.b16 %v3345
    %v4780 = vunpack.c.l.b16 %v3346
    %v4781 = vunpack.c.h.b16 %v3346
    %v4782 = vunpack.c.l.b16 %v3347
    %v4783 = vunpack.c.h.b16 %v3347
    %v4784 = vunpack.c.l.b16 %v3348
    %v4785 = vunpack.c.l.b16 %v3349
    %v4786 = vunpack.c.h.b16 %v3349
    %v4787 = vunpack.c.l.b16 %v3350
    %v4788 = vunpack.c.h.b16 %v3350
    %v4789 = vunpack.c.l.b16 %v3351
    %v4790 = vunpack.c.h.b16 %v3351
    %v4791 = vunpack.c.l.b16 %v3352
    %v4792 = vunpack.c.l.b16 %v3353
    %v4793 = vunpack.c.h.b16 %v3353
    %v4794 = vunpack.c.l.b16 %v3354
    %v4795 = vunpack.c.h.b16 %v3354
    %v4796 = vunpack.c.l.b16 %v3355
    %v4797 = vunpack.c.h.b16 %v3355
    %v4798 = vunpack.c.l.b16 %v3356
    %v4799 = vunpack.c.l.b16 %v3357
    %v4800 = vunpack.c.h.b16 %v3357
    %v4801 = vunpack.c.l.b16 %v3358
    %v4802 = vunpack.c.h.b16 %v3358
    %v4803 = vunpack.c.l.b16 %v3359
    %v4804 = vunpack.c.h.b16 %v3359
    %v4805 = vunpack.c.l.b16 %v3360
    %v4806 = vpack.c.b16 %v3917, %v3910
    %v4807 = vpack.c.b16 %v3918, %v3911
    %v4808 = vpack.c.b16 %v3919, %v3912
    %v4809 = vpack.c.b16 %v3920, %v3913
    %v4810 = vpack.c.b16 %v3921, %v3914
    %v4811 = vpack.c.b16 %v3922, %v3915
    %v4812 = vpack.c.b16 %v3923, %v3916
    %v4813 = vpack.c.b16 %v3931, %v3924
    %v4814 = vpack.c.b16 %v3932, %v3925
    %v4815 = vpack.c.b16 %v3933, %v3926
    %v4816 = vpack.c.b16 %v3934, %v3927
    %v4817 = vpack.c.b16 %v3935, %v3928
    %v4818 = vpack.c.b16 %v3936, %v3929
    %v4819 = vpack.c.b16 %v3937, %v3930
    %v4820 = vpack.c.b16 %v3945, %v3938
    %v4821 = vpack.c.b16 %v3946, %v3939
    %v4822 = vpack.c.b16 %v3947, %v3940
    %v4823 = vpack.c.b16 %v3948, %v3941
    %v4824 = vpack.c.b16 %v3949, %v3942
    %v4825 = vpack.c.b16 %v3950, %v3943
    %v4826 = vpack.c.b16 %v3951, %v3944
    %v4827 = vpack.c.b16 %v3959, %v3952
    %v4828 = vpack.c.b16 %v3960, %v3953
    %v4829 = vpack.c.b16 %v3961, %v3954
    %v4830 = vpack.c.b16 %v3962, %v3955
    %v4831 = vpack.c.b16 %v3963, %v3956
    %v4832 = vpack.c.b16 %v3964, %v3957
    %v4833 = vpack.c.b16 %v3965, %v3958
    %v4834 = vpack.c.b16 %v3973, %v3966
    %v4835 = vpack.c.b16 %v3974, %v3967
    %v4836 = vpack.c.b16 %v3975, %v3968
    %v4837 = vpack.c.b16 %v3976, %v3969
    %v4838 = vpack.c.b16 %v3977, %v3970
    %v4839 = vpack.c.b16 %v3978, %v3971
    %v4840 = vpack.c.b16 %v3979, %v3972
    %v4841 = vpack.c.b16 %v3987, %v3980
    %v4842 = vpack.c.b16 %v3988, %v3981
    %v4843 = vpack.c.b16 %v3989, %v3982
    %v4844 = vpack.c.b16 %v3990, %v3983
    %v4845 = vpack.c.b16 %v3991, %v3984
    %v4846 = vpack.c.b16 %v3992, %v3985
    %v4847 = vpack.c.b16 %v3993, %v3986
    %v4848 = vpack.c.b16 %v4001, %v3994
    %v4849 = vpack.c.b16 %v4002, %v3995
    %v4850 = vpack.c.b16 %v4003, %v3996
    %v4851 = vpack.c.b16 %v4004, %v3997
    %v4852 = vpack.c.b16 %v4005, %v3998
    %v4853 = vpack.c.b16 %v4006, %v3999
    %v4854 = vpack.c.b16 %v4007, %v4000
    %v4855 = vpack.c.b16 %v4015, %v4008
    %v4856 = vpack.c.b16 %v4016, %v4009
    %v4857 = vpack.c.b16 %v4017, %v4010
    %v4858 = vpack.c.b16 %v4018, %v4011
    %v4859 = vpack.c.b16 %v4019, %v4012
    %v4860 = vpack.c.b16 %v4020, %v4013
    %v4861 = vpack.c.b16 %v4021, %v4014
    %v4862 = vpack.c.b16 %v4029, %v4022
    %v4863 = vpack.c.b16 %v4030, %v4023
    %v4864 = vpack.c.b16 %v4031, %v4024
    %v4865 = vpack.c.b16 %v4032, %v4025
    %v4866 = vpack.c.b16 %v4033, %v4026
    %v4867 = vpack.c.b16 %v4034, %v4027
    %v4868 = vpack.c.b16 %v4035, %v4028
    %v4869 = vpack.c.b16 %v4043, %v4036
    %v4870 = vpack.c.b16 %v4044, %v4037
    %v4871 = vpack.c.b16 %v4045, %v4038
    %v4872 = vpack.c.b16 %v4046, %v4039
    %v4873 = vpack.c.b16 %v4047, %v4040
    %v4874 = vpack.c.b16 %v4048, %v4041
    %v4875 = vpack.c.b16 %v4049, %v4042
    %v4876 = vpack.c.b16 %v4057, %v4050
    %v4877 = vpack.c.b16 %v4058, %v4051
    %v4878 = vpack.c.b16 %v4059, %v4052
    %v4879 = vpack.c.b16 %v4060, %v4053
    %v4880 = vpack.c.b16 %v4061, %v4054
    %v4881 = vpack.c.b16 %v4062, %v4055
    %v4882 = vpack.c.b16 %v4063, %v4056
    %v4883 = vpack.c.b16 %v4071, %v4064
    %v4884 = vpack.c.b16 %v4072, %v4065
    %v4885 = vpack.c.b16 %v4073, %v4066
    %v4886 = vpack.c.b16 %v4074, %v4067
    %v4887 = vpack.c.b16 %v4075, %v4068
    %v4888 = vpack.c.b16 %v4076, %v4069
    %v4889 = vpack.c.b16 %v4077, %v4070
    %v4890 = vpack.c.b16 %v4085, %v4078
    %v4891 = vpack.c.b16 %v4086, %v4079
    %v4892 = vpack.c.b16 %v4087, %v4080
    %v4893 = vpack.c.b16 %v4088, %v4081
    %v4894 = vpack.c.b16 %v4089, %v4082
    %v4895 = vpack.c.b16 %v4090, %v4083
    %v4896 = vpack.c.b16 %v4091, %v4084
    %v4897 = vpack.c.b16 %v4099, %v4092
    %v4898 = vpack.c.b16 %v4100, %v4093
    %v4899 = vpack.c.b16 %v4101, %v4094
    %v4900 = vpack.c.b16 %v4102, %v4095
    %v4901 = vpack.c.b16 %v4103, %v4096
    %v4902 = vpack.c.b16 %v4104, %v4097
    %v4903 = vpack.c.b16 %v4105, %v4098
    %v4904 = vpack.c.b16 %v4113, %v4106
    %v4905 = vpack.c.b16 %v4114, %v4107
    %v4906 = vpack.c.b16 %v4115, %v4108
    %v4907 = vpack.c.b16 %v4116, %v4109
    %v4908 = vpack.c.b16 %v4117, %v4110
    %v4909 = vpack.c.b16 %v4118, %v4111
    %v4910 = vpack.c.b16 %v4119, %v4112
    %v4911 = vpack.c.b16 %v4127, %v4120
    %v4912 = vpack.c.b16 %v4128, %v4121
    %v4913 = vpack.c.b16 %v4129, %v4122
    %v4914 = vpack.c.b16 %v4130, %v4123
    %v4915 = vpack.c.b16 %v4131, %v4124
    %v4916 = vpack.c.b16 %v4132, %v4125
    %v4917 = vpack.c.b16 %v4133, %v4126
    %v4918 = vpack.c.b16 %v4141, %v4134
    %v4919 = vpack.c.b16 %v4142, %v4135
    %v4920 = vpack.c.b16 %v4143, %v4136
    %v4921 = vpack.c.b16 %v4144, %v4137
    %v4922 = vpack.c.b16 %v4145, %v4138
    %v4923 = vpack.c.b16 %v4146, %v4139
    %v4924 = vpack.c.b16 %v4147, %v4140
    %v4925 = vpack.c.b16 %v4155, %v4148
    %v4926 = vpack.c.b16 %v4156, %v4149
    %v4927 = vpack.c.b16 %v4157, %v4150
    %v4928 = vpack.c.b16 %v4158, %v4151
    %v4929 = vpack.c.b16 %v4159, %v4152
    %v4930 = vpack.c.b16 %v4160, %v4153
    %v4931 = vpack.c.b16 %v4161, %v4154
    %v4932 = vpack.c.b16 %v4169, %v4162
    %v4933 = vpack.c.b16 %v4170, %v4163
    %v4934 = vpack.c.b16 %v4171, %v4164
    %v4935 = vpack.c.b16 %v4172, %v4165
    %v4936 = vpack.c.b16 %v4173, %v4166
    %v4937 = vpack.c.b16 %v4174, %v4167
    %v4938 = vpack.c.b16 %v4175, %v4168
    %v4939 = vpack.c.b16 %v4183, %v4176
    %v4940 = vpack.c.b16 %v4184, %v4177
    %v4941 = vpack.c.b16 %v4185, %v4178
    %v4942 = vpack.c.b16 %v4186, %v4179
    %v4943 = vpack.c.b16 %v4187, %v4180
    %v4944 = vpack.c.b16 %v4188, %v4181
    %v4945 = vpack.c.b16 %v4189, %v4182
    %v4946 = vpack.c.b16 %v4197, %v4190
    %v4947 = vpack.c.b16 %v4198, %v4191
    %v4948 = vpack.c.b16 %v4199, %v4192
    %v4949 = vpack.c.b16 %v4200, %v4193
    %v4950 = vpack.c.b16 %v4201, %v4194
    %v4951 = vpack.c.b16 %v4202, %v4195
    %v4952 = vpack.c.b16 %v4203, %v4196
    %v4953 = vpack.c.b16 %v4211, %v4204
    %v4954 = vpack.c.b16 %v4212, %v4205
    %v4955 = vpack.c.b16 %v4213, %v4206
    %v4956 = vpack.c.b16 %v4214, %v4207
    %v4957 = vpack.c.b16 %v4215, %v4208
    %v4958 = vpack.c.b16 %v4216, %v4209
    %v4959 = vpack.c.b16 %v4217, %v4210
    %v4960 = vpack.c.b16 %v4225, %v4218
    %v4961 = vpack.c.b16 %v4226, %v4219
    %v4962 = vpack.c.b16 %v4227, %v4220
    %v4963 = vpack.c.b16 %v4228, %v4221
    %v4964 = vpack.c.b16 %v4229, %v4222
    %v4965 = vpack.c.b16 %v4230, %v4223
    %v4966 = vpack.c.b16 %v4231, %v4224
    %v4967 = vpack.c.b16 %v4239, %v4232
    %v4968 = vpack.c.b16 %v4240, %v4233
    %v4969 = vpack.c.b16 %v4241, %v4234
    %v4970 = vpack.c.b16 %v4242, %v4235
    %v4971 = vpack.c.b16 %v4243, %v4236
    %v4972 = vpack.c.b16 %v4244, %v4237
    %v4973 = vpack.c.b16 %v4245, %v4238
    %v4974 = vpack.c.b16 %v4253, %v4246
    %v4975 = vpack.c.b16 %v4254, %v4247
    %v4976 = vpack.c.b16 %v4255, %v4248
    %v4977 = vpack.c.b16 %v4256, %v4249
    %v4978 = vpack.c.b16 %v4257, %v4250
    %v4979 = vpack.c.b16 %v4258, %v4251
    %v4980 = vpack.c.b16 %v4259, %v4252
    %v4981 = vpack.c.b16 %v4267, %v4260
    %v4982 = vpack.c.b16 %v4268, %v4261
    %v4983 = vpack.c.b16 %v4269, %v4262
    %v4984 = vpack.c.b16 %v4270, %v4263
    %v4985 = vpack.c.b16 %v4271, %v4264
    %v4986 = vpack.c.b16 %v4272, %v4265
    %v4987 = vpack.c.b16 %v4273, %v4266
    %v4988 = vpack.c.b16 %v4281, %v4274
    %v4989 = vpack.c.b16 %v4282, %v4275
    %v4990 = vpack.c.b16 %v4283, %v4276
    %v4991 = vpack.c.b16 %v4284, %v4277
    %v4992 = vpack.c.b16 %v4285, %v4278
    %v4993 = vpack.c.b16 %v4286, %v4279
    %v4994 = vpack.c.b16 %v4287, %v4280
    %v4995 = vpack.c.b16 %v4295, %v4288
    %v4996 = vpack.c.b16 %v4296, %v4289
    %v4997 = vpack.c.b16 %v4297, %v4290
    %v4998 = vpack.c.b16 %v4298, %v4291
    %v4999 = vpack.c.b16 %v4299, %v4292
    %v5000 = vpack.c.b16 %v4300, %v4293
    %v5001 = vpack.c.b16 %v4301, %v4294
    %v5002 = vpack.c.b16 %v4309, %v4302
    %v5003 = vpack.c.b16 %v4310, %v4303
    %v5004 = vpack.c.b16 %v4311, %v4304
    %v5005 = vpack.c.b16 %v4312, %v4305
    %v5006 = vpack.c.b16 %v4313, %v4306
    %v5007 = vpack.c.b16 %v4314, %v4307
    %v5008 = vpack.c.b16 %v4315, %v4308
    %v5009 = vpack.c.b16 %v4323, %v4316
    %v5010 = vpack.c.b16 %v4324, %v4317
    %v5011 = vpack.c.b16 %v4325, %v4318
    %v5012 = vpack.c.b16 %v4326, %v4319
    %v5013 = vpack.c.b16 %v4327, %v4320
    %v5014 = vpack.c.b16 %v4328, %v4321
    %v5015 = vpack.c.b16 %v4329, %v4322
    %v5016 = vpack.c.b16 %v4337, %v4330
    %v5017 = vpack.c.b16 %v4338, %v4331
    %v5018 = vpack.c.b16 %v4339, %v4332
    %v5019 = vpack.c.b16 %v4340, %v4333
    %v5020 = vpack.c.b16 %v4341, %v4334
    %v5021 = vpack.c.b16 %v4342, %v4335
    %v5022 = vpack.c.b16 %v4343, %v4336
    %v5023 = vpack.c.b16 %v4351, %v4344
    %v5024 = vpack.c.b16 %v4352, %v4345
    %v5025 = vpack.c.b16 %v4353, %v4346
    %v5026 = vpack.c.b16 %v4354, %v4347
    %v5027 = vpack.c.b16 %v4355, %v4348
    %v5028 = vpack.c.b16 %v4356, %v4349
    %v5029 = vpack.c.b16 %v4357, %v4350
    %v5030 = vpack.c.b16 %v4365, %v4358
    %v5031 = vpack.c.b16 %v4366, %v4359
    %v5032 = vpack.c.b16 %v4367, %v4360
    %v5033 = vpack.c.b16 %v4368, %v4361
    %v5034 = vpack.c.b16 %v4369, %v4362
    %v5035 = vpack.c.b16 %v4370, %v4363
    %v5036 = vpack.c.b16 %v4371, %v4364
    %v5037 = vpack.c.b16 %v4379, %v4372
    %v5038 = vpack.c.b16 %v4380, %v4373
    %v5039 = vpack.c.b16 %v4381, %v4374
    %v5040 = vpack.c.b16 %v4382, %v4375
    %v5041 = vpack.c.b16 %v4383, %v4376
    %v5042 = vpack.c.b16 %v4384, %v4377
    %v5043 = vpack.c.b16 %v4385, %v4378
    %v5044 = vpack.c.b16 %v4393, %v4386
    %v5045 = vpack.c.b16 %v4394, %v4387
    %v5046 = vpack.c.b16 %v4395, %v4388
    %v5047 = vpack.c.b16 %v4396, %v4389
    %v5048 = vpack.c.b16 %v4397, %v4390
    %v5049 = vpack.c.b16 %v4398, %v4391
    %v5050 = vpack.c.b16 %v4399, %v4392
    %v5051 = vpack.c.b16 %v4407, %v4400
    %v5052 = vpack.c.b16 %v4408, %v4401
    %v5053 = vpack.c.b16 %v4409, %v4402
    %v5054 = vpack.c.b16 %v4410, %v4403
    %v5055 = vpack.c.b16 %v4411, %v4404
    %v5056 = vpack.c.b16 %v4412, %v4405
    %v5057 = vpack.c.b16 %v4413, %v4406
    %v5058 = vpack.c.b16 %v4421, %v4414
    %v5059 = vpack.c.b16 %v4422, %v4415
    %v5060 = vpack.c.b16 %v4423, %v4416
    %v5061 = vpack.c.b16 %v4424, %v4417
    %v5062 = vpack.c.b16 %v4425, %v4418
    %v5063 = vpack.c.b16 %v4426, %v4419
    %v5064 = vpack.c.b16 %v4427, %v4420
    %v5065 = vpack.c.b16 %v4435, %v4428
    %v5066 = vpack.c.b16 %v4436, %v4429
    %v5067 = vpack.c.b16 %v4437, %v4430
    %v5068 = vpack.c.b16 %v4438, %v4431
    %v5069 = vpack.c.b16 %v4439, %v4432
    %v5070 = vpack.c.b16 %v4440, %v4433
    %v5071 = vpack.c.b16 %v4441, %v4434
    %v5072 = vpack.c.b16 %v4449, %v4442
    %v5073 = vpack.c.b16 %v4450, %v4443
    %v5074 = vpack.c.b16 %v4451, %v4444
    %v5075 = vpack.c.b16 %v4452, %v4445
    %v5076 = vpack.c.b16 %v4453, %v4446
    %v5077 = vpack.c.b16 %v4454, %v4447
    %v5078 = vpack.c.b16 %v4455, %v4448
    %v5079 = vpack.c.b16 %v4463, %v4456
    %v5080 = vpack.c.b16 %v4464, %v4457
    %v5081 = vpack.c.b16 %v4465, %v4458
    %v5082 = vpack.c.b16 %v4466, %v4459
    %v5083 = vpack.c.b16 %v4467, %v4460
    %v5084 = vpack.c.b16 %v4468, %v4461
    %v5085 = vpack.c.b16 %v4469, %v4462
    %v5086 = vpack.c.b16 %v4477, %v4470
    %v5087 = vpack.c.b16 %v4478, %v4471
    %v5088 = vpack.c.b16 %v4479, %v4472
    %v5089 = vpack.c.b16 %v4480, %v4473
    %v5090 = vpack.c.b16 %v4481, %v4474
    %v5091 = vpack.c.b16 %v4482, %v4475
    %v5092 = vpack.c.b16 %v4483, %v4476
    %v5093 = vpack.c.b16 %v4491, %v4484
    %v5094 = vpack.c.b16 %v4492, %v4485
    %v5095 = vpack.c.b16 %v4493, %v4486
    %v5096 = vpack.c.b16 %v4494, %v4487
    %v5097 = vpack.c.b16 %v4495, %v4488
    %v5098 = vpack.c.b16 %v4496, %v4489
    %v5099 = vpack.c.b16 %v4497, %v4490
    %v5100 = vpack.c.b16 %v4505, %v4498
    %v5101 = vpack.c.b16 %v4506, %v4499
    %v5102 = vpack.c.b16 %v4507, %v4500
    %v5103 = vpack.c.b16 %v4508, %v4501
    %v5104 = vpack.c.b16 %v4509, %v4502
    %v5105 = vpack.c.b16 %v4510, %v4503
    %v5106 = vpack.c.b16 %v4511, %v4504
    %v5107 = vpack.c.b16 %v4519, %v4512
    %v5108 = vpack.c.b16 %v4520, %v4513
    %v5109 = vpack.c.b16 %v4521, %v4514
    %v5110 = vpack.c.b16 %v4522, %v4515
    %v5111 = vpack.c.b16 %v4523, %v4516
    %v5112 = vpack.c.b16 %v4524, %v4517
    %v5113 = vpack.c.b16 %v4525, %v4518
    %v5114 = vpack.c.b16 %v4533, %v4526
    %v5115 = vpack.c.b16 %v4534, %v4527
    %v5116 = vpack.c.b16 %v4535, %v4528
    %v5117 = vpack.c.b16 %v4536, %v4529
    %v5118 = vpack.c.b16 %v4537, %v4530
    %v5119 = vpack.c.b16 %v4538, %v4531
    %v5120 = vpack.c.b16 %v4539, %v4532
    %v5121 = vpack.c.b16 %v4547, %v4540
    %v5122 = vpack.c.b16 %v4548, %v4541
    %v5123 = vpack.c.b16 %v4549, %v4542
    %v5124 = vpack.c.b16 %v4550, %v4543
    %v5125 = vpack.c.b16 %v4551, %v4544
    %v5126 = vpack.c.b16 %v4552, %v4545
    %v5127 = vpack.c.b16 %v4553, %v4546
    %v5128 = vpack.c.b16 %v4561, %v4554
    %v5129 = vpack.c.b16 %v4562, %v4555
    %v5130 = vpack.c.b16 %v4563, %v4556
    %v5131 = vpack.c.b16 %v4564, %v4557
    %v5132 = vpack.c.b16 %v4565, %v4558
    %v5133 = vpack.c.b16 %v4566, %v4559
    %v5134 = vpack.c.b16 %v4567, %v4560
    %v5135 = vpack.c.b16 %v4575, %v4568
    %v5136 = vpack.c.b16 %v4576, %v4569
    %v5137 = vpack.c.b16 %v4577, %v4570
    %v5138 = vpack.c.b16 %v4578, %v4571
    %v5139 = vpack.c.b16 %v4579, %v4572
    %v5140 = vpack.c.b16 %v4580, %v4573
    %v5141 = vpack.c.b16 %v4581, %v4574
    %v5142 = vpack.c.b16 %v4589, %v4582
    %v5143 = vpack.c.b16 %v4590, %v4583
    %v5144 = vpack.c.b16 %v4591, %v4584
    %v5145 = vpack.c.b16 %v4592, %v4585
    %v5146 = vpack.c.b16 %v4593, %v4586
    %v5147 = vpack.c.b16 %v4594, %v4587
    %v5148 = vpack.c.b16 %v4595, %v4588
    %v5149 = vpack.c.b16 %v4603, %v4596
    %v5150 = vpack.c.b16 %v4604, %v4597
    %v5151 = vpack.c.b16 %v4605, %v4598
    %v5152 = vpack.c.b16 %v4606, %v4599
    %v5153 = vpack.c.b16 %v4607, %v4600
    %v5154 = vpack.c.b16 %v4608, %v4601
    %v5155 = vpack.c.b16 %v4609, %v4602
    %v5156 = vpack.c.b16 %v4617, %v4610
    %v5157 = vpack.c.b16 %v4618, %v4611
    %v5158 = vpack.c.b16 %v4619, %v4612
    %v5159 = vpack.c.b16 %v4620, %v4613
    %v5160 = vpack.c.b16 %v4621, %v4614
    %v5161 = vpack.c.b16 %v4622, %v4615
    %v5162 = vpack.c.b16 %v4623, %v4616
    %v5163 = vpack.c.b16 %v4631, %v4624
    %v5164 = vpack.c.b16 %v4632, %v4625
    %v5165 = vpack.c.b16 %v4633, %v4626
    %v5166 = vpack.c.b16 %v4634, %v4627
    %v5167 = vpack.c.b16 %v4635, %v4628
    %v5168 = vpack.c.b16 %v4636, %v4629
    %v5169 = vpack.c.b16 %v4637, %v4630
    %v5170 = vpack.c.b16 %v4645, %v4638
    %v5171 = vpack.c.b16 %v4646, %v4639
    %v5172 = vpack.c.b16 %v4647, %v4640
    %v5173 = vpack.c.b16 %v4648, %v4641
    %v5174 = vpack.c.b16 %v4649, %v4642
    %v5175 = vpack.c.b16 %v4650, %v4643
    %v5176 = vpack.c.b16 %v4651, %v4644
    %v5177 = vpack.c.b16 %v4659, %v4652
    %v5178 = vpack.c.b16 %v4660, %v4653
    %v5179 = vpack.c.b16 %v4661, %v4654
    %v5180 = vpack.c.b16 %v4662, %v4655
    %v5181 = vpack.c.b16 %v4663, %v4656
    %v5182 = vpack.c.b16 %v4664, %v4657
    %v5183 = vpack.c.b16 %v4665, %v4658
    %v5184 = vpack.c.b16 %v4673, %v4666
    %v5185 = vpack.c.b16 %v4674, %v4667
    %v5186 = vpack.c.b16 %v4675, %v4668
    %v5187 = vpack.c.b16 %v4676, %v4669
    %v5188 = vpack.c.b16 %v4677, %v4670
    %v5189 = vpack.c.b16 %v4678, %v4671
    %v5190 = vpack.c.b16 %v4679, %v4672
    %v5191 = vpack.c.b16 %v4687, %v4680
    %v5192 = vpack.c.b16 %v4688, %v4681
    %v5193 = vpack.c.b16 %v4689, %v4682
    %v5194 = vpack.c.b16 %v4690, %v4683
    %v5195 = vpack.c.b16 %v4691, %v4684
    %v5196 = vpack.c.b16 %v4692, %v4685
    %v5197 = vpack.c.b16 %v4693, %v4686
    %v5198 = vpack.c.b16 %v4701, %v4694
    %v5199 = vpack.c.b16 %v4702, %v4695
    %v5200 = vpack.c.b16 %v4703, %v4696
    %v5201 = vpack.c.b16 %v4704, %v4697
    %v5202 = vpack.c.b16 %v4705, %v4698
    %v5203 = vpack.c.b16 %v4706, %v4699
    %v5204 = vpack.c.b16 %v4707, %v4700
    %v5205 = vpack.c.b16 %v4715, %v4708
    %v5206 = vpack.c.b16 %v4716, %v4709
    %v5207 = vpack.c.b16 %v4717, %v4710
    %v5208 = vpack.c.b16 %v4718, %v4711
    %v5209 = vpack.c.b16 %v4719, %v4712
    %v5210 = vpack.c.b16 %v4720, %v4713
    %v5211 = vpack.c.b16 %v4721, %v4714
    %v5212 = vpack.c.b16 %v4729, %v4722
    %v5213 = vpack.c.b16 %v4730, %v4723
    %v5214 = vpack.c.b16 %v4731, %v4724
    %v5215 = vpack.c.b16 %v4732, %v4725
    %v5216 = vpack.c.b16 %v4733, %v4726
    %v5217 = vpack.c.b16 %v4734, %v4727
    %v5218 = vpack.c.b16 %v4735, %v4728
    %v5219 = vpack.c.b16 %v4743, %v4736
    %v5220 = vpack.c.b16 %v4744, %v4737
    %v5221 = vpack.c.b16 %v4745, %v4738
    %v5222 = vpack.c.b16 %v4746, %v4739
    %v5223 = vpack.c.b16 %v4747, %v4740
    %v5224 = vpack.c.b16 %v4748, %v4741
    %v5225 = vpack.c.b16 %v4749, %v4742
    %v5226 = vpack.c.b16 %v4757, %v4750
    %v5227 = vpack.c.b16 %v4758, %v4751
    %v5228 = vpack.c.b16 %v4759, %v4752
    %v5229 = vpack.c.b16 %v4760, %v4753
    %v5230 = vpack.c.b16 %v4761, %v4754
    %v5231 = vpack.c.b16 %v4762, %v4755
    %v5232 = vpack.c.b16 %v4763, %v4756
    %v5233 = vpack.c.b16 %v4771, %v4764
    %v5234 = vpack.c.b16 %v4772, %v4765
    %v5235 = vpack.c.b16 %v4773, %v4766
    %v5236 = vpack.c.b16 %v4774, %v4767
    %v5237 = vpack.c.b16 %v4775, %v4768
    %v5238 = vpack.c.b16 %v4776, %v4769
    %v5239 = vpack.c.b16 %v4777, %v4770
    %v5240 = vpack.c.b16 %v4785, %v4778
    %v5241 = vpack.c.b16 %v4786, %v4779
    %v5242 = vpack.c.b16 %v4787, %v4780
    %v5243 = vpack.c.b16 %v4788, %v4781
    %v5244 = vpack.c.b16 %v4789, %v4782
    %v5245 = vpack.c.b16 %v4790, %v4783
    %v5246 = vpack.c.b16 %v4791, %v4784
    %v5247 = vpack.c.b16 %v4799, %v4792
    %v5248 = vpack.c.b16 %v4800, %v4793
    %v5249 = vpack.c.b16 %v4801, %v4794
    %v5250 = vpack.c.b16 %v4802, %v4795
    %v5251 = vpack.c.b16 %v4803, %v4796
    %v5252 = vpack.c.b16 %v4804, %v4797
    %v5253 = vpack.c.b16 %v4805, %v4798
    %5702 = vmatprep.subr.bf16.mxu0 %v4856
    %5703 = vmatpush1.bf16.msra.mxu0 %v4855
    %5704 = vmatprep.subr.bf16.mxu0 %v4849
    %5705 = vmatpush1.bf16.msra.mxu0 %v4848
    %5706 = vmatprep.subr.bf16.mxu0 %v4842
    %5707 = vmatpush1.bf16.msra.mxu0 %v4841
    %5708 = vmatprep.subr.bf16.mxu0 %v4835
    %5709 = vmatpush1.bf16.msra.mxu0 %v4834
    %5710 = vmatprep.subr.bf16.mxu0 %v4828
    %5711 = vmatpush1.bf16.msra.mxu0 %v4827
    %5712 = vmatprep.subr.bf16.mxu0 %v4821
    %5713 = vmatpush1.bf16.msra.mxu0 %v4820
    %5714 = vmatprep.subr.bf16.mxu0 %v4814
    %5715 = vmatpush1.bf16.msra.mxu0 %v4813
    %5716 = vmatprep.subr.bf16.mxu0 %v4807
    %5717 = vmatpush1.bf16.msra.mxu0 %v4806
    %5718 = vmatprep.subr.bf16.mxu0 %v4912
    %5719 = vmatpush2.bf16.msra.mxu0 %v4911
    %5720 = vmatprep.subr.bf16.mxu0 %v4905
    %5721 = vmatpush2.bf16.msra.mxu0 %v4904
    %5722 = vmatprep.subr.bf16.mxu0 %v4898
    %5723 = vmatpush2.bf16.msra.mxu0 %v4897
    %5724 = vmatprep.subr.bf16.mxu0 %v4891
    %5725 = vmatpush2.bf16.msra.mxu0 %v4890
    %5726 = vmatprep.subr.bf16.mxu0 %v4884
    %5727 = vmatpush2.bf16.msra.mxu0 %v4883
    %5728 = vmatprep.subr.bf16.mxu0 %v4877
    %5729 = vmatpush2.bf16.msra.mxu0 %v4876
    %5730 = vmatprep.subr.bf16.mxu0 %v4870
    %5731 = vmatpush2.bf16.msra.mxu0 %v4869
    %5732 = vmatprep.subr.bf16.mxu0 %v4863
    %5733 = vmatpush2.bf16.msra.mxu0 %v4862
    %5734 = vmatprep.mubr.bf16.mxu0 %v2842
    %5735 = vmatmul.mubr.bf16.gmra.mxu0 %v2841
    %v5736 = vpop.f32.mrf.mxu0
    %v5737 = vadd.f32 %v3366, %v5736
    %v5738 = vpop.f32.mrf.mxu0
    %v5739 = vadd.f32 %v3370, %v5738
    %v5740 = vpop.f32.mrf.mxu0
    %v5741 = vpop.f32.mrf.mxu0
    %5742 = vdwg.mxu0
    %5743 = vmatprep.subr.bf16.mxu0 %v4968
    %5744 = vmatpush1.bf16.msra.mxu0 %v4967
    %5745 = vmatprep.subr.bf16.mxu0 %v4961
    %5746 = vmatpush1.bf16.msra.mxu0 %v4960
    %5747 = vmatprep.subr.bf16.mxu0 %v4954
    %5748 = vmatpush1.bf16.msra.mxu0 %v4953
    %5749 = vmatprep.subr.bf16.mxu0 %v4947
    %5750 = vmatpush1.bf16.msra.mxu0 %v4946
    %5751 = vmatprep.subr.bf16.mxu0 %v4940
    %5752 = vmatpush1.bf16.msra.mxu0 %v4939
    %5753 = vmatprep.subr.bf16.mxu0 %v4933
    %5754 = vmatpush1.bf16.msra.mxu0 %v4932
    %5755 = vmatprep.subr.bf16.mxu0 %v4926
    %5756 = vmatpush1.bf16.msra.mxu0 %v4925
    %5757 = vmatprep.subr.bf16.mxu0 %v4919
    %5758 = vmatpush1.bf16.msra.mxu0 %v4918
    %5759 = vmatprep.subr.bf16.mxu0 %v5024
    %5760 = vmatpush2.bf16.msra.mxu0 %v5023
    %5761 = vmatprep.subr.bf16.mxu0 %v5017
    %5762 = vmatpush2.bf16.msra.mxu0 %v5016
    %5763 = vmatprep.subr.bf16.mxu0 %v5010
    %5764 = vmatpush2.bf16.msra.mxu0 %v5009
    %5765 = vmatprep.subr.bf16.mxu0 %v5003
    %5766 = vmatpush2.bf16.msra.mxu0 %v5002
    %5767 = vmatprep.subr.bf16.mxu0 %v4996
    %5768 = vmatpush2.bf16.msra.mxu0 %v4995
    %5769 = vmatprep.subr.bf16.mxu0 %v4989
    %5770 = vmatpush2.bf16.msra.mxu0 %v4988
    %5771 = vmatprep.subr.bf16.mxu0 %v4982
    %5772 = vmatpush2.bf16.msra.mxu0 %v4981
    %5773 = vmatprep.subr.bf16.mxu0 %v4975
    %5774 = vmatpush2.bf16.msra.mxu0 %v4974
    %5775 = vmatprep.mubr.bf16.mxu0 %v2844
    %5776 = vmatmul.mubr.bf16.gmra.mxu0 %v2843
    %v5777 = vpop.f32.mrf.mxu0
    %v5778 = vadd.f32 %v5737, %v5777
    %v5779 = vpop.f32.mrf.mxu0
    %v5780 = vadd.f32 %v5739, %v5779
    %v5781 = vpop.f32.mrf.mxu0
    %v5782 = vpop.f32.mrf.mxu0
    %5783 = vdwg.mxu0
    %5784 = vmatprep.subr.bf16.mxu0 %v5080
    %5785 = vmatpush1.bf16.msra.mxu0 %v5079
    %5786 = vmatprep.subr.bf16.mxu0 %v5073
    %5787 = vmatpush1.bf16.msra.mxu0 %v5072
    %5788 = vmatprep.subr.bf16.mxu0 %v5066
    %5789 = vmatpush1.bf16.msra.mxu0 %v5065
    %5790 = vmatprep.subr.bf16.mxu0 %v5059
    %5791 = vmatpush1.bf16.msra.mxu0 %v5058
    %5792 = vmatprep.subr.bf16.mxu0 %v5052
    %5793 = vmatpush1.bf16.msra.mxu0 %v5051
    %5794 = vmatprep.subr.bf16.mxu0 %v5045
    %5795 = vmatpush1.bf16.msra.mxu0 %v5044
    %5796 = vmatprep.subr.bf16.mxu0 %v5038
    %5797 = vmatpush1.bf16.msra.mxu0 %v5037
    %5798 = vmatprep.subr.bf16.mxu0 %v5031
    %5799 = vmatpush1.bf16.msra.mxu0 %v5030
    %5800 = vmatprep.subr.bf16.mxu0 %v5136
    %5801 = vmatpush2.bf16.msra.mxu0 %v5135
    %5802 = vmatprep.subr.bf16.mxu0 %v5129
    %5803 = vmatpush2.bf16.msra.mxu0 %v5128
    %5804 = vmatprep.subr.bf16.mxu0 %v5122
    %5805 = vmatpush2.bf16.msra.mxu0 %v5121
    %5806 = vmatprep.subr.bf16.mxu0 %v5115
    %5807 = vmatpush2.bf16.msra.mxu0 %v5114
    %5808 = vmatprep.subr.bf16.mxu0 %v5108
    %5809 = vmatpush2.bf16.msra.mxu0 %v5107
    %5810 = vmatprep.subr.bf16.mxu0 %v5101
    %5811 = vmatpush2.bf16.msra.mxu0 %v5100
    %5812 = vmatprep.subr.bf16.mxu0 %v5094
    %5813 = vmatpush2.bf16.msra.mxu0 %v5093
    %5814 = vmatprep.subr.bf16.mxu0 %v5087
    %5815 = vmatpush2.bf16.msra.mxu0 %v5086
    %5816 = vmatprep.mubr.bf16.mxu0 %v2846
    %5817 = vmatmul.mubr.bf16.gmra.mxu0 %v2845
    %v5818 = vpop.f32.mrf.mxu0
    %v5819 = vadd.f32 %v5778, %v5818
    %v5820 = vpop.f32.mrf.mxu0
    %v5821 = vadd.f32 %v5780, %v5820
    %v5822 = vpop.f32.mrf.mxu0
    %v5823 = vpop.f32.mrf.mxu0
    %5824 = vdwg.mxu0
    %5825 = vmatprep.subr.bf16.mxu0 %v5192
    %5826 = vmatpush1.bf16.msra.mxu0 %v5191
    %5827 = vmatprep.subr.bf16.mxu0 %v5185
    %5828 = vmatpush1.bf16.msra.mxu0 %v5184
    %5829 = vmatprep.subr.bf16.mxu0 %v5178
    %5830 = vmatpush1.bf16.msra.mxu0 %v5177
    %5831 = vmatprep.subr.bf16.mxu0 %v5171
    %5832 = vmatpush1.bf16.msra.mxu0 %v5170
    %5833 = vmatprep.subr.bf16.mxu0 %v5164
    %5834 = vmatpush1.bf16.msra.mxu0 %v5163
    %5835 = vmatprep.subr.bf16.mxu0 %v5157
    %5836 = vmatpush1.bf16.msra.mxu0 %v5156
    %5837 = vmatprep.subr.bf16.mxu0 %v5150
    %5838 = vmatpush1.bf16.msra.mxu0 %v5149
    %5839 = vmatprep.subr.bf16.mxu0 %v5143
    %5840 = vmatpush1.bf16.msra.mxu0 %v5142
    %5841 = vmatprep.subr.bf16.mxu0 %v5248
    %5842 = vmatpush2.bf16.msra.mxu0 %v5247
    %5843 = vmatprep.subr.bf16.mxu0 %v5241
    %5844 = vmatpush2.bf16.msra.mxu0 %v5240
    %5845 = vmatprep.subr.bf16.mxu0 %v5234
    %5846 = vmatpush2.bf16.msra.mxu0 %v5233
    %5847 = vmatprep.subr.bf16.mxu0 %v5227
    %5848 = vmatpush2.bf16.msra.mxu0 %v5226
    %5849 = vmatprep.subr.bf16.mxu0 %v5220
    %5850 = vmatpush2.bf16.msra.mxu0 %v5219
    %5851 = vmatprep.subr.bf16.mxu0 %v5213
    %5852 = vmatpush2.bf16.msra.mxu0 %v5212
    %5853 = vmatprep.subr.bf16.mxu0 %v5206
    %5854 = vmatpush2.bf16.msra.mxu0 %v5205
    %5855 = vmatprep.subr.bf16.mxu0 %v5199
    %5856 = vmatpush2.bf16.msra.mxu0 %v5198
    %5857 = vmatprep.mubr.bf16.mxu0 %v2848
    %5858 = vmatmul.mubr.bf16.gmra.mxu0 %v2847
    %v5859 = vpop.f32.mrf.mxu0
    %v5860 = vadd.f32 %v5819, %v5859
    %v5861 = vpop.f32.mrf.mxu0
    %v5862 = vadd.f32 %v5821, %v5861
    %v5863 = vpop.f32.mrf.mxu0
    %v5864 = vpop.f32.mrf.mxu0
    %5865 = vdwg.mxu0
    %5866 = vmatprep.subr.bf16.mxu0 %v4858
    %5867 = vmatpush1.bf16.msra.mxu0 %v4857
    %5868 = vmatprep.subr.bf16.mxu0 %v4851
    %5869 = vmatpush1.bf16.msra.mxu0 %v4850
    %5870 = vmatprep.subr.bf16.mxu0 %v4844
    %5871 = vmatpush1.bf16.msra.mxu0 %v4843
    %5872 = vmatprep.subr.bf16.mxu0 %v4837
    %5873 = vmatpush1.bf16.msra.mxu0 %v4836
    %5874 = vmatprep.subr.bf16.mxu0 %v4830
    %5875 = vmatpush1.bf16.msra.mxu0 %v4829
    %5876 = vmatprep.subr.bf16.mxu0 %v4823
    %5877 = vmatpush1.bf16.msra.mxu0 %v4822
    %5878 = vmatprep.subr.bf16.mxu0 %v4816
    %5879 = vmatpush1.bf16.msra.mxu0 %v4815
    %5880 = vmatprep.subr.bf16.mxu0 %v4809
    %5881 = vmatpush1.bf16.msra.mxu0 %v4808
    %5882 = vmatprep.subr.bf16.mxu0 %v4914
    %5883 = vmatpush2.bf16.msra.mxu0 %v4913
    %5884 = vmatprep.subr.bf16.mxu0 %v4907
    %5885 = vmatpush2.bf16.msra.mxu0 %v4906
    %5886 = vmatprep.subr.bf16.mxu0 %v4900
    %5887 = vmatpush2.bf16.msra.mxu0 %v4899
    %5888 = vmatprep.subr.bf16.mxu0 %v4893
    %5889 = vmatpush2.bf16.msra.mxu0 %v4892
    %5890 = vmatprep.subr.bf16.mxu0 %v4886
    %5891 = vmatpush2.bf16.msra.mxu0 %v4885
    %5892 = vmatprep.subr.bf16.mxu0 %v4879
    %5893 = vmatpush2.bf16.msra.mxu0 %v4878
    %5894 = vmatprep.subr.bf16.mxu0 %v4872
    %5895 = vmatpush2.bf16.msra.mxu0 %v4871
    %5896 = vmatprep.subr.bf16.mxu0 %v4865
    %5897 = vmatpush2.bf16.msra.mxu0 %v4864
    %5898 = vmatprep.mubr.bf16.mxu0 %v2842
    %5899 = vmatmul.mubr.bf16.gmra.mxu0 %v2841
    %v5900 = vpop.f32.mrf.mxu0
    %v5901 = vadd.f32 %v3374, %v5900
    %v5902 = vpop.f32.mrf.mxu0
    %v5903 = vadd.f32 %v3378, %v5902
    %v5904 = vpop.f32.mrf.mxu0
    %v5905 = vpop.f32.mrf.mxu0
    %5906 = vdwg.mxu0
    %5907 = vmatprep.subr.bf16.mxu0 %v4970
    %5908 = vmatpush1.bf16.msra.mxu0 %v4969
    %5909 = vmatprep.subr.bf16.mxu0 %v4963
    %5910 = vmatpush1.bf16.msra.mxu0 %v4962
    %5911 = vmatprep.subr.bf16.mxu0 %v4956
    %5912 = vmatpush1.bf16.msra.mxu0 %v4955
    %5913 = vmatprep.subr.bf16.mxu0 %v4949
    %5914 = vmatpush1.bf16.msra.mxu0 %v4948
    %5915 = vmatprep.subr.bf16.mxu0 %v4942
    %5916 = vmatpush1.bf16.msra.mxu0 %v4941
    %5917 = vmatprep.subr.bf16.mxu0 %v4935
    %5918 = vmatpush1.bf16.msra.mxu0 %v4934
    %5919 = vmatprep.subr.bf16.mxu0 %v4928
    %5920 = vmatpush1.bf16.msra.mxu0 %v4927
    %5921 = vmatprep.subr.bf16.mxu0 %v4921
    %5922 = vmatpush1.bf16.msra.mxu0 %v4920
    %5923 = vmatprep.subr.bf16.mxu0 %v5026
    %5924 = vmatpush2.bf16.msra.mxu0 %v5025
    %5925 = vmatprep.subr.bf16.mxu0 %v5019
    %5926 = vmatpush2.bf16.msra.mxu0 %v5018
    %5927 = vmatprep.subr.bf16.mxu0 %v5012
    %5928 = vmatpush2.bf16.msra.mxu0 %v5011
    %5929 = vmatprep.subr.bf16.mxu0 %v5005
    %5930 = vmatpush2.bf16.msra.mxu0 %v5004
    %5931 = vmatprep.subr.bf16.mxu0 %v4998
    %5932 = vmatpush2.bf16.msra.mxu0 %v4997
    %5933 = vmatprep.subr.bf16.mxu0 %v4991
    %5934 = vmatpush2.bf16.msra.mxu0 %v4990
    %5935 = vmatprep.subr.bf16.mxu0 %v4984
    %5936 = vmatpush2.bf16.msra.mxu0 %v4983
    %5937 = vmatprep.subr.bf16.mxu0 %v4977
    %5938 = vmatpush2.bf16.msra.mxu0 %v4976
    %5939 = vmatprep.mubr.bf16.mxu0 %v2844
    %5940 = vmatmul.mubr.bf16.gmra.mxu0 %v2843
    %v5941 = vpop.f32.mrf.mxu0
    %v5942 = vadd.f32 %v5901, %v5941
    %v5943 = vpop.f32.mrf.mxu0
    %v5944 = vadd.f32 %v5903, %v5943
    %v5945 = vpop.f32.mrf.mxu0
    %v5946 = vpop.f32.mrf.mxu0
    %5947 = vdwg.mxu0
    %5948 = vmatprep.subr.bf16.mxu0 %v5082
    %5949 = vmatpush1.bf16.msra.mxu0 %v5081
    %5950 = vmatprep.subr.bf16.mxu0 %v5075
    %5951 = vmatpush1.bf16.msra.mxu0 %v5074
    %5952 = vmatprep.subr.bf16.mxu0 %v5068
    %5953 = vmatpush1.bf16.msra.mxu0 %v5067
    %5954 = vmatprep.subr.bf16.mxu0 %v5061
    %5955 = vmatpush1.bf16.msra.mxu0 %v5060
    %5956 = vmatprep.subr.bf16.mxu0 %v5054
    %5957 = vmatpush1.bf16.msra.mxu0 %v5053
    %5958 = vmatprep.subr.bf16.mxu0 %v5047
    %5959 = vmatpush1.bf16.msra.mxu0 %v5046
    %5960 = vmatprep.subr.bf16.mxu0 %v5040
    %5961 = vmatpush1.bf16.msra.mxu0 %v5039
    %5962 = vmatprep.subr.bf16.mxu0 %v5033
    %5963 = vmatpush1.bf16.msra.mxu0 %v5032
    %5964 = vmatprep.subr.bf16.mxu0 %v5138
    %5965 = vmatpush2.bf16.msra.mxu0 %v5137
    %5966 = vmatprep.subr.bf16.mxu0 %v5131
    %5967 = vmatpush2.bf16.msra.mxu0 %v5130
    %5968 = vmatprep.subr.bf16.mxu0 %v5124
    %5969 = vmatpush2.bf16.msra.mxu0 %v5123
    %5970 = vmatprep.subr.bf16.mxu0 %v5117
    %5971 = vmatpush2.bf16.msra.mxu0 %v5116
    %5972 = vmatprep.subr.bf16.mxu0 %v5110
    %5973 = vmatpush2.bf16.msra.mxu0 %v5109
    %5974 = vmatprep.subr.bf16.mxu0 %v5103
    %5975 = vmatpush2.bf16.msra.mxu0 %v5102
    %5976 = vmatprep.subr.bf16.mxu0 %v5096
    %5977 = vmatpush2.bf16.msra.mxu0 %v5095
    %5978 = vmatprep.subr.bf16.mxu0 %v5089
    %5979 = vmatpush2.bf16.msra.mxu0 %v5088
    %5980 = vmatprep.mubr.bf16.mxu0 %v2846
    %5981 = vmatmul.mubr.bf16.gmra.mxu0 %v2845
    %v5982 = vpop.f32.mrf.mxu0
    %v5983 = vadd.f32 %v5942, %v5982
    %v5984 = vpop.f32.mrf.mxu0
    %v5985 = vadd.f32 %v5944, %v5984
    %v5986 = vpop.f32.mrf.mxu0
    %v5987 = vpop.f32.mrf.mxu0
    %5988 = vdwg.mxu0
    %5989 = vmatprep.subr.bf16.mxu0 %v5194
    %5990 = vmatpush1.bf16.msra.mxu0 %v5193
    %5991 = vmatprep.subr.bf16.mxu0 %v5187
    %5992 = vmatpush1.bf16.msra.mxu0 %v5186
    %5993 = vmatprep.subr.bf16.mxu0 %v5180
    %5994 = vmatpush1.bf16.msra.mxu0 %v5179
    %5995 = vmatprep.subr.bf16.mxu0 %v5173
    %5996 = vmatpush1.bf16.msra.mxu0 %v5172
    %5997 = vmatprep.subr.bf16.mxu0 %v5166
    %5998 = vmatpush1.bf16.msra.mxu0 %v5165
    %5999 = vmatprep.subr.bf16.mxu0 %v5159
    %6000 = vmatpush1.bf16.msra.mxu0 %v5158
    %6001 = vmatprep.subr.bf16.mxu0 %v5152
    %6002 = vmatpush1.bf16.msra.mxu0 %v5151
    %6003 = vmatprep.subr.bf16.mxu0 %v5145
    %6004 = vmatpush1.bf16.msra.mxu0 %v5144
    %6005 = vmatprep.subr.bf16.mxu0 %v5250
    %6006 = vmatpush2.bf16.msra.mxu0 %v5249
    %6007 = vmatprep.subr.bf16.mxu0 %v5243
    %6008 = vmatpush2.bf16.msra.mxu0 %v5242
    %6009 = vmatprep.subr.bf16.mxu0 %v5236
    %6010 = vmatpush2.bf16.msra.mxu0 %v5235
    %6011 = vmatprep.subr.bf16.mxu0 %v5229
    %6012 = vmatpush2.bf16.msra.mxu0 %v5228
    %6013 = vmatprep.subr.bf16.mxu0 %v5222
    %6014 = vmatpush2.bf16.msra.mxu0 %v5221
    %6015 = vmatprep.subr.bf16.mxu0 %v5215
    %6016 = vmatpush2.bf16.msra.mxu0 %v5214
    %6017 = vmatprep.subr.bf16.mxu0 %v5208
    %6018 = vmatpush2.bf16.msra.mxu0 %v5207
    %6019 = vmatprep.subr.bf16.mxu0 %v5201
    %6020 = vmatpush2.bf16.msra.mxu0 %v5200
    %6021 = vmatprep.mubr.bf16.mxu0 %v2848
    %6022 = vmatmul.mubr.bf16.gmra.mxu0 %v2847
    %v6023 = vpop.f32.mrf.mxu0
    %v6024 = vadd.f32 %v5983, %v6023
    %v6025 = vpop.f32.mrf.mxu0
    %v6026 = vadd.f32 %v5985, %v6025
    %v6027 = vpop.f32.mrf.mxu0
    %v6028 = vpop.f32.mrf.mxu0
    %6029 = vdwg.mxu0
    %6030 = vmatprep.subr.bf16.mxu0 %v4860
    %6031 = vmatpush1.bf16.msra.mxu0 %v4859
    %6032 = vmatprep.subr.bf16.mxu0 %v4853
    %6033 = vmatpush1.bf16.msra.mxu0 %v4852
    %6034 = vmatprep.subr.bf16.mxu0 %v4846
    %6035 = vmatpush1.bf16.msra.mxu0 %v4845
    %6036 = vmatprep.subr.bf16.mxu0 %v4839
    %6037 = vmatpush1.bf16.msra.mxu0 %v4838
    %6038 = vmatprep.subr.bf16.mxu0 %v4832
    %6039 = vmatpush1.bf16.msra.mxu0 %v4831
    %6040 = vmatprep.subr.bf16.mxu0 %v4825
    %6041 = vmatpush1.bf16.msra.mxu0 %v4824
    %6042 = vmatprep.subr.bf16.mxu0 %v4818
    %6043 = vmatpush1.bf16.msra.mxu0 %v4817
    %6044 = vmatprep.subr.bf16.mxu0 %v4811
    %6045 = vmatpush1.bf16.msra.mxu0 %v4810
    %6046 = vmatprep.subr.bf16.mxu0 %v4916
    %6047 = vmatpush2.bf16.msra.mxu0 %v4915
    %6048 = vmatprep.subr.bf16.mxu0 %v4909
    %6049 = vmatpush2.bf16.msra.mxu0 %v4908
    %6050 = vmatprep.subr.bf16.mxu0 %v4902
    %6051 = vmatpush2.bf16.msra.mxu0 %v4901
    %6052 = vmatprep.subr.bf16.mxu0 %v4895
    %6053 = vmatpush2.bf16.msra.mxu0 %v4894
    %6054 = vmatprep.subr.bf16.mxu0 %v4888
    %6055 = vmatpush2.bf16.msra.mxu0 %v4887
    %6056 = vmatprep.subr.bf16.mxu0 %v4881
    %6057 = vmatpush2.bf16.msra.mxu0 %v4880
    %6058 = vmatprep.subr.bf16.mxu0 %v4874
    %6059 = vmatpush2.bf16.msra.mxu0 %v4873
    %6060 = vmatprep.subr.bf16.mxu0 %v4867
    %6061 = vmatpush2.bf16.msra.mxu0 %v4866
    %6062 = vmatprep.mubr.bf16.mxu0 %v2842
    %6063 = vmatmul.mubr.bf16.gmra.mxu0 %v2841
    %v6064 = vpop.f32.mrf.mxu0
    %v6065 = vadd.f32 %v3382, %v6064
    %v6066 = vpop.f32.mrf.mxu0
    %v6067 = vadd.f32 %v3386, %v6066
    %v6068 = vpop.f32.mrf.mxu0
    %v6069 = vpop.f32.mrf.mxu0
    %6070 = vdwg.mxu0
    %6071 = vmatprep.subr.bf16.mxu0 %v4972
    %6072 = vmatpush1.bf16.msra.mxu0 %v4971
    %6073 = vmatprep.subr.bf16.mxu0 %v4965
    %6074 = vmatpush1.bf16.msra.mxu0 %v4964
    %6075 = vmatprep.subr.bf16.mxu0 %v4958
    %6076 = vmatpush1.bf16.msra.mxu0 %v4957
    %6077 = vmatprep.subr.bf16.mxu0 %v4951
    %6078 = vmatpush1.bf16.msra.mxu0 %v4950
    %6079 = vmatprep.subr.bf16.mxu0 %v4944
    %6080 = vmatpush1.bf16.msra.mxu0 %v4943
    %6081 = vmatprep.subr.bf16.mxu0 %v4937
    %6082 = vmatpush1.bf16.msra.mxu0 %v4936
    %6083 = vmatprep.subr.bf16.mxu0 %v4930
    %6084 = vmatpush1.bf16.msra.mxu0 %v4929
    %6085 = vmatprep.subr.bf16.mxu0 %v4923
    %6086 = vmatpush1.bf16.msra.mxu0 %v4922
    %6087 = vmatprep.subr.bf16.mxu0 %v5028
    %6088 = vmatpush2.bf16.msra.mxu0 %v5027
    %6089 = vmatprep.subr.bf16.mxu0 %v5021
    %6090 = vmatpush2.bf16.msra.mxu0 %v5020
    %6091 = vmatprep.subr.bf16.mxu0 %v5014
    %6092 = vmatpush2.bf16.msra.mxu0 %v5013
    %6093 = vmatprep.subr.bf16.mxu0 %v5007
    %6094 = vmatpush2.bf16.msra.mxu0 %v5006
    %6095 = vmatprep.subr.bf16.mxu0 %v5000
    %6096 = vmatpush2.bf16.msra.mxu0 %v4999
    %6097 = vmatprep.subr.bf16.mxu0 %v4993
    %6098 = vmatpush2.bf16.msra.mxu0 %v4992
    %6099 = vmatprep.subr.bf16.mxu0 %v4986
    %6100 = vmatpush2.bf16.msra.mxu0 %v4985
    %6101 = vmatprep.subr.bf16.mxu0 %v4979
    %6102 = vmatpush2.bf16.msra.mxu0 %v4978
    %6103 = vmatprep.mubr.bf16.mxu0 %v2844
    %6104 = vmatmul.mubr.bf16.gmra.mxu0 %v2843
    %v6105 = vpop.f32.mrf.mxu0
    %v6106 = vadd.f32 %v6065, %v6105
    %v6107 = vpop.f32.mrf.mxu0
    %v6108 = vadd.f32 %v6067, %v6107
    %v6109 = vpop.f32.mrf.mxu0
    %v6110 = vpop.f32.mrf.mxu0
    %6111 = vdwg.mxu0
    %6112 = vmatprep.subr.bf16.mxu0 %v5084
    %6113 = vmatpush1.bf16.msra.mxu0 %v5083
    %6114 = vmatprep.subr.bf16.mxu0 %v5077
    %6115 = vmatpush1.bf16.msra.mxu0 %v5076
    %6116 = vmatprep.subr.bf16.mxu0 %v5070
    %6117 = vmatpush1.bf16.msra.mxu0 %v5069
    %6118 = vmatprep.subr.bf16.mxu0 %v5063
    %6119 = vmatpush1.bf16.msra.mxu0 %v5062
    %6120 = vmatprep.subr.bf16.mxu0 %v5056
    %6121 = vmatpush1.bf16.msra.mxu0 %v5055
    %6122 = vmatprep.subr.bf16.mxu0 %v5049
    %6123 = vmatpush1.bf16.msra.mxu0 %v5048
    %6124 = vmatprep.subr.bf16.mxu0 %v5042
    %6125 = vmatpush1.bf16.msra.mxu0 %v5041
    %6126 = vmatprep.subr.bf16.mxu0 %v5035
    %6127 = vmatpush1.bf16.msra.mxu0 %v5034
    %6128 = vmatprep.subr.bf16.mxu0 %v5140
    %6129 = vmatpush2.bf16.msra.mxu0 %v5139
    %6130 = vmatprep.subr.bf16.mxu0 %v5133
    %6131 = vmatpush2.bf16.msra.mxu0 %v5132
    %6132 = vmatprep.subr.bf16.mxu0 %v5126
    %6133 = vmatpush2.bf16.msra.mxu0 %v5125
    %6134 = vmatprep.subr.bf16.mxu0 %v5119
    %6135 = vmatpush2.bf16.msra.mxu0 %v5118
    %6136 = vmatprep.subr.bf16.mxu0 %v5112
    %6137 = vmatpush2.bf16.msra.mxu0 %v5111
    %6138 = vmatprep.subr.bf16.mxu0 %v5105
    %6139 = vmatpush2.bf16.msra.mxu0 %v5104
    %6140 = vmatprep.subr.bf16.mxu0 %v5098
    %6141 = vmatpush2.bf16.msra.mxu0 %v5097
    %6142 = vmatprep.subr.bf16.mxu0 %v5091
    %6143 = vmatpush2.bf16.msra.mxu0 %v5090
    %6144 = vmatprep.mubr.bf16.mxu0 %v2846
    %6145 = vmatmul.mubr.bf16.gmra.mxu0 %v2845
    %v6146 = vpop.f32.mrf.mxu0
    %v6147 = vadd.f32 %v6106, %v6146
    %v6148 = vpop.f32.mrf.mxu0
    %v6149 = vadd.f32 %v6108, %v6148
    %v6150 = vpop.f32.mrf.mxu0
    %v6151 = vpop.f32.mrf.mxu0
    %6152 = vdwg.mxu0
    %6153 = vmatprep.subr.bf16.mxu0 %v5196
    %6154 = vmatpush1.bf16.msra.mxu0 %v5195
    %6155 = vmatprep.subr.bf16.mxu0 %v5189
    %6156 = vmatpush1.bf16.msra.mxu0 %v5188
    %6157 = vmatprep.subr.bf16.mxu0 %v5182
    %6158 = vmatpush1.bf16.msra.mxu0 %v5181
    %6159 = vmatprep.subr.bf16.mxu0 %v5175
    %6160 = vmatpush1.bf16.msra.mxu0 %v5174
    %6161 = vmatprep.subr.bf16.mxu0 %v5168
    %6162 = vmatpush1.bf16.msra.mxu0 %v5167
    %6163 = vmatprep.subr.bf16.mxu0 %v5161
    %6164 = vmatpush1.bf16.msra.mxu0 %v5160
    %6165 = vmatprep.subr.bf16.mxu0 %v5154
    %6166 = vmatpush1.bf16.msra.mxu0 %v5153
    %6167 = vmatprep.subr.bf16.mxu0 %v5147
    %6168 = vmatpush1.bf16.msra.mxu0 %v5146
    %6169 = vmatprep.subr.bf16.mxu0 %v5252
    %6170 = vmatpush2.bf16.msra.mxu0 %v5251
    %6171 = vmatprep.subr.bf16.mxu0 %v5245
    %6172 = vmatpush2.bf16.msra.mxu0 %v5244
    %6173 = vmatprep.subr.bf16.mxu0 %v5238
    %6174 = vmatpush2.bf16.msra.mxu0 %v5237
    %6175 = vmatprep.subr.bf16.mxu0 %v5231
    %6176 = vmatpush2.bf16.msra.mxu0 %v5230
    %6177 = vmatprep.subr.bf16.mxu0 %v5224
    %6178 = vmatpush2.bf16.msra.mxu0 %v5223
    %6179 = vmatprep.subr.bf16.mxu0 %v5217
    %6180 = vmatpush2.bf16.msra.mxu0 %v5216
    %6181 = vmatprep.subr.bf16.mxu0 %v5210
    %6182 = vmatpush2.bf16.msra.mxu0 %v5209
    %6183 = vmatprep.subr.bf16.mxu0 %v5203
    %6184 = vmatpush2.bf16.msra.mxu0 %v5202
    %6185 = vmatprep.mubr.bf16.mxu0 %v2848
    %6186 = vmatmul.mubr.bf16.gmra.mxu0 %v2847
    %v6187 = vpop.f32.mrf.mxu0
    %v6188 = vadd.f32 %v6147, %v6187
    %v6189 = vpop.f32.mrf.mxu0
    %v6190 = vadd.f32 %v6149, %v6189
    %v6191 = vpop.f32.mrf.mxu0
    %v6192 = vpop.f32.mrf.mxu0
    %6193 = vdwg.mxu0
    %6194 = vmatprep.subr.bf16.mxu0 0
    %6195 = vmatpush1.bf16.msra.mxu0 %v4861
    %6196 = vmatprep.subr.bf16.mxu0 0
    %6197 = vmatpush1.bf16.msra.mxu0 %v4854
    %6198 = vmatprep.subr.bf16.mxu0 0
    %6199 = vmatpush1.bf16.msra.mxu0 %v4847
    %6200 = vmatprep.subr.bf16.mxu0 0
    %6201 = vmatpush1.bf16.msra.mxu0 %v4840
    %6202 = vmatprep.subr.bf16.mxu0 0
    %6203 = vmatpush1.bf16.msra.mxu0 %v4833
    %6204 = vmatprep.subr.bf16.mxu0 0
    %6205 = vmatpush1.bf16.msra.mxu0 %v4826
    %6206 = vmatprep.subr.bf16.mxu0 0
    %6207 = vmatpush1.bf16.msra.mxu0 %v4819
    %6208 = vmatprep.subr.bf16.mxu0 0
    %6209 = vmatpush1.bf16.msra.mxu0 %v4812
    %6210 = vmatprep.subr.bf16.mxu0 0
    %6211 = vmatpush2.bf16.msra.mxu0 %v4917
    %6212 = vmatprep.subr.bf16.mxu0 0
    %6213 = vmatpush2.bf16.msra.mxu0 %v4910
    %6214 = vmatprep.subr.bf16.mxu0 0
    %6215 = vmatpush2.bf16.msra.mxu0 %v4903
    %6216 = vmatprep.subr.bf16.mxu0 0
    %6217 = vmatpush2.bf16.msra.mxu0 %v4896
    %6218 = vmatprep.subr.bf16.mxu0 0
    %6219 = vmatpush2.bf16.msra.mxu0 %v4889
    %6220 = vmatprep.subr.bf16.mxu0 0
    %6221 = vmatpush2.bf16.msra.mxu0 %v4882
    %6222 = vmatprep.subr.bf16.mxu0 0
    %6223 = vmatpush2.bf16.msra.mxu0 %v4875
    %6224 = vmatprep.subr.bf16.mxu0 0
    %6225 = vmatpush2.bf16.msra.mxu0 %v4868
    %6226 = vmatprep.mubr.bf16.mxu0 %v2842
    %6227 = vmatmul.mubr.bf16.gmra.mxu0 %v2841
    %v6228 = vpop.f32.mrf.mxu0
    %v6229 = vadd.f32 %v3390, %v6228
    %v6230 = vpop.f32.mrf.mxu0
    %v6231 = vpop.f32.mrf.mxu0
    %v6232 = vpop.f32.mrf.mxu0
    %6233 = vdwg.mxu0
    %6234 = vmatprep.subr.bf16.mxu0 0
    %6235 = vmatpush1.bf16.msra.mxu0 %v4973
    %6236 = vmatprep.subr.bf16.mxu0 0
    %6237 = vmatpush1.bf16.msra.mxu0 %v4966
    %6238 = vmatprep.subr.bf16.mxu0 0
    %6239 = vmatpush1.bf16.msra.mxu0 %v4959
    %6240 = vmatprep.subr.bf16.mxu0 0
    %6241 = vmatpush1.bf16.msra.mxu0 %v4952
    %6242 = vmatprep.subr.bf16.mxu0 0
    %6243 = vmatpush1.bf16.msra.mxu0 %v4945
    %6244 = vmatprep.subr.bf16.mxu0 0
    %6245 = vmatpush1.bf16.msra.mxu0 %v4938
    %6246 = vmatprep.subr.bf16.mxu0 0
    %6247 = vmatpush1.bf16.msra.mxu0 %v4931
    %6248 = vmatprep.subr.bf16.mxu0 0
    %6249 = vmatpush1.bf16.msra.mxu0 %v4924
    %6250 = vmatprep.subr.bf16.mxu0 0
    %6251 = vmatpush2.bf16.msra.mxu0 %v5029
    %6252 = vmatprep.subr.bf16.mxu0 0
    %6253 = vmatpush2.bf16.msra.mxu0 %v5022
    %6254 = vmatprep.subr.bf16.mxu0 0
    %6255 = vmatpush2.bf16.msra.mxu0 %v5015
    %6256 = vmatprep.subr.bf16.mxu0 0
    %6257 = vmatpush2.bf16.msra.mxu0 %v5008
    %6258 = vmatprep.subr.bf16.mxu0 0
    %6259 = vmatpush2.bf16.msra.mxu0 %v5001
    %6260 = vmatprep.subr.bf16.mxu0 0
    %6261 = vmatpush2.bf16.msra.mxu0 %v4994
    %6262 = vmatprep.subr.bf16.mxu0 0
    %6263 = vmatpush2.bf16.msra.mxu0 %v4987
    %6264 = vmatprep.subr.bf16.mxu0 0
    %6265 = vmatpush2.bf16.msra.mxu0 %v4980
    %6266 = vmatprep.mubr.bf16.mxu0 %v2844
    %6267 = vmatmul.mubr.bf16.gmra.mxu0 %v2843
    %v6268 = vpop.f32.mrf.mxu0
    %v6269 = vadd.f32 %v6229, %v6268
    %v6270 = vpop.f32.mrf.mxu0
    %v6271 = vpop.f32.mrf.mxu0
    %v6272 = vpop.f32.mrf.mxu0
    %6273 = vdwg.mxu0
    %6274 = vmatprep.subr.bf16.mxu0 0
    %6275 = vmatpush1.bf16.msra.mxu0 %v5085
    %6276 = vmatprep.subr.bf16.mxu0 0
    %6277 = vmatpush1.bf16.msra.mxu0 %v5078
    %6278 = vmatprep.subr.bf16.mxu0 0
    %6279 = vmatpush1.bf16.msra.mxu0 %v5071
    %6280 = vmatprep.subr.bf16.mxu0 0
    %6281 = vmatpush1.bf16.msra.mxu0 %v5064
    %6282 = vmatprep.subr.bf16.mxu0 0
    %6283 = vmatpush1.bf16.msra.mxu0 %v5057
    %6284 = vmatprep.subr.bf16.mxu0 0
    %6285 = vmatpush1.bf16.msra.mxu0 %v5050
    %6286 = vmatprep.subr.bf16.mxu0 0
    %6287 = vmatpush1.bf16.msra.mxu0 %v5043
    %6288 = vmatprep.subr.bf16.mxu0 0
    %6289 = vmatpush1.bf16.msra.mxu0 %v5036
    %6290 = vmatprep.subr.bf16.mxu0 0
    %6291 = vmatpush2.bf16.msra.mxu0 %v5141
    %6292 = vmatprep.subr.bf16.mxu0 0
    %6293 = vmatpush2.bf16.msra.mxu0 %v5134
    %6294 = vmatprep.subr.bf16.mxu0 0
    %6295 = vmatpush2.bf16.msra.mxu0 %v5127
    %6296 = vmatprep.subr.bf16.mxu0 0
    %6297 = vmatpush2.bf16.msra.mxu0 %v5120
    %6298 = vmatprep.subr.bf16.mxu0 0
    %6299 = vmatpush2.bf16.msra.mxu0 %v5113
    %6300 = vmatprep.subr.bf16.mxu0 0
    %6301 = vmatpush2.bf16.msra.mxu0 %v5106
    %6302 = vmatprep.subr.bf16.mxu0 0
    %6303 = vmatpush2.bf16.msra.mxu0 %v5099
    %6304 = vmatprep.subr.bf16.mxu0 0
    %6305 = vmatpush2.bf16.msra.mxu0 %v5092
    %6306 = vmatprep.mubr.bf16.mxu0 %v2846
    %6307 = vmatmul.mubr.bf16.gmra.mxu0 %v2845
    %v6308 = vpop.f32.mrf.mxu0
    %v6309 = vadd.f32 %v6269, %v6308
    %v6310 = vpop.f32.mrf.mxu0
    %v6311 = vpop.f32.mrf.mxu0
    %v6312 = vpop.f32.mrf.mxu0
    %6313 = vdwg.mxu0
    %6314 = vmatprep.subr.bf16.mxu0 0
    %6315 = vmatpush1.bf16.msra.mxu0 %v5197
    %6316 = vmatprep.subr.bf16.mxu0 0
    %6317 = vmatpush1.bf16.msra.mxu0 %v5190
    %6318 = vmatprep.subr.bf16.mxu0 0
    %6319 = vmatpush1.bf16.msra.mxu0 %v5183
    %6320 = vmatprep.subr.bf16.mxu0 0
    %6321 = vmatpush1.bf16.msra.mxu0 %v5176
    %6322 = vmatprep.subr.bf16.mxu0 0
    %6323 = vmatpush1.bf16.msra.mxu0 %v5169
    %6324 = vmatprep.subr.bf16.mxu0 0
    %6325 = vmatpush1.bf16.msra.mxu0 %v5162
    %6326 = vmatprep.subr.bf16.mxu0 0
    %6327 = vmatpush1.bf16.msra.mxu0 %v5155
    %6328 = vmatprep.subr.bf16.mxu0 0
    %6329 = vmatpush1.bf16.msra.mxu0 %v5148
    %6330 = vmatprep.subr.bf16.mxu0 0
    %6331 = vmatpush2.bf16.msra.mxu0 %v5253
    %6332 = vmatprep.subr.bf16.mxu0 0
    %6333 = vmatpush2.bf16.msra.mxu0 %v5246
    %6334 = vmatprep.subr.bf16.mxu0 0
    %6335 = vmatpush2.bf16.msra.mxu0 %v5239
    %6336 = vmatprep.subr.bf16.mxu0 0
    %6337 = vmatpush2.bf16.msra.mxu0 %v5232
    %6338 = vmatprep.subr.bf16.mxu0 0
    %6339 = vmatpush2.bf16.msra.mxu0 %v5225
    %6340 = vmatprep.subr.bf16.mxu0 0
    %6341 = vmatpush2.bf16.msra.mxu0 %v5218
    %6342 = vmatprep.subr.bf16.mxu0 0
    %6343 = vmatpush2.bf16.msra.mxu0 %v5211
    %6344 = vmatprep.subr.bf16.mxu0 0
    %6345 = vmatpush2.bf16.msra.mxu0 %v5204
    %6346 = vmatprep.mubr.bf16.mxu0 %v2848
    %6347 = vmatmul.mubr.bf16.gmra.mxu0 %v2847
    %v6348 = vpop.f32.mrf.mxu0
    %v6349 = vadd.f32 %v6309, %v6348
    %v6350 = vpop.f32.mrf.mxu0
    %v6351 = vpop.f32.mrf.mxu0
    %v6352 = vpop.f32.mrf.mxu0
    %6353 = vdwg.mxu0
    %v6354 = vtanh.pop %v5860
    %v6355 = vtanh.pop %v5862
    %v6356 = vtanh.pop %v6024
    %v6357 = vtanh.pop %v6026
    %v6358 = vtanh.pop %v6188
    %v6359 = vtanh.pop %v6190
    %v6360 = vtanh.pop %v6349
    %6361 = vst [vmem:[#allocation20] sm:$0xff] %v6354
    %6362 = vst [vmem:[#allocation20 + $0x8] sm:$0xff] %v6355
    %6363 = vst [vmem:[#allocation20 + $0x10] sm:$0xff] %v6356
    %6364 = vst [vmem:[#allocation20 + $0x18] sm:$0xff] %v6357
    %6365 = vst [vmem:[#allocation20 + $0x20] sm:$0xff] %v6358
    %6366 = vst [vmem:[#allocation20 + $0x28] sm:$0xff] %v6359
    %6367 = vst [vmem:[#allocation20 + $0x30] sm:$0xff] %v6360
    // Predicated region
    $region90: #{tpu_custom_call.1} parent=1 // pred_check
      _
    $region91: #{tpu_custom_call.1} parent=1 // pred_check_branch
      %6369 = sbr.rel (0) target = $region93
    $region92: #{tpu_custom_call.1} parent=1 // pred_region
      %s6371 = ssub.s32 896, 896
      %6372 = vsyncadd [#allocation4], %s6371
      %s6374 = sshll.u32 [#allocation20], 4
      %s6375 = int_to_ptr.vmem [resolvable:$true] %s6374
      %6377 = dma.vmem_to_hbm [thread:$0]  %s6375, 896, %s11, [#allocation4]
    $region93: #{tpu_custom_call.1} parent=1 // pred_fallthru
      _
    // Predicated region
    $region94: #{tpu_custom_call.1} parent=1 // pred_check
      _
    $region95: #{tpu_custom_call.1} parent=1 // pred_check_branch
      %6379 = sbr.rel (0) target = $region97
    $region96: #{tpu_custom_call.1} parent=1 // pred_region
      %6380 = dma.done [#allocation4], 896
    $region97: #{tpu_custom_call.1} parent=1 // pred_fallthru
      _
    %6381 = vsyncpa [#allocation3], 1
    %6382 = vsyncpa [#allocation6], 1
    %6383 = vsyncpa [#allocation9], 1
    %6384 = vsyncpa [#allocation12], 1
    %6385 = vsyncpa [#allocation15], 1
    %6386 = vsyncpa [#allocation18], 1
    %6387 = vsyncpa [#allocation4], 1

</llo_original>
